<compile_context>
chip_gen: v6e
topology: v6e:2x2x1
jax: 0.10.0
libtpu: 0.0.40
codegen_flags: <defaults>
</compile_context>

<pallas_src>
import jax
import jax.numpy as jnp
from jax.experimental import pallas as pl
from jax.experimental.pallas import tpu as pltpu  # noqa: F401 (kept for scale-up TODOs)

# ----------------------------- configuration -------------------------------
B, C, H, W = 2, 3, 16, 16       # input images (NCHW)
P = 4                           # patch size (ViT-B/16 -> 16; scaled down)
D = 32                          # hidden dim (ViT-B -> 768; scaled down)
NH = 4                          # attention heads
DH = D // NH                    # per-head dim
MLP = 64                        # MLP dim (ViT-B -> 3072; scaled down)
L = 2                           # encoder layers (ViT-B -> 12; scaled down)
N = (H // P) * (W // P)         # number of patches (16)
S = N + 1                       # sequence length (+ class token) = 17
S_PAD = 24                      # S padded to a multiple of 8 sublanes
BS = B * S_PAD                  # whole-batch token rows handled per call (48)
CPP = C * P * P                 # flattened patch size (48)
EPS = 1e-6                      # torchvision ViT LayerNorm eps
NEG_INF = -1e30                 # additive mask value


# ----------------------------- kernel helpers -------------------------------
def _layernorm(x, g, b):
    mu = jnp.mean(x, axis=-1, keepdims=True)
    var = jnp.mean(jnp.square(x - mu), axis=-1, keepdims=True)
    return (x - mu) * jax.lax.rsqrt(var + EPS) * g + b


def _gelu_exact(x):
    # nn.GELU() default in torchvision MLPBlock is the exact (erf) GELU.
    return 0.5 * x * (1.0 + jax.lax.erf(x * 0.7071067811865476))


# ------------------------------- fused kernel --------------------------------
def vit_kernel(patches_ref, pw_ref, base_ref, bias_ref,
               ln1g_ref, ln1b_ref, wqkv_ref, bqkv_ref, wo_ref, bo_ref,
               ln2g_ref, ln2b_ref, w1_ref, b1_ref, w2_ref, b2_ref,
               lnfg_ref, lnfb_ref, out_ref):
    # --- patch embedding for the WHOLE batch in one matmul: [BS,CPP]@[CPP,D] ---
    # base = per-token [cls+pos0 ; pos_i+conv_bias ; 0-pad rows], tiled over B.
    x = jnp.dot(patches_ref[...], pw_ref[...],
                preferred_element_type=jnp.float32) + base_ref[...]   # [BS, D] f32

    # Additive attention bias: block-diagonal over images + padded-key masking
    # (precomputed once in pack_params; hoisted read).
    bias = bias_ref[...]                                              # [1, BS, BS]

    # TODO(synk): replace static unroll with a layer grid axis / lax.fori_loop
    # over stacked weight refs when L grows past ~2 (vreg pressure / code size).
    for l in range(L):
        # ---------------- multi-head self-attention (pre-LN) ----------------
        hn = _layernorm(x, ln1g_ref[l], ln1b_ref[l]).astype(jnp.bfloat16)
        # one wide QKV matmul (96-lane output); q scale already folded into W/b
        qkv = jnp.dot(hn, wqkv_ref[l],
                      preferred_element_type=jnp.float32) + bqkv_ref[l]  # [BS, 3D]
        # head split via static lane slices -> [NH, BS, DH]
        qh = jnp.stack([qkv[:, i * DH:(i + 1) * DH]
                        for i in range(NH)], 0).astype(jnp.bfloat16)
        kh = jnp.stack([qkv[:, D + i * DH:D + (i + 1) * DH]
                        for i in range(NH)], 0).astype(jnp.bfloat16)
        vh = jnp.stack([qkv[:, 2 * D + i * DH:2 * D + (i + 1) * DH]
                        for i in range(NH)], 0).astype(jnp.bfloat16)

        s = jnp.einsum('hqe,hke->hqk', qh, kh,
                       preferred_element_type=jnp.float32) + bias        # [NH,BS,BS]
        p = jnp.exp(s - jnp.max(s, axis=-1, keepdims=True))
        p = p * pl.reciprocal(jnp.sum(p, axis=-1, keepdims=True), approx=True)

        ctx = jnp.einsum('hqk,hke->hqe', p.astype(jnp.bfloat16), vh,
                         preferred_element_type=jnp.float32)             # [NH,BS,DH]
        # merge heads on lanes and hit the un-split W_o in ONE dot
        # (folds the head-sum into the MXU contraction)
        merged = jnp.concatenate([ctx[i] for i in range(NH)], axis=-1)   # [BS, D]
        x = x + jnp.dot(merged.astype(jnp.bfloat16), wo_ref[l],
                        preferred_element_type=jnp.float32) + bo_ref[l]  # residual

        # ------------------------------ MLP ---------------------------------
        h2 = _layernorm(x, ln2g_ref[l], ln2b_ref[l]).astype(jnp.bfloat16)
        m = jnp.dot(h2, w1_ref[l], preferred_element_type=jnp.float32) + b1_ref[l]
        m = _gelu_exact(m)
        m = jnp.dot(m.astype(jnp.bfloat16), w2_ref[l],
                    preferred_element_type=jnp.float32) + b2_ref[l]
        x = x + m                                                        # residual

    # --- final encoder LayerNorm on the CLS rows only (model.heads == Identity)
    cls = jnp.concatenate([x[b * S_PAD:b * S_PAD + 1, :] for b in range(B)],
                          axis=0)                                        # [B, D]
    out_ref[...] = _layernorm(cls, lnfg_ref[...], lnfb_ref[...])


# ------------------------------ parameters -----------------------------------
def init_params(key):
    keys = jax.random.split(key, 3 + L)
    params = {
        # conv_proj as a matmul: patch flattened in (C, ph, pw) order
        "patch_w": 0.02 * jax.random.normal(keys[0], (CPP, D), jnp.float32),
        "patch_b": jnp.zeros((1, D), jnp.float32),
        "cls": 0.02 * jax.random.normal(keys[1], (1, 1, D), jnp.float32),
        "pos": 0.02 * jax.random.normal(keys[2], (1, S, D), jnp.float32),
        "ln_g": jnp.ones((1, D), jnp.float32),
        "ln_b": jnp.zeros((1, D), jnp.float32),
    }
    layers = []
    for i in range(L):
        lk = jax.random.split(keys[3 + i], 4)
        layers.append({
            "ln1_g": jnp.ones((1, D), jnp.float32),
            "ln1_b": jnp.zeros((1, D), jnp.float32),
            "w_qkv": 0.02 * jax.random.normal(lk[0], (D, 3 * D), jnp.float32),
            "b_qkv": jnp.zeros((1, 3 * D), jnp.float32),
            "w_o": 0.02 * jax.random.normal(lk[1], (D, D), jnp.float32),
            "b_o": jnp.zeros((1, D), jnp.float32),
            "ln2_g": jnp.ones((1, D), jnp.float32),
            "ln2_b": jnp.zeros((1, D), jnp.float32),
            "w1": 0.02 * jax.random.normal(lk[2], (D, MLP), jnp.float32),
            "b1": jnp.zeros((1, MLP), jnp.float32),
            "w2": 0.02 * jax.random.normal(lk[3], (MLP, D), jnp.float32),
            "b2": jnp.zeros((1, D), jnp.float32),
        })
    params["layers"] = layers
    return params


def pack_params(params):
    """One-time parameter packing (hoisted OUT of the jitted forward)."""
    def stk(name):
        return jnp.stack([lp[name] for lp in params["layers"]], axis=0)

    # fold 1/sqrt(DH) into the q-third of the in-projection (pure param math)
    scale = 1.0 / (DH ** 0.5)
    qscale = jnp.concatenate([jnp.full((D,), scale, jnp.float32),
                              jnp.ones((2 * D,), jnp.float32)])
    wqkv = stk("w_qkv") * qscale[None, None, :]           # [L, D, 3D]
    bqkv = stk("b_qkv") * qscale[None, None, :]           # [L, 1, 3D]

    # base = [cls+pos0 ; pos_i + conv_bias ; zero padding rows], tiled over B
    pos = params["pos"][0]                                 # [S, D]
    base_img = jnp.concatenate(
        [(params["cls"][0, 0] + pos[0])[None, :],
         pos[1:] + params["patch_b"],
         jnp.zeros((S_PAD - S, D), jnp.float32)], axis=0)  # [S_PAD, D]
    base = jnp.tile(base_img, (B, 1))                      # [BS, D]

    # block-diagonal (per-image) + padded-key additive attention bias
    idx = jnp.arange(BS)
    same_img = (idx[:, None] // S_PAD) == (idx[None, :] // S_PAD)
    valid_key = (idx[None, :] % S_PAD) < S
    attn_bias = jnp.where(same_img & valid_key, 0.0,
                          NEG_INF).astype(jnp.float32)[None]  # [1, BS, BS]

    return [
        params["patch_w"].astype(jnp.bfloat16),            # [CPP, D]
        base, attn_bias,
        stk("ln1_g"), stk("ln1_b"),
        wqkv.astype(jnp.bfloat16), bqkv,
        stk("w_o").astype(jnp.bfloat16), stk("b_o"),
        stk("ln2_g"), stk("ln2_b"),
        stk("w1").astype(jnp.bfloat16), stk("b1"),
        stk("w2").astype(jnp.bfloat16), stk("b2"),
        params["ln_g"], params["ln_b"],
    ]


# ------------------------------ forward --------------------------------------
@jax.jit
def feature_extractor(x, packed):
    # plain-JAX glue: patch extraction (NCHW) + CLS-slot / sublane padding
    xp = x.reshape(B, C, H // P, P, W // P, P)
    xp = xp.transpose(0, 2, 4, 1, 3, 5).reshape(B, N, CPP)
    # row 0 of each image (CLS slot) and rows S..S_PAD-1 are zero ->
    # conv-proj matmul yields 0 there; "base" supplies cls/pos/bias.
    patches = jnp.pad(xp, ((0, 0), (1, S_PAD - 1 - N), (0, 0)))
    patches = patches.reshape(BS, CPP).astype(jnp.bfloat16)

    # Single fused pallas_call, no grid: whole batch + all weights (<100 KiB)
    # are VMEM-resident; default (no BlockSpec) == full arrays in VMEM.
    return pl.pallas_call(
        vit_kernel,
        out_shape=jax.ShapeDtypeStruct((B, D), jnp.float32),
    )(patches, *packed)


# -------------------------------- main ---------------------------------------
if __name__ == "__main__":
    key = jax.random.PRNGKey(0)
    k_x, k_p = jax.random.split(key)
    x = jax.random.normal(k_x, (B, C, H, W), jnp.float32)
    params = init_params(k_p)
    packed = pack_params(params)          # one-time packing, reused every call

    feats = feature_extractor(x, packed)
    jax.block_until_ready(feats)
    assert feats.shape == (B, D) and feats.dtype == jnp.float32
    assert bool(jnp.all(jnp.isfinite(feats)))
    print("KERNEL_OK")
</pallas_src>

<mosaic_0001>
module attributes {stable_mosaic.version = 11 : i64} {
  func.func @vit_kernel(%arg0: memref<48x48xbf16, #tpu.memory_space<vmem>>, %arg1: memref<48x32xbf16, #tpu.memory_space<vmem>>, %arg2: memref<48x32xf32, #tpu.memory_space<vmem>>, %arg3: memref<1x48x48xf32, #tpu.memory_space<vmem>>, %arg4: memref<2x1x32xf32, #tpu.memory_space<vmem>>, %arg5: memref<2x1x32xf32, #tpu.memory_space<vmem>>, %arg6: memref<2x32x96xbf16, #tpu.memory_space<vmem>>, %arg7: memref<2x1x96xf32, #tpu.memory_space<vmem>>, %arg8: memref<2x32x32xbf16, #tpu.memory_space<vmem>>, %arg9: memref<2x1x32xf32, #tpu.memory_space<vmem>>, %arg10: memref<2x1x32xf32, #tpu.memory_space<vmem>>, %arg11: memref<2x1x32xf32, #tpu.memory_space<vmem>>, %arg12: memref<2x32x64xbf16, #tpu.memory_space<vmem>>, %arg13: memref<2x1x64xf32, #tpu.memory_space<vmem>>, %arg14: memref<2x64x32xbf16, #tpu.memory_space<vmem>>, %arg15: memref<2x1x32xf32, #tpu.memory_space<vmem>>, %arg16: memref<1x32xf32, #tpu.memory_space<vmem>>, %arg17: memref<1x32xf32, #tpu.memory_space<vmem>>, %arg18: memref<2x32xf32, #tpu.memory_space<vmem>>) attributes {dimension_semantics = [], scalar_prefetch = 0 : i64, scratch_operands = 0 : i64, tpu.core_type = #tpu.core_type<tc>} {
    %c0 = arith.constant 0 : index
    %c0_0 = arith.constant 0 : index
    %0 = vector.load %arg0[%c0, %c0_0] : memref<48x48xbf16, #tpu.memory_space<vmem>>, vector<48x48xbf16>
    %c0_1 = arith.constant 0 : index
    %c0_2 = arith.constant 0 : index
    %1 = vector.load %arg1[%c0_1, %c0_2] : memref<48x32xbf16, #tpu.memory_space<vmem>>, vector<48x32xbf16>
    %cst = arith.constant dense<0.000000e+00> : vector<48x32xf32>
    %2 = tpu.matmul %0, %1, %cst {dimension_numbers = #tpu.dot_dimension_numbers<[1], [0], [0], [1], [0, 0, 1, 1], [], []>} : vector<48x48xbf16>, vector<48x32xbf16>, vector<48x32xf32> -> vector<48x32xf32>
    %c0_3 = arith.constant 0 : index
    %c0_4 = arith.constant 0 : index
    %3 = vector.load %arg2[%c0_3, %c0_4] : memref<48x32xf32, #tpu.memory_space<vmem>>, vector<48x32xf32>
    %4 = arith.addf %2, %3 : vector<48x32xf32>
    %c0_5 = arith.constant 0 : index
    %c0_6 = arith.constant 0 : index
    %c0_7 = arith.constant 0 : index
    %5 = vector.load %arg3[%c0_5, %c0_6, %c0_7] : memref<1x48x48xf32, #tpu.memory_space<vmem>>, vector<1x48x48xf32>
    %c0_8 = arith.constant 0 : index
    %c0_9 = arith.constant 0 : index
    %c0_10 = arith.constant 0 : index
    %6 = vector.load %arg4[%c0_8, %c0_9, %c0_10] : memref<2x1x32xf32, #tpu.memory_space<vmem>>, vector<1x1x32xf32>
    %7 = vector.shape_cast %6 : vector<1x1x32xf32> to vector<1x32xf32>
    %c0_11 = arith.constant 0 : index
    %c0_12 = arith.constant 0 : index
    %c0_13 = arith.constant 0 : index
    %8 = vector.load %arg5[%c0_11, %c0_12, %c0_13] : memref<2x1x32xf32, #tpu.memory_space<vmem>>, vector<1x1x32xf32>
    %9 = vector.shape_cast %8 : vector<1x1x32xf32> to vector<1x32xf32>
    %cst_14 = arith.constant dense<0.000000e+00> : vector<48xf32>
    %10 = vector.multi_reduction <add>, %4, %cst_14 [1] : vector<48x32xf32> to vector<48xf32>
    %11 = vector.shape_cast %10 : vector<48xf32> to vector<48x1xf32>
    %cst_15 = arith.constant 3.200000e+01 : f32
    %12 = vector.broadcast %cst_15 : f32 to vector<48x1xf32>
    %13 = arith.divf %11, %12 : vector<48x1xf32>
    %14 = vector.broadcast %13 : vector<48x1xf32> to vector<48x32xf32>
    %15 = arith.subf %4, %14 : vector<48x32xf32>
    %16 = arith.mulf %15, %15 : vector<48x32xf32>
    %cst_16 = arith.constant dense<0.000000e+00> : vector<48xf32>
    %17 = vector.multi_reduction <add>, %16, %cst_16 [1] : vector<48x32xf32> to vector<48xf32>
    %18 = vector.shape_cast %17 : vector<48xf32> to vector<48x1xf32>
    %cst_17 = arith.constant 3.200000e+01 : f32
    %19 = vector.broadcast %cst_17 : f32 to vector<48x1xf32>
    %20 = arith.divf %18, %19 : vector<48x1xf32>
    %21 = vector.broadcast %13 : vector<48x1xf32> to vector<48x32xf32>
    %22 = arith.subf %4, %21 : vector<48x32xf32>
    %cst_18 = arith.constant 9.99999997E-7 : f32
    %23 = vector.broadcast %cst_18 : f32 to vector<48x1xf32>
    %24 = arith.addf %20, %23 : vector<48x1xf32>
    %25 = math.rsqrt %24 : vector<48x1xf32>
    %26 = vector.broadcast %25 : vector<48x1xf32> to vector<48x32xf32>
    %27 = arith.mulf %22, %26 : vector<48x32xf32>
    %28 = vector.broadcast %7 : vector<1x32xf32> to vector<48x32xf32>
    %29 = arith.mulf %27, %28 : vector<48x32xf32>
    %30 = vector.broadcast %9 : vector<1x32xf32> to vector<48x32xf32>
    %31 = arith.addf %29, %30 : vector<48x32xf32>
    %32 = arith.truncf %31 : vector<48x32xf32> to vector<48x32xbf16>
    %c0_19 = arith.constant 0 : index
    %c0_20 = arith.constant 0 : index
    %c0_21 = arith.constant 0 : index
    %33 = vector.load %arg6[%c0_19, %c0_20, %c0_21] : memref<2x32x96xbf16, #tpu.memory_space<vmem>>, vector<1x32x96xbf16>
    %34 = vector.shape_cast %33 : vector<1x32x96xbf16> to vector<32x96xbf16>
    %cst_22 = arith.constant dense<0.000000e+00> : vector<48x96xf32>
    %35 = tpu.matmul %32, %34, %cst_22 {dimension_numbers = #tpu.dot_dimension_numbers<[1], [0], [0], [1], [0, 0, 1, 1], [], []>} : vector<48x32xbf16>, vector<32x96xbf16>, vector<48x96xf32> -> vector<48x96xf32>
    %c0_23 = arith.constant 0 : index
    %c0_24 = arith.constant 0 : index
    %c0_25 = arith.constant 0 : index
    %36 = vector.load %arg7[%c0_23, %c0_24, %c0_25] : memref<2x1x96xf32, #tpu.memory_space<vmem>>, vector<1x1x96xf32>
    %37 = vector.shape_cast %36 : vector<1x1x96xf32> to vector<1x96xf32>
    %38 = vector.broadcast %37 : vector<1x96xf32> to vector<48x96xf32>
    %39 = arith.addf %35, %38 : vector<48x96xf32>
    %40 = vector.extract_strided_slice %39 {offsets = [0, 0], sizes = [48, 8], strides = [1, 1]} : vector<48x96xf32> to vector<48x8xf32>
    %41 = vector.extract_strided_slice %39 {offsets = [0, 8], sizes = [48, 8], strides = [1, 1]} : vector<48x96xf32> to vector<48x8xf32>
    %42 = vector.extract_strided_slice %39 {offsets = [0, 16], sizes = [48, 8], strides = [1, 1]} : vector<48x96xf32> to vector<48x8xf32>
    %43 = vector.extract_strided_slice %39 {offsets = [0, 24], sizes = [48, 8], strides = [1, 1]} : vector<48x96xf32> to vector<48x8xf32>
    %44 = vector.shape_cast %40 : vector<48x8xf32> to vector<1x48x8xf32>
    %45 = vector.shape_cast %41 : vector<48x8xf32> to vector<1x48x8xf32>
    %46 = vector.shape_cast %42 : vector<48x8xf32> to vector<1x48x8xf32>
    %47 = vector.shape_cast %43 : vector<48x8xf32> to vector<1x48x8xf32>
    %48 = tpu.concatenate %44, %45, %46, %47 in 0 : vector<1x48x8xf32>, vector<1x48x8xf32>, vector<1x48x8xf32>, vector<1x48x8xf32> -> vector<4x48x8xf32>
    %49 = arith.truncf %48 : vector<4x48x8xf32> to vector<4x48x8xbf16>
    %50 = vector.extract_strided_slice %39 {offsets = [0, 32], sizes = [48, 8], strides = [1, 1]} : vector<48x96xf32> to vector<48x8xf32>
    %51 = vector.extract_strided_slice %39 {offsets = [0, 40], sizes = [48, 8], strides = [1, 1]} : vector<48x96xf32> to vector<48x8xf32>
    %52 = vector.extract_strided_slice %39 {offsets = [0, 48], sizes = [48, 8], strides = [1, 1]} : vector<48x96xf32> to vector<48x8xf32>
    %53 = vector.extract_strided_slice %39 {offsets = [0, 56], sizes = [48, 8], strides = [1, 1]} : vector<48x96xf32> to vector<48x8xf32>
    %54 = vector.shape_cast %50 : vector<48x8xf32> to vector<1x48x8xf32>
    %55 = vector.shape_cast %51 : vector<48x8xf32> to vector<1x48x8xf32>
    %56 = vector.shape_cast %52 : vector<48x8xf32> to vector<1x48x8xf32>
    %57 = vector.shape_cast %53 : vector<48x8xf32> to vector<1x48x8xf32>
    %58 = tpu.concatenate %54, %55, %56, %57 in 0 : vector<1x48x8xf32>, vector<1x48x8xf32>, vector<1x48x8xf32>, vector<1x48x8xf32> -> vector<4x48x8xf32>
    %59 = arith.truncf %58 : vector<4x48x8xf32> to vector<4x48x8xbf16>
    %60 = vector.extract_strided_slice %39 {offsets = [0, 64], sizes = [48, 8], strides = [1, 1]} : vector<48x96xf32> to vector<48x8xf32>
    %61 = vector.extract_strided_slice %39 {offsets = [0, 72], sizes = [48, 8], strides = [1, 1]} : vector<48x96xf32> to vector<48x8xf32>
    %62 = vector.extract_strided_slice %39 {offsets = [0, 80], sizes = [48, 8], strides = [1, 1]} : vector<48x96xf32> to vector<48x8xf32>
    %63 = vector.extract_strided_slice %39 {offsets = [0, 88], sizes = [48, 8], strides = [1, 1]} : vector<48x96xf32> to vector<48x8xf32>
    %64 = vector.shape_cast %60 : vector<48x8xf32> to vector<1x48x8xf32>
    %65 = vector.shape_cast %61 : vector<48x8xf32> to vector<1x48x8xf32>
    %66 = vector.shape_cast %62 : vector<48x8xf32> to vector<1x48x8xf32>
    %67 = vector.shape_cast %63 : vector<48x8xf32> to vector<1x48x8xf32>
    %68 = tpu.concatenate %64, %65, %66, %67 in 0 : vector<1x48x8xf32>, vector<1x48x8xf32>, vector<1x48x8xf32>, vector<1x48x8xf32> -> vector<4x48x8xf32>
    %69 = arith.truncf %68 : vector<4x48x8xf32> to vector<4x48x8xbf16>
    "tpu.trace_start"() <{level = 10 : i32, message = "hqe,hke->hqk"}> : () -> ()
    %cst_26 = arith.constant dense<0.000000e+00> : vector<4x48x48xf32>
    %70 = tpu.matmul %49, %59, %cst_26 {dimension_numbers = #tpu.dot_dimension_numbers<[2], [2], [1], [1], [0, 0, 0, 1, 1, 1], [0], [0]>} : vector<4x48x8xbf16>, vector<4x48x8xbf16>, vector<4x48x48xf32> -> vector<4x48x48xf32>
    "tpu.trace_stop"() : () -> ()
    %71 = vector.broadcast %5 : vector<1x48x48xf32> to vector<4x48x48xf32>
    %72 = arith.addf %70, %71 : vector<4x48x48xf32>
    %cst_27 = arith.constant dense<0xFF800000> : vector<4x48xf32>
    %73 = vector.multi_reduction <maximumf>, %72, %cst_27 [2] : vector<4x48x48xf32> to vector<4x48xf32>
    %74 = vector.shape_cast %73 : vector<4x48xf32> to vector<4x48x1xf32>
    %75 = vector.broadcast %74 : vector<4x48x1xf32> to vector<4x48x48xf32>
    %76 = arith.subf %72, %75 : vector<4x48x48xf32>
    %77 = math.exp %76 : vector<4x48x48xf32>
    %cst_28 = arith.constant dense<0.000000e+00> : vector<4x48xf32>
    %78 = vector.multi_reduction <add>, %77, %cst_28 [2] : vector<4x48x48xf32> to vector<4x48xf32>
    %79 = vector.shape_cast %78 : vector<4x48xf32> to vector<4x48x1xf32>
    %80 = tpu.reciprocal %79 {approx = true} : vector<4x48x1xf32> -> vector<4x48x1xf32>
    %81 = vector.broadcast %80 : vector<4x48x1xf32> to vector<4x48x48xf32>
    %82 = arith.mulf %77, %81 : vector<4x48x48xf32>
    %83 = arith.truncf %82 : vector<4x48x48xf32> to vector<4x48x48xbf16>
    "tpu.trace_start"() <{level = 10 : i32, message = "hqk,hke->hqe"}> : () -> ()
    %cst_29 = arith.constant dense<0.000000e+00> : vector<4x48x8xf32>
    %84 = tpu.matmul %83, %69, %cst_29 {dimension_numbers = #tpu.dot_dimension_numbers<[2], [1], [1], [2], [0, 0, 0, 1, 1, 2], [0], [0]>} : vector<4x48x48xbf16>, vector<4x48x8xbf16>, vector<4x48x8xf32> -> vector<4x48x8xf32>
    "tpu.trace_stop"() : () -> ()
    %85 = vector.extract_strided_slice %84 {offsets = [0, 0, 0], sizes = [1, 48, 8], strides = [1, 1, 1]} : vector<4x48x8xf32> to vector<1x48x8xf32>
    %86 = vector.shape_cast %85 : vector<1x48x8xf32> to vector<48x8xf32>
    %87 = vector.extract_strided_slice %84 {offsets = [1, 0, 0], sizes = [1, 48, 8], strides = [1, 1, 1]} : vector<4x48x8xf32> to vector<1x48x8xf32>
    %88 = vector.shape_cast %87 : vector<1x48x8xf32> to vector<48x8xf32>
    %89 = vector.extract_strided_slice %84 {offsets = [2, 0, 0], sizes = [1, 48, 8], strides = [1, 1, 1]} : vector<4x48x8xf32> to vector<1x48x8xf32>
    %90 = vector.shape_cast %89 : vector<1x48x8xf32> to vector<48x8xf32>
    %91 = vector.extract_strided_slice %84 {offsets = [3, 0, 0], sizes = [1, 48, 8], strides = [1, 1, 1]} : vector<4x48x8xf32> to vector<1x48x8xf32>
    %92 = vector.shape_cast %91 : vector<1x48x8xf32> to vector<48x8xf32>
    %93 = tpu.concatenate %86, %88, %90, %92 in 1 : vector<48x8xf32>, vector<48x8xf32>, vector<48x8xf32>, vector<48x8xf32> -> vector<48x32xf32>
    %94 = arith.truncf %93 : vector<48x32xf32> to vector<48x32xbf16>
    %c0_30 = arith.constant 0 : index
    %c0_31 = arith.constant 0 : index
    %c0_32 = arith.constant 0 : index
    %95 = vector.load %arg8[%c0_30, %c0_31, %c0_32] : memref<2x32x32xbf16, #tpu.memory_space<vmem>>, vector<1x32x32xbf16>
    %96 = vector.shape_cast %95 : vector<1x32x32xbf16> to vector<32x32xbf16>
    %cst_33 = arith.constant dense<0.000000e+00> : vector<48x32xf32>
    %97 = tpu.matmul %94, %96, %cst_33 {dimension_numbers = #tpu.dot_dimension_numbers<[1], [0], [0], [1], [0, 0, 1, 1], [], []>} : vector<48x32xbf16>, vector<32x32xbf16>, vector<48x32xf32> -> vector<48x32xf32>
    %98 = arith.addf %4, %97 : vector<48x32xf32>
    %c0_34 = arith.constant 0 : index
    %c0_35 = arith.constant 0 : index
    %c0_36 = arith.constant 0 : index
    %99 = vector.load %arg9[%c0_34, %c0_35, %c0_36] : memref<2x1x32xf32, #tpu.memory_space<vmem>>, vector<1x1x32xf32>
    %100 = vector.shape_cast %99 : vector<1x1x32xf32> to vector<1x32xf32>
    %101 = vector.broadcast %100 : vector<1x32xf32> to vector<48x32xf32>
    %102 = arith.addf %98, %101 : vector<48x32xf32>
    %c0_37 = arith.constant 0 : index
    %c0_38 = arith.constant 0 : index
    %c0_39 = arith.constant 0 : index
    %103 = vector.load %arg10[%c0_37, %c0_38, %c0_39] : memref<2x1x32xf32, #tpu.memory_space<vmem>>, vector<1x1x32xf32>
    %104 = vector.shape_cast %103 : vector<1x1x32xf32> to vector<1x32xf32>
    %c0_40 = arith.constant 0 : index
    %c0_41 = arith.constant 0 : index
    %c0_42 = arith.constant 0 : index
    %105 = vector.load %arg11[%c0_40, %c0_41, %c0_42] : memref<2x1x32xf32, #tpu.memory_space<vmem>>, vector<1x1x32xf32>
    %106 = vector.shape_cast %105 : vector<1x1x32xf32> to vector<1x32xf32>
    %cst_43 = arith.constant dense<0.000000e+00> : vector<48xf32>
    %107 = vector.multi_reduction <add>, %102, %cst_43 [1] : vector<48x32xf32> to vector<48xf32>
    %108 = vector.shape_cast %107 : vector<48xf32> to vector<48x1xf32>
    %cst_44 = arith.constant 3.200000e+01 : f32
    %109 = vector.broadcast %cst_44 : f32 to vector<48x1xf32>
    %110 = arith.divf %108, %109 : vector<48x1xf32>
    %111 = vector.broadcast %110 : vector<48x1xf32> to vector<48x32xf32>
    %112 = arith.subf %102, %111 : vector<48x32xf32>
    %113 = arith.mulf %112, %112 : vector<48x32xf32>
    %cst_45 = arith.constant dense<0.000000e+00> : vector<48xf32>
    %114 = vector.multi_reduction <add>, %113, %cst_45 [1] : vector<48x32xf32> to vector<48xf32>
    %115 = vector.shape_cast %114 : vector<48xf32> to vector<48x1xf32>
    %cst_46 = arith.constant 3.200000e+01 : f32
    %116 = vector.broadcast %cst_46 : f32 to vector<48x1xf32>
    %117 = arith.divf %115, %116 : vector<48x1xf32>
    %118 = vector.broadcast %110 : vector<48x1xf32> to vector<48x32xf32>
    %119 = arith.subf %102, %118 : vector<48x32xf32>
    %cst_47 = arith.constant 9.99999997E-7 : f32
    %120 = vector.broadcast %cst_47 : f32 to vector<48x1xf32>
    %121 = arith.addf %117, %120 : vector<48x1xf32>
    %122 = math.rsqrt %121 : vector<48x1xf32>
    %123 = vector.broadcast %122 : vector<48x1xf32> to vector<48x32xf32>
    %124 = arith.mulf %119, %123 : vector<48x32xf32>
    %125 = vector.broadcast %104 : vector<1x32xf32> to vector<48x32xf32>
    %126 = arith.mulf %124, %125 : vector<48x32xf32>
    %127 = vector.broadcast %106 : vector<1x32xf32> to vector<48x32xf32>
    %128 = arith.addf %126, %127 : vector<48x32xf32>
    %129 = arith.truncf %128 : vector<48x32xf32> to vector<48x32xbf16>
    %c0_48 = arith.constant 0 : index
    %c0_49 = arith.constant 0 : index
    %c0_50 = arith.constant 0 : index
    %130 = vector.load %arg12[%c0_48, %c0_49, %c0_50] : memref<2x32x64xbf16, #tpu.memory_space<vmem>>, vector<1x32x64xbf16>
    %131 = vector.shape_cast %130 : vector<1x32x64xbf16> to vector<32x64xbf16>
    %cst_51 = arith.constant dense<0.000000e+00> : vector<48x64xf32>
    %132 = tpu.matmul %129, %131, %cst_51 {dimension_numbers = #tpu.dot_dimension_numbers<[1], [0], [0], [1], [0, 0, 1, 1], [], []>} : vector<48x32xbf16>, vector<32x64xbf16>, vector<48x64xf32> -> vector<48x64xf32>
    %c0_52 = arith.constant 0 : index
    %c0_53 = arith.constant 0 : index
    %c0_54 = arith.constant 0 : index
    %133 = vector.load %arg13[%c0_52, %c0_53, %c0_54] : memref<2x1x64xf32, #tpu.memory_space<vmem>>, vector<1x1x64xf32>
    %134 = vector.shape_cast %133 : vector<1x1x64xf32> to vector<1x64xf32>
    %135 = vector.broadcast %134 : vector<1x64xf32> to vector<48x64xf32>
    %136 = arith.addf %132, %135 : vector<48x64xf32>
    %cst_55 = arith.constant 5.000000e-01 : f32
    %137 = vector.broadcast %cst_55 : f32 to vector<48x64xf32>
    %138 = arith.mulf %137, %136 : vector<48x64xf32>
    %cst_56 = arith.constant 0.707106769 : f32
    %139 = vector.broadcast %cst_56 : f32 to vector<48x64xf32>
    %140 = arith.mulf %136, %139 : vector<48x64xf32>
    %141 = math.erf %140 : vector<48x64xf32>
    %cst_57 = arith.constant 1.000000e+00 : f32
    %142 = vector.broadcast %cst_57 : f32 to vector<48x64xf32>
    %143 = arith.addf %142, %141 : vector<48x64xf32>
    %144 = arith.mulf %138, %143 : vector<48x64xf32>
    %145 = arith.truncf %144 : vector<48x64xf32> to vector<48x64xbf16>
    %c0_58 = arith.constant 0 : index
    %c0_59 = arith.constant 0 : index
    %c0_60 = arith.constant 0 : index
    %146 = vector.load %arg14[%c0_58, %c0_59, %c0_60] : memref<2x64x32xbf16, #tpu.memory_space<vmem>>, vector<1x64x32xbf16>
    %147 = vector.shape_cast %146 : vector<1x64x32xbf16> to vector<64x32xbf16>
    %cst_61 = arith.constant dense<0.000000e+00> : vector<48x32xf32>
    %148 = tpu.matmul %145, %147, %cst_61 {dimension_numbers = #tpu.dot_dimension_numbers<[1], [0], [0], [1], [0, 0, 1, 1], [], []>} : vector<48x64xbf16>, vector<64x32xbf16>, vector<48x32xf32> -> vector<48x32xf32>
    %c0_62 = arith.constant 0 : index
    %c0_63 = arith.constant 0 : index
    %c0_64 = arith.constant 0 : index
    %149 = vector.load %arg15[%c0_62, %c0_63, %c0_64] : memref<2x1x32xf32, #tpu.memory_space<vmem>>, vector<1x1x32xf32>
    %150 = vector.shape_cast %149 : vector<1x1x32xf32> to vector<1x32xf32>
    %151 = vector.broadcast %150 : vector<1x32xf32> to vector<48x32xf32>
    %152 = arith.addf %148, %151 : vector<48x32xf32>
    %153 = arith.addf %102, %152 : vector<48x32xf32>
    %c1 = arith.constant 1 : index
    %c0_65 = arith.constant 0 : index
    %c0_66 = arith.constant 0 : index
    %154 = vector.load %arg4[%c1, %c0_65, %c0_66] : memref<2x1x32xf32, #tpu.memory_space<vmem>>, vector<1x1x32xf32>
    %155 = vector.shape_cast %154 : vector<1x1x32xf32> to vector<1x32xf32>
    %c1_67 = arith.constant 1 : index
    %c0_68 = arith.constant 0 : index
    %c0_69 = arith.constant 0 : index
    %156 = vector.load %arg5[%c1_67, %c0_68, %c0_69] : memref<2x1x32xf32, #tpu.memory_space<vmem>>, vector<1x1x32xf32>
    %157 = vector.shape_cast %156 : vector<1x1x32xf32> to vector<1x32xf32>
    %cst_70 = arith.constant dense<0.000000e+00> : vector<48xf32>
    %158 = vector.multi_reduction <add>, %153, %cst_70 [1] : vector<48x32xf32> to vector<48xf32>
    %159 = vector.shape_cast %158 : vector<48xf32> to vector<48x1xf32>
    %cst_71 = arith.constant 3.200000e+01 : f32
    %160 = vector.broadcast %cst_71 : f32 to vector<48x1xf32>
    %161 = arith.divf %159, %160 : vector<48x1xf32>
    %162 = vector.broadcast %161 : vector<48x1xf32> to vector<48x32xf32>
    %163 = arith.subf %153, %162 : vector<48x32xf32>
    %164 = arith.mulf %163, %163 : vector<48x32xf32>
    %cst_72 = arith.constant dense<0.000000e+00> : vector<48xf32>
    %165 = vector.multi_reduction <add>, %164, %cst_72 [1] : vector<48x32xf32> to vector<48xf32>
    %166 = vector.shape_cast %165 : vector<48xf32> to vector<48x1xf32>
    %cst_73 = arith.constant 3.200000e+01 : f32
    %167 = vector.broadcast %cst_73 : f32 to vector<48x1xf32>
    %168 = arith.divf %166, %167 : vector<48x1xf32>
    %169 = vector.broadcast %161 : vector<48x1xf32> to vector<48x32xf32>
    %170 = arith.subf %153, %169 : vector<48x32xf32>
    %cst_74 = arith.constant 9.99999997E-7 : f32
    %171 = vector.broadcast %cst_74 : f32 to vector<48x1xf32>
    %172 = arith.addf %168, %171 : vector<48x1xf32>
    %173 = math.rsqrt %172 : vector<48x1xf32>
    %174 = vector.broadcast %173 : vector<48x1xf32> to vector<48x32xf32>
    %175 = arith.mulf %170, %174 : vector<48x32xf32>
    %176 = vector.broadcast %155 : vector<1x32xf32> to vector<48x32xf32>
    %177 = arith.mulf %175, %176 : vector<48x32xf32>
    %178 = vector.broadcast %157 : vector<1x32xf32> to vector<48x32xf32>
    %179 = arith.addf %177, %178 : vector<48x32xf32>
    %180 = arith.truncf %179 : vector<48x32xf32> to vector<48x32xbf16>
    %c1_75 = arith.constant 1 : index
    %c0_76 = arith.constant 0 : index
    %c0_77 = arith.constant 0 : index
    %181 = vector.load %arg6[%c1_75, %c0_76, %c0_77] : memref<2x32x96xbf16, #tpu.memory_space<vmem>>, vector<1x32x96xbf16>
    %182 = vector.shape_cast %181 : vector<1x32x96xbf16> to vector<32x96xbf16>
    %cst_78 = arith.constant dense<0.000000e+00> : vector<48x96xf32>
    %183 = tpu.matmul %180, %182, %cst_78 {dimension_numbers = #tpu.dot_dimension_numbers<[1], [0], [0], [1], [0, 0, 1, 1], [], []>} : vector<48x32xbf16>, vector<32x96xbf16>, vector<48x96xf32> -> vector<48x96xf32>
    %c1_79 = arith.constant 1 : index
    %c0_80 = arith.constant 0 : index
    %c0_81 = arith.constant 0 : index
    %184 = vector.load %arg7[%c1_79, %c0_80, %c0_81] : memref<2x1x96xf32, #tpu.memory_space<vmem>>, vector<1x1x96xf32>
    %185 = vector.shape_cast %184 : vector<1x1x96xf32> to vector<1x96xf32>
    %186 = vector.broadcast %185 : vector<1x96xf32> to vector<48x96xf32>
    %187 = arith.addf %183, %186 : vector<48x96xf32>
    %188 = vector.extract_strided_slice %187 {offsets = [0, 0], sizes = [48, 8], strides = [1, 1]} : vector<48x96xf32> to vector<48x8xf32>
    %189 = vector.extract_strided_slice %187 {offsets = [0, 8], sizes = [48, 8], strides = [1, 1]} : vector<48x96xf32> to vector<48x8xf32>
    %190 = vector.extract_strided_slice %187 {offsets = [0, 16], sizes = [48, 8], strides = [1, 1]} : vector<48x96xf32> to vector<48x8xf32>
    %191 = vector.extract_strided_slice %187 {offsets = [0, 24], sizes = [48, 8], strides = [1, 1]} : vector<48x96xf32> to vector<48x8xf32>
    %192 = vector.shape_cast %188 : vector<48x8xf32> to vector<1x48x8xf32>
    %193 = vector.shape_cast %189 : vector<48x8xf32> to vector<1x48x8xf32>
    %194 = vector.shape_cast %190 : vector<48x8xf32> to vector<1x48x8xf32>
    %195 = vector.shape_cast %191 : vector<48x8xf32> to vector<1x48x8xf32>
    %196 = tpu.concatenate %192, %193, %194, %195 in 0 : vector<1x48x8xf32>, vector<1x48x8xf32>, vector<1x48x8xf32>, vector<1x48x8xf32> -> vector<4x48x8xf32>
    %197 = arith.truncf %196 : vector<4x48x8xf32> to vector<4x48x8xbf16>
    %198 = vector.extract_strided_slice %187 {offsets = [0, 32], sizes = [48, 8], strides = [1, 1]} : vector<48x96xf32> to vector<48x8xf32>
    %199 = vector.extract_strided_slice %187 {offsets = [0, 40], sizes = [48, 8], strides = [1, 1]} : vector<48x96xf32> to vector<48x8xf32>
    %200 = vector.extract_strided_slice %187 {offsets = [0, 48], sizes = [48, 8], strides = [1, 1]} : vector<48x96xf32> to vector<48x8xf32>
    %201 = vector.extract_strided_slice %187 {offsets = [0, 56], sizes = [48, 8], strides = [1, 1]} : vector<48x96xf32> to vector<48x8xf32>
    %202 = vector.shape_cast %198 : vector<48x8xf32> to vector<1x48x8xf32>
    %203 = vector.shape_cast %199 : vector<48x8xf32> to vector<1x48x8xf32>
    %204 = vector.shape_cast %200 : vector<48x8xf32> to vector<1x48x8xf32>
    %205 = vector.shape_cast %201 : vector<48x8xf32> to vector<1x48x8xf32>
    %206 = tpu.concatenate %202, %203, %204, %205 in 0 : vector<1x48x8xf32>, vector<1x48x8xf32>, vector<1x48x8xf32>, vector<1x48x8xf32> -> vector<4x48x8xf32>
    %207 = arith.truncf %206 : vector<4x48x8xf32> to vector<4x48x8xbf16>
    %208 = vector.extract_strided_slice %187 {offsets = [0, 64], sizes = [48, 8], strides = [1, 1]} : vector<48x96xf32> to vector<48x8xf32>
    %209 = vector.extract_strided_slice %187 {offsets = [0, 72], sizes = [48, 8], strides = [1, 1]} : vector<48x96xf32> to vector<48x8xf32>
    %210 = vector.extract_strided_slice %187 {offsets = [0, 80], sizes = [48, 8], strides = [1, 1]} : vector<48x96xf32> to vector<48x8xf32>
    %211 = vector.extract_strided_slice %187 {offsets = [0, 88], sizes = [48, 8], strides = [1, 1]} : vector<48x96xf32> to vector<48x8xf32>
    %212 = vector.shape_cast %208 : vector<48x8xf32> to vector<1x48x8xf32>
    %213 = vector.shape_cast %209 : vector<48x8xf32> to vector<1x48x8xf32>
    %214 = vector.shape_cast %210 : vector<48x8xf32> to vector<1x48x8xf32>
    %215 = vector.shape_cast %211 : vector<48x8xf32> to vector<1x48x8xf32>
    %216 = tpu.concatenate %212, %213, %214, %215 in 0 : vector<1x48x8xf32>, vector<1x48x8xf32>, vector<1x48x8xf32>, vector<1x48x8xf32> -> vector<4x48x8xf32>
    %217 = arith.truncf %216 : vector<4x48x8xf32> to vector<4x48x8xbf16>
    "tpu.trace_start"() <{level = 10 : i32, message = "hqe,hke->hqk"}> : () -> ()
    %cst_82 = arith.constant dense<0.000000e+00> : vector<4x48x48xf32>
    %218 = tpu.matmul %197, %207, %cst_82 {dimension_numbers = #tpu.dot_dimension_numbers<[2], [2], [1], [1], [0, 0, 0, 1, 1, 1], [0], [0]>} : vector<4x48x8xbf16>, vector<4x48x8xbf16>, vector<4x48x48xf32> -> vector<4x48x48xf32>
    "tpu.trace_stop"() : () -> ()
    %219 = vector.broadcast %5 : vector<1x48x48xf32> to vector<4x48x48xf32>
    %220 = arith.addf %218, %219 : vector<4x48x48xf32>
    %cst_83 = arith.constant dense<0xFF800000> : vector<4x48xf32>
    %221 = vector.multi_reduction <maximumf>, %220, %cst_83 [2] : vector<4x48x48xf32> to vector<4x48xf32>
    %222 = vector.shape_cast %221 : vector<4x48xf32> to vector<4x48x1xf32>
    %223 = vector.broadcast %222 : vector<4x48x1xf32> to vector<4x48x48xf32>
    %224 = arith.subf %220, %223 : vector<4x48x48xf32>
    %225 = math.exp %224 : vector<4x48x48xf32>
    %cst_84 = arith.constant dense<0.000000e+00> : vector<4x48xf32>
    %226 = vector.multi_reduction <add>, %225, %cst_84 [2] : vector<4x48x48xf32> to vector<4x48xf32>
    %227 = vector.shape_cast %226 : vector<4x48xf32> to vector<4x48x1xf32>
    %228 = tpu.reciprocal %227 {approx = true} : vector<4x48x1xf32> -> vector<4x48x1xf32>
    %229 = vector.broadcast %228 : vector<4x48x1xf32> to vector<4x48x48xf32>
    %230 = arith.mulf %225, %229 : vector<4x48x48xf32>
    %231 = arith.truncf %230 : vector<4x48x48xf32> to vector<4x48x48xbf16>
    "tpu.trace_start"() <{level = 10 : i32, message = "hqk,hke->hqe"}> : () -> ()
    %cst_85 = arith.constant dense<0.000000e+00> : vector<4x48x8xf32>
    %232 = tpu.matmul %231, %217, %cst_85 {dimension_numbers = #tpu.dot_dimension_numbers<[2], [1], [1], [2], [0, 0, 0, 1, 1, 2], [0], [0]>} : vector<4x48x48xbf16>, vector<4x48x8xbf16>, vector<4x48x8xf32> -> vector<4x48x8xf32>
    "tpu.trace_stop"() : () -> ()
    %233 = vector.extract_strided_slice %232 {offsets = [0, 0, 0], sizes = [1, 48, 8], strides = [1, 1, 1]} : vector<4x48x8xf32> to vector<1x48x8xf32>
    %234 = vector.shape_cast %233 : vector<1x48x8xf32> to vector<48x8xf32>
    %235 = vector.extract_strided_slice %232 {offsets = [1, 0, 0], sizes = [1, 48, 8], strides = [1, 1, 1]} : vector<4x48x8xf32> to vector<1x48x8xf32>
    %236 = vector.shape_cast %235 : vector<1x48x8xf32> to vector<48x8xf32>
    %237 = vector.extract_strided_slice %232 {offsets = [2, 0, 0], sizes = [1, 48, 8], strides = [1, 1, 1]} : vector<4x48x8xf32> to vector<1x48x8xf32>
    %238 = vector.shape_cast %237 : vector<1x48x8xf32> to vector<48x8xf32>
    %239 = vector.extract_strided_slice %232 {offsets = [3, 0, 0], sizes = [1, 48, 8], strides = [1, 1, 1]} : vector<4x48x8xf32> to vector<1x48x8xf32>
    %240 = vector.shape_cast %239 : vector<1x48x8xf32> to vector<48x8xf32>
    %241 = tpu.concatenate %234, %236, %238, %240 in 1 : vector<48x8xf32>, vector<48x8xf32>, vector<48x8xf32>, vector<48x8xf32> -> vector<48x32xf32>
    %242 = arith.truncf %241 : vector<48x32xf32> to vector<48x32xbf16>
    %c1_86 = arith.constant 1 : index
    %c0_87 = arith.constant 0 : index
    %c0_88 = arith.constant 0 : index
    %243 = vector.load %arg8[%c1_86, %c0_87, %c0_88] : memref<2x32x32xbf16, #tpu.memory_space<vmem>>, vector<1x32x32xbf16>
    %244 = vector.shape_cast %243 : vector<1x32x32xbf16> to vector<32x32xbf16>
    %cst_89 = arith.constant dense<0.000000e+00> : vector<48x32xf32>
    %245 = tpu.matmul %242, %244, %cst_89 {dimension_numbers = #tpu.dot_dimension_numbers<[1], [0], [0], [1], [0, 0, 1, 1], [], []>} : vector<48x32xbf16>, vector<32x32xbf16>, vector<48x32xf32> -> vector<48x32xf32>
    %246 = arith.addf %153, %245 : vector<48x32xf32>
    %c1_90 = arith.constant 1 : index
    %c0_91 = arith.constant 0 : index
    %c0_92 = arith.constant 0 : index
    %247 = vector.load %arg9[%c1_90, %c0_91, %c0_92] : memref<2x1x32xf32, #tpu.memory_space<vmem>>, vector<1x1x32xf32>
    %248 = vector.shape_cast %247 : vector<1x1x32xf32> to vector<1x32xf32>
    %249 = vector.broadcast %248 : vector<1x32xf32> to vector<48x32xf32>
    %250 = arith.addf %246, %249 : vector<48x32xf32>
    %c1_93 = arith.constant 1 : index
    %c0_94 = arith.constant 0 : index
    %c0_95 = arith.constant 0 : index
    %251 = vector.load %arg10[%c1_93, %c0_94, %c0_95] : memref<2x1x32xf32, #tpu.memory_space<vmem>>, vector<1x1x32xf32>
    %252 = vector.shape_cast %251 : vector<1x1x32xf32> to vector<1x32xf32>
    %c1_96 = arith.constant 1 : index
    %c0_97 = arith.constant 0 : index
    %c0_98 = arith.constant 0 : index
    %253 = vector.load %arg11[%c1_96, %c0_97, %c0_98] : memref<2x1x32xf32, #tpu.memory_space<vmem>>, vector<1x1x32xf32>
    %254 = vector.shape_cast %253 : vector<1x1x32xf32> to vector<1x32xf32>
    %cst_99 = arith.constant dense<0.000000e+00> : vector<48xf32>
    %255 = vector.multi_reduction <add>, %250, %cst_99 [1] : vector<48x32xf32> to vector<48xf32>
    %256 = vector.shape_cast %255 : vector<48xf32> to vector<48x1xf32>
    %cst_100 = arith.constant 3.200000e+01 : f32
    %257 = vector.broadcast %cst_100 : f32 to vector<48x1xf32>
    %258 = arith.divf %256, %257 : vector<48x1xf32>
    %259 = vector.broadcast %258 : vector<48x1xf32> to vector<48x32xf32>
    %260 = arith.subf %250, %259 : vector<48x32xf32>
    %261 = arith.mulf %260, %260 : vector<48x32xf32>
    %cst_101 = arith.constant dense<0.000000e+00> : vector<48xf32>
    %262 = vector.multi_reduction <add>, %261, %cst_101 [1] : vector<48x32xf32> to vector<48xf32>
    %263 = vector.shape_cast %262 : vector<48xf32> to vector<48x1xf32>
    %cst_102 = arith.constant 3.200000e+01 : f32
    %264 = vector.broadcast %cst_102 : f32 to vector<48x1xf32>
    %265 = arith.divf %263, %264 : vector<48x1xf32>
    %266 = vector.broadcast %258 : vector<48x1xf32> to vector<48x32xf32>
    %267 = arith.subf %250, %266 : vector<48x32xf32>
    %cst_103 = arith.constant 9.99999997E-7 : f32
    %268 = vector.broadcast %cst_103 : f32 to vector<48x1xf32>
    %269 = arith.addf %265, %268 : vector<48x1xf32>
    %270 = math.rsqrt %269 : vector<48x1xf32>
    %271 = vector.broadcast %270 : vector<48x1xf32> to vector<48x32xf32>
    %272 = arith.mulf %267, %271 : vector<48x32xf32>
    %273 = vector.broadcast %252 : vector<1x32xf32> to vector<48x32xf32>
    %274 = arith.mulf %272, %273 : vector<48x32xf32>
    %275 = vector.broadcast %254 : vector<1x32xf32> to vector<48x32xf32>
    %276 = arith.addf %274, %275 : vector<48x32xf32>
    %277 = arith.truncf %276 : vector<48x32xf32> to vector<48x32xbf16>
    %c1_104 = arith.constant 1 : index
    %c0_105 = arith.constant 0 : index
    %c0_106 = arith.constant 0 : index
    %278 = vector.load %arg12[%c1_104, %c0_105, %c0_106] : memref<2x32x64xbf16, #tpu.memory_space<vmem>>, vector<1x32x64xbf16>
    %279 = vector.shape_cast %278 : vector<1x32x64xbf16> to vector<32x64xbf16>
    %cst_107 = arith.constant dense<0.000000e+00> : vector<48x64xf32>
    %280 = tpu.matmul %277, %279, %cst_107 {dimension_numbers = #tpu.dot_dimension_numbers<[1], [0], [0], [1], [0, 0, 1, 1], [], []>} : vector<48x32xbf16>, vector<32x64xbf16>, vector<48x64xf32> -> vector<48x64xf32>
    %c1_108 = arith.constant 1 : index
    %c0_109 = arith.constant 0 : index
    %c0_110 = arith.constant 0 : index
    %281 = vector.load %arg13[%c1_108, %c0_109, %c0_110] : memref<2x1x64xf32, #tpu.memory_space<vmem>>, vector<1x1x64xf32>
    %282 = vector.shape_cast %281 : vector<1x1x64xf32> to vector<1x64xf32>
    %283 = vector.broadcast %282 : vector<1x64xf32> to vector<48x64xf32>
    %284 = arith.addf %280, %283 : vector<48x64xf32>
    %cst_111 = arith.constant 5.000000e-01 : f32
    %285 = vector.broadcast %cst_111 : f32 to vector<48x64xf32>
    %286 = arith.mulf %285, %284 : vector<48x64xf32>
    %cst_112 = arith.constant 0.707106769 : f32
    %287 = vector.broadcast %cst_112 : f32 to vector<48x64xf32>
    %288 = arith.mulf %284, %287 : vector<48x64xf32>
    %289 = math.erf %288 : vector<48x64xf32>
    %cst_113 = arith.constant 1.000000e+00 : f32
    %290 = vector.broadcast %cst_113 : f32 to vector<48x64xf32>
    %291 = arith.addf %290, %289 : vector<48x64xf32>
    %292 = arith.mulf %286, %291 : vector<48x64xf32>
    %293 = arith.truncf %292 : vector<48x64xf32> to vector<48x64xbf16>
    %c1_114 = arith.constant 1 : index
    %c0_115 = arith.constant 0 : index
    %c0_116 = arith.constant 0 : index
    %294 = vector.load %arg14[%c1_114, %c0_115, %c0_116] : memref<2x64x32xbf16, #tpu.memory_space<vmem>>, vector<1x64x32xbf16>
    %295 = vector.shape_cast %294 : vector<1x64x32xbf16> to vector<64x32xbf16>
    %cst_117 = arith.constant dense<0.000000e+00> : vector<48x32xf32>
    %296 = tpu.matmul %293, %295, %cst_117 {dimension_numbers = #tpu.dot_dimension_numbers<[1], [0], [0], [1], [0, 0, 1, 1], [], []>} : vector<48x64xbf16>, vector<64x32xbf16>, vector<48x32xf32> -> vector<48x32xf32>
    %c1_118 = arith.constant 1 : index
    %c0_119 = arith.constant 0 : index
    %c0_120 = arith.constant 0 : index
    %297 = vector.load %arg15[%c1_118, %c0_119, %c0_120] : memref<2x1x32xf32, #tpu.memory_space<vmem>>, vector<1x1x32xf32>
    %298 = vector.shape_cast %297 : vector<1x1x32xf32> to vector<1x32xf32>
    %299 = vector.broadcast %298 : vector<1x32xf32> to vector<48x32xf32>
    %300 = arith.addf %296, %299 : vector<48x32xf32>
    %301 = arith.addf %250, %300 : vector<48x32xf32>
    %302 = vector.extract_strided_slice %301 {offsets = [0, 0], sizes = [1, 32], strides = [1, 1]} : vector<48x32xf32> to vector<1x32xf32>
    %303 = vector.extract_strided_slice %301 {offsets = [24, 0], sizes = [1, 32], strides = [1, 1]} : vector<48x32xf32> to vector<1x32xf32>
    %304 = tpu.concatenate %302, %303 in 0 : vector<1x32xf32>, vector<1x32xf32> -> vector<2x32xf32>
    %c0_121 = arith.constant 0 : index
    %c0_122 = arith.constant 0 : index
    %305 = vector.load %arg16[%c0_121, %c0_122] : memref<1x32xf32, #tpu.memory_space<vmem>>, vector<1x32xf32>
    %c0_123 = arith.constant 0 : index
    %c0_124 = arith.constant 0 : index
    %306 = vector.load %arg17[%c0_123, %c0_124] : memref<1x32xf32, #tpu.memory_space<vmem>>, vector<1x32xf32>
    %cst_125 = arith.constant dense<0.000000e+00> : vector<2xf32>
    %307 = vector.multi_reduction <add>, %304, %cst_125 [1] : vector<2x32xf32> to vector<2xf32>
    %308 = vector.shape_cast %307 : vector<2xf32> to vector<2x1xf32>
    %cst_126 = arith.constant 3.200000e+01 : f32
    %309 = vector.broadcast %cst_126 : f32 to vector<2x1xf32>
    %310 = arith.divf %308, %309 : vector<2x1xf32>
    %311 = vector.broadcast %310 : vector<2x1xf32> to vector<2x32xf32>
    %312 = arith.subf %304, %311 : vector<2x32xf32>
    %313 = arith.mulf %312, %312 : vector<2x32xf32>
    %cst_127 = arith.constant dense<0.000000e+00> : vector<2xf32>
    %314 = vector.multi_reduction <add>, %313, %cst_127 [1] : vector<2x32xf32> to vector<2xf32>
    %315 = vector.shape_cast %314 : vector<2xf32> to vector<2x1xf32>
    %cst_128 = arith.constant 3.200000e+01 : f32
    %316 = vector.broadcast %cst_128 : f32 to vector<2x1xf32>
    %317 = arith.divf %315, %316 : vector<2x1xf32>
    %318 = vector.broadcast %310 : vector<2x1xf32> to vector<2x32xf32>
    %319 = arith.subf %304, %318 : vector<2x32xf32>
    %cst_129 = arith.constant 9.99999997E-7 : f32
    %320 = vector.broadcast %cst_129 : f32 to vector<2x1xf32>
    %321 = arith.addf %317, %320 : vector<2x1xf32>
    %322 = math.rsqrt %321 : vector<2x1xf32>
    %323 = vector.broadcast %322 : vector<2x1xf32> to vector<2x32xf32>
    %324 = arith.mulf %319, %323 : vector<2x32xf32>
    %325 = vector.broadcast %305 : vector<1x32xf32> to vector<2x32xf32>
    %326 = arith.mulf %324, %325 : vector<2x32xf32>
    %327 = vector.broadcast %306 : vector<1x32xf32> to vector<2x32xf32>
    %328 = arith.addf %326, %327 : vector<2x32xf32>
    %c0_130 = arith.constant 0 : index
    %c0_131 = arith.constant 0 : index
    %329 = vector.load %arg18[%c0_130, %c0_131] : memref<2x32xf32, #tpu.memory_space<vmem>>, vector<2x32xf32>
    tpu.vector_store %arg18[%c0_130, %c0_131], %328 {strides = array<i32>} : memref<2x32xf32, #tpu.memory_space<vmem>>, vector<2x32xf32>,
    return
  }
}

</mosaic_0001>

<llo_original>
// kernel: feature_extractor.1
$region0: #{feature_extractor.1}
  #allocation0 [shape = 'u32[]', space=smem, size = 0x4, offset = 0x4, fixed_abs, tag = 'smem constant byte address 0x4 - core index']
  #allocation1 [shape = 'u32[144,128]{1,0:T(1,128)}', space=vmem, size = 0x12000, scoped, tag = 'internal scratch']
  %s0 = inlined_call_operand.vmem [shape: bf16[48,48], index: 0, kind: input, shape index: {}]
  %s1 = inlined_call_operand.vmem [shape: bf16[48,32], index: 1, kind: input, shape index: {}]
  %s2 = inlined_call_operand.vmem [shape: f32[48,32], index: 2, kind: input, shape index: {}]
  %s3 = inlined_call_operand.vmem [shape: f32[1,48,48], index: 3, kind: input, shape index: {}]
  %s4 = inlined_call_operand.vmem [shape: f32[2,1,32], index: 4, kind: input, shape index: {}]
  %s5 = inlined_call_operand.vmem [shape: f32[2,1,32], index: 5, kind: input, shape index: {}]
  %s6 = inlined_call_operand.vmem [shape: bf16[2,32,96], index: 6, kind: input, shape index: {}]
  %s7 = inlined_call_operand.vmem [shape: f32[2,1,96], index: 7, kind: input, shape index: {}]
  %s8 = inlined_call_operand.vmem [shape: bf16[2,32,32], index: 8, kind: input, shape index: {}]
  %s9 = inlined_call_operand.vmem [shape: f32[2,1,32], index: 9, kind: input, shape index: {}]
  %s10 = inlined_call_operand.vmem [shape: f32[2,1,32], index: 10, kind: input, shape index: {}]
  %s11 = inlined_call_operand.vmem [shape: f32[2,1,32], index: 11, kind: input, shape index: {}]
  %s12 = inlined_call_operand.vmem [shape: bf16[2,32,64], index: 12, kind: input, shape index: {}]
  %s13 = inlined_call_operand.vmem [shape: f32[2,1,64], index: 13, kind: input, shape index: {}]
  %s14 = inlined_call_operand.vmem [shape: bf16[2,64,32], index: 14, kind: input, shape index: {}]
  %s15 = inlined_call_operand.vmem [shape: f32[2,1,32], index: 15, kind: input, shape index: {}]
  %s16 = inlined_call_operand.vmem [shape: f32[1,32], index: 16, kind: input, shape index: {}]
  %s17 = inlined_call_operand.vmem [shape: f32[1,32], index: 17, kind: input, shape index: {}]
  %s18 = inlined_call_operand.hbm [shape: f32[2,32], index: 18, kind: output, shape index: {}]
  %s19 = sld [smem:[#allocation0]]
  $region82: #{feature_extractor.1} parent=0
    _
  %s21 = ssub.s32 1, %s19
  %s22 = scalar_select 0, %s21, %s19
  $region1: #{feature_extractor.1} parent=0
    #allocation2 [shape = 'u8[1024]{0}', space=vmem, size = 0x400, scoped, tag = 'output window, operand 0, single buffered']
    #allocation3 [shape = 's32[1]{0}', space=sflag, size = 0x4, scoped, tag = 'scoped memory for feature_extractor.1']
    %23 = vsyncpa [#allocation3], 0
    // Predicated region
    $region2: #{feature_extractor.1} parent=1 // pred_check
      _
    $region3: #{feature_extractor.1} parent=1 // pred_check_branch
      %25 = sbr.rel (0) target = $region5
    $region4: #{feature_extractor.1} parent=1 // pred_region
      _
    $region5: #{feature_extractor.1} parent=1 // pred_fallthru
      _
    // Predicated region
    $region6: #{feature_extractor.1} parent=1 // pred_check
      _
    $region7: #{feature_extractor.1} parent=1 // pred_check_branch
      %27 = sbr.rel (0) target = $region9
    $region8: #{feature_extractor.1} parent=1 // pred_region
      _
    $region9: #{feature_extractor.1} parent=1 // pred_fallthru
      _
    // Predicated region
    $region10: #{feature_extractor.1} parent=1 // pred_check
      _
    $region11: #{feature_extractor.1} parent=1 // pred_check_branch
      %29 = sbr.rel (0) target = $region13
    $region12: #{feature_extractor.1} parent=1 // pred_region
      _
    $region13: #{feature_extractor.1} parent=1 // pred_fallthru
      _
    // Predicated region
    $region14: #{feature_extractor.1} parent=1 // pred_check
      _
    $region15: #{feature_extractor.1} parent=1 // pred_check_branch
      %31 = sbr.rel (0) target = $region17
    $region16: #{feature_extractor.1} parent=1 // pred_region
      _
    $region17: #{feature_extractor.1} parent=1 // pred_fallthru
      _
    // Predicated region
    $region18: #{feature_extractor.1} parent=1 // pred_check
      _
    $region19: #{feature_extractor.1} parent=1 // pred_check_branch
      %33 = sbr.rel (0) target = $region21
    $region20: #{feature_extractor.1} parent=1 // pred_region
      _
    $region21: #{feature_extractor.1} parent=1 // pred_fallthru
      _
    // Predicated region
    $region22: #{feature_extractor.1} parent=1 // pred_check
      _
    $region23: #{feature_extractor.1} parent=1 // pred_check_branch
      %35 = sbr.rel (0) target = $region25
    $region24: #{feature_extractor.1} parent=1 // pred_region
      _
    $region25: #{feature_extractor.1} parent=1 // pred_fallthru
      _
    // Predicated region
    $region26: #{feature_extractor.1} parent=1 // pred_check
      _
    $region27: #{feature_extractor.1} parent=1 // pred_check_branch
      %37 = sbr.rel (0) target = $region29
    $region28: #{feature_extractor.1} parent=1 // pred_region
      _
    $region29: #{feature_extractor.1} parent=1 // pred_fallthru
      _
    // Predicated region
    $region30: #{feature_extractor.1} parent=1 // pred_check
      _
    $region31: #{feature_extractor.1} parent=1 // pred_check_branch
      %39 = sbr.rel (0) target = $region33
    $region32: #{feature_extractor.1} parent=1 // pred_region
      _
    $region33: #{feature_extractor.1} parent=1 // pred_fallthru
      _
    // Predicated region
    $region34: #{feature_extractor.1} parent=1 // pred_check
      _
    $region35: #{feature_extractor.1} parent=1 // pred_check_branch
      %41 = sbr.rel (0) target = $region37
    $region36: #{feature_extractor.1} parent=1 // pred_region
      _
    $region37: #{feature_extractor.1} parent=1 // pred_fallthru
      _
    // Predicated region
    $region38: #{feature_extractor.1} parent=1 // pred_check
      _
    $region39: #{feature_extractor.1} parent=1 // pred_check_branch
      %43 = sbr.rel (0) target = $region41
    $region40: #{feature_extractor.1} parent=1 // pred_region
      _
    $region41: #{feature_extractor.1} parent=1 // pred_fallthru
      _
    // Predicated region
    $region42: #{feature_extractor.1} parent=1 // pred_check
      _
    $region43: #{feature_extractor.1} parent=1 // pred_check_branch
      %45 = sbr.rel (0) target = $region45
    $region44: #{feature_extractor.1} parent=1 // pred_region
      _
    $region45: #{feature_extractor.1} parent=1 // pred_fallthru
      _
    // Predicated region
    $region46: #{feature_extractor.1} parent=1 // pred_check
      _
    $region47: #{feature_extractor.1} parent=1 // pred_check_branch
      %47 = sbr.rel (0) target = $region49
    $region48: #{feature_extractor.1} parent=1 // pred_region
      _
    $region49: #{feature_extractor.1} parent=1 // pred_fallthru
      _
    // Predicated region
    $region50: #{feature_extractor.1} parent=1 // pred_check
      _
    $region51: #{feature_extractor.1} parent=1 // pred_check_branch
      %49 = sbr.rel (0) target = $region53
    $region52: #{feature_extractor.1} parent=1 // pred_region
      _
    $region53: #{feature_extractor.1} parent=1 // pred_fallthru
      _
    // Predicated region
    $region54: #{feature_extractor.1} parent=1 // pred_check
      _
    $region55: #{feature_extractor.1} parent=1 // pred_check_branch
      %51 = sbr.rel (0) target = $region57
    $region56: #{feature_extractor.1} parent=1 // pred_region
      _
    $region57: #{feature_extractor.1} parent=1 // pred_fallthru
      _
    // Predicated region
    $region58: #{feature_extractor.1} parent=1 // pred_check
      _
    $region59: #{feature_extractor.1} parent=1 // pred_check_branch
      %53 = sbr.rel (0) target = $region61
    $region60: #{feature_extractor.1} parent=1 // pred_region
      _
    $region61: #{feature_extractor.1} parent=1 // pred_fallthru
      _
    // Predicated region
    $region62: #{feature_extractor.1} parent=1 // pred_check
      _
    $region63: #{feature_extractor.1} parent=1 // pred_check_branch
      %55 = sbr.rel (0) target = $region65
    $region64: #{feature_extractor.1} parent=1 // pred_region
      _
    $region65: #{feature_extractor.1} parent=1 // pred_fallthru
      _
    // Predicated region
    $region66: #{feature_extractor.1} parent=1 // pred_check
      _
    $region67: #{feature_extractor.1} parent=1 // pred_check_branch
      %57 = sbr.rel (0) target = $region69
    $region68: #{feature_extractor.1} parent=1 // pred_region
      _
    $region69: #{feature_extractor.1} parent=1 // pred_fallthru
      _
    // Predicated region
    $region70: #{feature_extractor.1} parent=1 // pred_check
      _
    $region71: #{feature_extractor.1} parent=1 // pred_check_branch
      %59 = sbr.rel (0) target = $region73
    $region72: #{feature_extractor.1} parent=1 // pred_region
      _
    $region73: #{feature_extractor.1} parent=1 // pred_fallthru
      _
    %v61 = vld [vmem:[%s0] sm:$0xf]
    %v62 = vld [vmem:[%s0 + $0x4] sm:$0xf]
    %v63 = vld [vmem:[%s0 + $0x8] sm:$0xf]
    %v64 = vld [vmem:[%s0 + $0xc] sm:$0xf]
    %v65 = vld [vmem:[%s0 + $0x10] sm:$0xf]
    %v66 = vld [vmem:[%s0 + $0x14] sm:$0xf]
    %v67 = vld [vmem:[%s1] sm:$0xf]
    %v68 = vld [vmem:[%s1 + $0x4] sm:$0xf]
    %v69 = vld [vmem:[%s1 + $0x8] sm:$0xf]
    %v70 = vld [vmem:[%s1 + $0xc] sm:$0xf]
    %v71 = vld [vmem:[%s1 + $0x10] sm:$0xf]
    %v72 = vld [vmem:[%s1 + $0x14] sm:$0xf]
    %v73 = vld [vmem:[%s2] sm:$0xff]
    %v74 = vld [vmem:[%s2 + $0x8] sm:$0xff]
    %v75 = vld [vmem:[%s2 + $0x10] sm:$0xff]
    %v76 = vld [vmem:[%s2 + $0x18] sm:$0xff]
    %v77 = vld [vmem:[%s2 + $0x20] sm:$0xff]
    %v78 = vld [vmem:[%s2 + $0x28] sm:$0xff]
    %v85 = vunpack.c.l.b16 %v61
    %v86 = vunpack.c.l.b16 %v62
    %v87 = vunpack.c.l.b16 %v63
    %v88 = vunpack.c.l.b16 %v64
    %v89 = vunpack.c.l.b16 %v65
    %v90 = vunpack.c.l.b16 %v66
    %v91 = vpack.c.b16 %v86, %v85
    %v92 = vpack.c.b16 %v88, %v87
    %v93 = vpack.c.b16 %v90, %v89
    %v100 = vunpack.c.l.b16 %v67
    %v101 = vunpack.c.l.b16 %v68
    %v102 = vunpack.c.l.b16 %v69
    %v103 = vunpack.c.l.b16 %v70
    %v104 = vunpack.c.l.b16 %v71
    %v105 = vunpack.c.l.b16 %v72
    %v106 = vpack.c.b16 %v101, %v100
    %v107 = vpack.c.b16 %v103, %v102
    %v108 = vpack.c.b16 %v105, %v104
    %vm112 = vcmask 392192
    %v114 = vsel %vm112, %v91, 0
    %v117 = vsel %vm112, %v92, 0
    %v120 = vsel %vm112, %v93, 0
    %122 = vmatprep.subr.bf16.mxu0 0
    %123 = vmatpush1.bf16.msra.mxu0 0
    %124 = vmatprep.subr.bf16.mxu0 0
    %125 = vmatpush1.bf16.msra.mxu0 0
    %126 = vmatprep.subr.bf16.mxu0 0
    %127 = vmatpush1.bf16.msra.mxu0 0
    %128 = vmatprep.subr.bf16.mxu0 0
    %129 = vmatpush1.bf16.msra.mxu0 0
    %130 = vmatprep.subr.bf16.mxu0 0
    %131 = vmatpush1.bf16.msra.mxu0 0
    %132 = vmatprep.subr.bf16.mxu0 0
    %133 = vmatpush1.bf16.msra.mxu0 %v108
    %134 = vmatprep.subr.bf16.mxu0 0
    %135 = vmatpush1.bf16.msra.mxu0 %v107
    %136 = vmatprep.subr.bf16.mxu0 0
    %137 = vmatpush1.bf16.msra.mxu0 %v106
    %138 = vmatprep.subr.bf16.mxu0 0
    %139 = vmatpush2.bf16.msra.mxu0 0
    %140 = vmatprep.subr.bf16.mxu0 0
    %141 = vmatpush2.bf16.msra.mxu0 0
    %142 = vmatprep.subr.bf16.mxu0 0
    %143 = vmatpush2.bf16.msra.mxu0 0
    %144 = vmatprep.subr.bf16.mxu0 0
    %145 = vmatpush2.bf16.msra.mxu0 0
    %146 = vmatprep.subr.bf16.mxu0 0
    %147 = vmatpush2.bf16.msra.mxu0 0
    %148 = vmatprep.subr.bf16.mxu0 0
    %149 = vmatpush2.bf16.msra.mxu0 0
    %150 = vmatprep.subr.bf16.mxu0 0
    %151 = vmatpush2.bf16.msra.mxu0 0
    %152 = vmatprep.subr.bf16.mxu0 0
    %153 = vmatpush2.bf16.msra.mxu0 0
    %154 = vmatprep.mubr.bf16.mxu0 0
    %155 = vmatmul.mubr.bf16.gmra.mxu0 %v114
    %v156 = vpop.f32.mrf.mxu0
    %v157 = vadd.f32 %v73, %v156
    %v158 = vpop.f32.mrf.mxu0
    %v159 = vpop.f32.mrf.mxu0
    %v160 = vadd.f32 %v74, %v159
    %v161 = vpop.f32.mrf.mxu0
    %162 = vmatprep.mubr.bf16.mxu0 0
    %163 = vmatmul.mubr.bf16.gmra.mxu0 %v117
    %v164 = vpop.f32.mrf.mxu0
    %v165 = vadd.f32 %v75, %v164
    %v166 = vpop.f32.mrf.mxu0
    %v167 = vpop.f32.mrf.mxu0
    %v168 = vadd.f32 %v76, %v167
    %v169 = vpop.f32.mrf.mxu0
    %170 = vmatprep.mubr.bf16.mxu0 0
    %171 = vmatmul.mubr.bf16.gmra.mxu0 %v120
    %v172 = vpop.f32.mrf.mxu0
    %v173 = vadd.f32 %v77, %v172
    %v174 = vpop.f32.mrf.mxu0
    %v175 = vpop.f32.mrf.mxu0
    %v176 = vadd.f32 %v78, %v175
    %v177 = vpop.f32.mrf.mxu0
    %178 = vdwg.mxu0
    %v179 = vld [vmem:[%s3] sm:$0xff]
    %v180 = vld [vmem:[%s3 + $0x8] sm:$0xff]
    %v181 = vld [vmem:[%s3 + $0x10] sm:$0xff]
    %v182 = vld [vmem:[%s3 + $0x18] sm:$0xff]
    %v183 = vld [vmem:[%s3 + $0x20] sm:$0xff]
    %v184 = vld [vmem:[%s3 + $0x28] sm:$0xff]
    %v185 = vld [vmem:[%s4] sm:$0x1]
    %v186 = vld [vmem:[%s5] sm:$0x1]
    %vm187 = vcmask 261120
    %v188 = vsel %vm187, %v157, 0.0
    %189 = vadd.xlane.f32.xlu0 %v188
    %v190 = vpop.xlane.xlu0 %189
    %v191 = vsel %vm187, %v160, 0.0
    %192 = vadd.xlane.f32.xlu0 %v191
    %v193 = vpop.xlane.xlu0 %192
    %v194 = vsel %vm187, %v165, 0.0
    %195 = vadd.xlane.f32.xlu0 %v194
    %v196 = vpop.xlane.xlu0 %195
    %v197 = vsel %vm187, %v168, 0.0
    %198 = vadd.xlane.f32.xlu0 %v197
    %v199 = vpop.xlane.xlu0 %198
    %v200 = vsel %vm187, %v173, 0.0
    %201 = vadd.xlane.f32.xlu0 %v200
    %v202 = vpop.xlane.xlu0 %201
    %v203 = vsel %vm187, %v176, 0.0
    %204 = vadd.xlane.f32.xlu0 %v203
    %v205 = vpop.xlane.xlu0 %204
    %v206 = vrcp.pop 32.0
    %v207 = vmul.f32 %v190, %v206
    %v208 = vmul.f32 %v193, %v206
    %v209 = vmul.f32 %v196, %v206
    %v210 = vmul.f32 %v199, %v206
    %v211 = vmul.f32 %v202, %v206
    %v212 = vmul.f32 %v205, %v206
    %v213 = vsub.f32 %v157, %v207
    %v214 = vsub.f32 %v160, %v208
    %v215 = vsub.f32 %v165, %v209
    %v216 = vsub.f32 %v168, %v210
    %v217 = vsub.f32 %v173, %v211
    %v218 = vsub.f32 %v176, %v212
    %v219 = vmul.f32 %v213, %v213
    %v220 = vmul.f32 %v214, %v214
    %v221 = vmul.f32 %v215, %v215
    %v222 = vmul.f32 %v216, %v216
    %v223 = vmul.f32 %v217, %v217
    %v224 = vmul.f32 %v218, %v218
    %v225 = vsel %vm187, %v219, 0.0
    %226 = vadd.xlane.f32.xlu0 %v225
    %v227 = vpop.xlane.xlu0 %226
    %v228 = vsel %vm187, %v220, 0.0
    %229 = vadd.xlane.f32.xlu0 %v228
    %v230 = vpop.xlane.xlu0 %229
    %v231 = vsel %vm187, %v221, 0.0
    %232 = vadd.xlane.f32.xlu0 %v231
    %v233 = vpop.xlane.xlu0 %232
    %v234 = vsel %vm187, %v222, 0.0
    %235 = vadd.xlane.f32.xlu0 %v234
    %v236 = vpop.xlane.xlu0 %235
    %v237 = vsel %vm187, %v223, 0.0
    %238 = vadd.xlane.f32.xlu0 %v237
    %v239 = vpop.xlane.xlu0 %238
    %v240 = vsel %vm187, %v224, 0.0
    %241 = vadd.xlane.f32.xlu0 %v240
    %v242 = vpop.xlane.xlu0 %241
    %v243 = vmul.f32 %v227, %v206
    %v244 = vmul.f32 %v230, %v206
    %v245 = vmul.f32 %v233, %v206
    %v246 = vmul.f32 %v236, %v206
    %v247 = vmul.f32 %v239, %v206
    %v248 = vmul.f32 %v242, %v206
    %v249 = vadd.f32 %v243, 1e-06
    %v250 = vadd.f32 %v244, 1e-06
    %v251 = vadd.f32 %v245, 1e-06
    %v252 = vadd.f32 %v246, 1e-06
    %v253 = vadd.f32 %v247, 1e-06
    %v254 = vadd.f32 %v248, 1e-06
    %v255 = vrsqrt.pop %v249
    %v256 = vrsqrt.pop %v250
    %v257 = vrsqrt.pop %v251
    %v258 = vrsqrt.pop %v252
    %v259 = vrsqrt.pop %v253
    %v260 = vrsqrt.pop %v254
    %v261 = vmul.f32 %v213, %v255
    %v262 = vmul.f32 %v214, %v256
    %v263 = vmul.f32 %v215, %v257
    %v264 = vmul.f32 %v216, %v258
    %v265 = vmul.f32 %v217, %v259
    %v266 = vmul.f32 %v218, %v260
    %v268 = vlaneseq
    %v269 = vshrl.u32 %v268, 7
    %v270 = vsub.s32 0, %v269
    %v271 = vrot.slane %v185, %v270
    %v273 = vmul.f32 %v261, %v271
    %v274 = vmul.f32 %v262, %v271
    %v275 = vmul.f32 %v263, %v271
    %v276 = vmul.f32 %v264, %v271
    %v277 = vmul.f32 %v265, %v271
    %v278 = vmul.f32 %v266, %v271
    %v280 = vlaneseq
    %v281 = vshrl.u32 %v280, 7
    %v282 = vsub.s32 0, %v281
    %v283 = vrot.slane %v186, %v282
    %v285 = vadd.f32 %v273, %v283
    %v286 = vadd.f32 %v274, %v283
    %v287 = vadd.f32 %v275, %v283
    %v288 = vadd.f32 %v276, %v283
    %v289 = vadd.f32 %v277, %v283
    %v290 = vadd.f32 %v278, %v283
    %v291 = vpack.c.bf16 %v286, %v285
    %v292 = vpack.c.bf16 %v288, %v287
    %v293 = vpack.c.bf16 %v290, %v289
    %v294 = vld [vmem:[%s6] sm:$0xf]
    %v295 = vld [vmem:[%s6 + $0x4] sm:$0xf]
    %v296 = vld [vmem:[%s6 + $0x8] sm:$0xf]
    %v297 = vld [vmem:[%s6 + $0xc] sm:$0xf]
    %v298 = vld [vmem:[%s7] sm:$0x1]
    %v300 = vlaneseq
    %v301 = vshrl.u32 %v300, 7
    %v302 = vsub.s32 0, %v301
    %v303 = vrot.slane %v298, %v302
    %v309 = vunpack.c.l.b16 %v294
    %v310 = vunpack.c.l.b16 %v295
    %v311 = vunpack.c.l.b16 %v296
    %v312 = vunpack.c.l.b16 %v297
    %v313 = vpack.c.b16 %v310, %v309
    %v314 = vpack.c.b16 %v312, %v311
    %v318 = vsel %vm187, %v291, 0
    %v321 = vsel %vm187, %v292, 0
    %v324 = vsel %vm187, %v293, 0
    %326 = vmatprep.subr.bf16.mxu0 0
    %327 = vmatpush1.bf16.msra.mxu0 0
    %328 = vmatprep.subr.bf16.mxu0 0
    %329 = vmatpush1.bf16.msra.mxu0 0
    %330 = vmatprep.subr.bf16.mxu0 0
    %331 = vmatpush1.bf16.msra.mxu0 0
    %332 = vmatprep.subr.bf16.mxu0 0
    %333 = vmatpush1.bf16.msra.mxu0 0
    %334 = vmatprep.subr.bf16.mxu0 0
    %335 = vmatpush1.bf16.msra.mxu0 0
    %336 = vmatprep.subr.bf16.mxu0 0
    %337 = vmatpush1.bf16.msra.mxu0 0
    %338 = vmatprep.subr.bf16.mxu0 0
    %339 = vmatpush1.bf16.msra.mxu0 %v314
    %340 = vmatprep.subr.bf16.mxu0 0
    %341 = vmatpush1.bf16.msra.mxu0 %v313
    %342 = vmatprep.subr.bf16.mxu0 0
    %343 = vmatpush2.bf16.msra.mxu0 0
    %344 = vmatprep.subr.bf16.mxu0 0
    %345 = vmatpush2.bf16.msra.mxu0 0
    %346 = vmatprep.subr.bf16.mxu0 0
    %347 = vmatpush2.bf16.msra.mxu0 0
    %348 = vmatprep.subr.bf16.mxu0 0
    %349 = vmatpush2.bf16.msra.mxu0 0
    %350 = vmatprep.subr.bf16.mxu0 0
    %351 = vmatpush2.bf16.msra.mxu0 0
    %352 = vmatprep.subr.bf16.mxu0 0
    %353 = vmatpush2.bf16.msra.mxu0 0
    %354 = vmatprep.subr.bf16.mxu0 0
    %355 = vmatpush2.bf16.msra.mxu0 0
    %356 = vmatprep.subr.bf16.mxu0 0
    %357 = vmatpush2.bf16.msra.mxu0 0
    %358 = vmatprep.mubr.bf16.mxu0 0
    %359 = vmatmul.mubr.bf16.gmra.mxu0 %v318
    %v360 = vpop.f32.mrf.mxu0
    %v361 = vadd.f32 %v303, %v360
    %v362 = vpop.f32.mrf.mxu0
    %v363 = vpop.f32.mrf.mxu0
    %v364 = vadd.f32 %v303, %v363
    %v365 = vpop.f32.mrf.mxu0
    %366 = vmatprep.mubr.bf16.mxu0 0
    %367 = vmatmul.mubr.bf16.gmra.mxu0 %v321
    %v368 = vpop.f32.mrf.mxu0
    %v369 = vadd.f32 %v303, %v368
    %v370 = vpop.f32.mrf.mxu0
    %v371 = vpop.f32.mrf.mxu0
    %v372 = vadd.f32 %v303, %v371
    %v373 = vpop.f32.mrf.mxu0
    %374 = vmatprep.mubr.bf16.mxu0 0
    %375 = vmatmul.mubr.bf16.gmra.mxu0 %v324
    %v376 = vpop.f32.mrf.mxu0
    %v377 = vadd.f32 %v303, %v376
    %v378 = vpop.f32.mrf.mxu0
    %v379 = vpop.f32.mrf.mxu0
    %v380 = vadd.f32 %v303, %v379
    %v381 = vpop.f32.mrf.mxu0
    %382 = vdwg.mxu0
    %389 = vrot.lane.b32.xlu0 %v361, 120
    %v390 = vpop.permute.xlu0 %389
    %391 = vrot.lane.b32.xlu0 %v364, 120
    %v392 = vpop.permute.xlu0 %391
    %393 = vrot.lane.b32.xlu0 %v369, 120
    %v394 = vpop.permute.xlu0 %393
    %395 = vrot.lane.b32.xlu0 %v372, 120
    %v396 = vpop.permute.xlu0 %395
    %397 = vrot.lane.b32.xlu0 %v377, 120
    %v398 = vpop.permute.xlu0 %397
    %399 = vrot.lane.b32.xlu0 %v380, 120
    %v400 = vpop.permute.xlu0 %399
    %407 = vrot.lane.b32.xlu0 %v361, 112
    %v408 = vpop.permute.xlu0 %407
    %409 = vrot.lane.b32.xlu0 %v364, 112
    %v410 = vpop.permute.xlu0 %409
    %411 = vrot.lane.b32.xlu0 %v369, 112
    %v412 = vpop.permute.xlu0 %411
    %413 = vrot.lane.b32.xlu0 %v372, 112
    %v414 = vpop.permute.xlu0 %413
    %415 = vrot.lane.b32.xlu0 %v377, 112
    %v416 = vpop.permute.xlu0 %415
    %417 = vrot.lane.b32.xlu0 %v380, 112
    %v418 = vpop.permute.xlu0 %417
    %425 = vrot.lane.b32.xlu0 %v361, 104
    %v426 = vpop.permute.xlu0 %425
    %427 = vrot.lane.b32.xlu0 %v364, 104
    %v428 = vpop.permute.xlu0 %427
    %429 = vrot.lane.b32.xlu0 %v369, 104
    %v430 = vpop.permute.xlu0 %429
    %431 = vrot.lane.b32.xlu0 %v372, 104
    %v432 = vpop.permute.xlu0 %431
    %433 = vrot.lane.b32.xlu0 %v377, 104
    %v434 = vpop.permute.xlu0 %433
    %435 = vrot.lane.b32.xlu0 %v380, 104
    %v436 = vpop.permute.xlu0 %435
    %v443 = vpack.c.bf16 %v364, %v361
    %v444 = vpack.c.bf16 %v372, %v369
    %v445 = vpack.c.bf16 %v380, %v377
    %v446 = vpack.c.bf16 %v392, %v390
    %v447 = vpack.c.bf16 %v396, %v394
    %v448 = vpack.c.bf16 %v400, %v398
    %v449 = vpack.c.bf16 %v410, %v408
    %v450 = vpack.c.bf16 %v414, %v412
    %v451 = vpack.c.bf16 %v418, %v416
    %v452 = vpack.c.bf16 %v428, %v426
    %v453 = vpack.c.bf16 %v432, %v430
    %v454 = vpack.c.bf16 %v436, %v434
    %458 = vrot.lane.b32.xlu0 %v443, 96
    %v459 = vpop.permute.xlu0 %458
    %460 = vrot.lane.b32.xlu0 %v444, 96
    %v461 = vpop.permute.xlu0 %460
    %462 = vrot.lane.b32.xlu0 %v445, 96
    %v463 = vpop.permute.xlu0 %462
    %vm464 = vcmask 64512
    %v466 = vsel %vm464, %v443, 0
    %v469 = vsel %vm464, %v444, 0
    %v472 = vsel %vm464, %v445, 0
    %v475 = vsel %vm464, %v459, 0
    %v478 = vsel %vm464, %v461, 0
    %v481 = vsel %vm464, %v463, 0
    %483 = vmatprep.subr.bf16.mxu0 0
    %484 = vmatpush1.bf16.xpose.msra.mxu0 0
    %485 = vmatprep.subr.bf16.mxu0 0
    %486 = vmatpush1.bf16.xpose.msra.mxu0 0
    %487 = vmatprep.subr.bf16.mxu0 0
    %488 = vmatpush1.bf16.xpose.msra.mxu0 0
    %489 = vmatprep.subr.bf16.mxu0 0
    %490 = vmatpush1.bf16.xpose.msra.mxu0 0
    %491 = vmatprep.subr.bf16.mxu0 0
    %492 = vmatpush1.bf16.xpose.msra.mxu0 0
    %493 = vmatprep.subr.bf16.mxu0 0
    %494 = vmatpush1.bf16.xpose.msra.mxu0 %v481
    %495 = vmatprep.subr.bf16.mxu0 0
    %496 = vmatpush1.bf16.xpose.msra.mxu0 %v478
    %497 = vmatprep.subr.bf16.mxu0 0
    %498 = vmatpush1.bf16.xpose.msra.mxu0 %v475
    %499 = vmatprep.subr.bf16.mxu0 0
    %500 = vmatpush2.bf16.xpose.msra.mxu0 0
    %501 = vmatprep.subr.bf16.mxu0 0
    %502 = vmatpush2.bf16.xpose.msra.mxu0 0
    %503 = vmatprep.subr.bf16.mxu0 0
    %504 = vmatpush2.bf16.xpose.msra.mxu0 0
    %505 = vmatprep.subr.bf16.mxu0 0
    %506 = vmatpush2.bf16.xpose.msra.mxu0 0
    %507 = vmatprep.subr.bf16.mxu0 0
    %508 = vmatpush2.bf16.xpose.msra.mxu0 0
    %509 = vmatprep.subr.bf16.mxu0 0
    %510 = vmatpush2.bf16.xpose.msra.mxu0 0
    %511 = vmatprep.subr.bf16.mxu0 0
    %512 = vmatpush2.bf16.xpose.msra.mxu0 0
    %513 = vmatprep.subr.bf16.mxu0 0
    %514 = vmatpush2.bf16.xpose.msra.mxu0 0
    %515 = vmatprep.mubr.bf16.mxu0 0
    %516 = vmatmul.mubr.bf16.gmra.mxu0 %v466
    %v517 = vpop.f32.mrf.mxu0
    %v518 = vadd.f32 %v179, %v517
    %v519 = vpop.f32.mrf.mxu0
    %v520 = vpop.f32.mrf.mxu0
    %v521 = vadd.f32 %v180, %v520
    %v522 = vpop.f32.mrf.mxu0
    %523 = vmatprep.mubr.bf16.mxu0 0
    %524 = vmatmul.mubr.bf16.gmra.mxu0 %v469
    %v525 = vpop.f32.mrf.mxu0
    %v526 = vadd.f32 %v181, %v525
    %v527 = vpop.f32.mrf.mxu0
    %v528 = vpop.f32.mrf.mxu0
    %v529 = vadd.f32 %v182, %v528
    %v530 = vpop.f32.mrf.mxu0
    %531 = vmatprep.mubr.bf16.mxu0 0
    %532 = vmatmul.mubr.bf16.gmra.mxu0 %v472
    %v533 = vpop.f32.mrf.mxu0
    %v534 = vadd.f32 %v183, %v533
    %v535 = vpop.f32.mrf.mxu0
    %v536 = vpop.f32.mrf.mxu0
    %v537 = vadd.f32 %v184, %v536
    %v538 = vpop.f32.mrf.mxu0
    %539 = vdwg.mxu0
    %543 = vrot.lane.b32.xlu0 %v446, 96
    %v544 = vpop.permute.xlu0 %543
    %545 = vrot.lane.b32.xlu0 %v447, 96
    %v546 = vpop.permute.xlu0 %545
    %547 = vrot.lane.b32.xlu0 %v448, 96
    %v548 = vpop.permute.xlu0 %547
    %v550 = vsel %vm464, %v446, 0
    %v553 = vsel %vm464, %v447, 0
    %v556 = vsel %vm464, %v448, 0
    %v559 = vsel %vm464, %v544, 0
    %v562 = vsel %vm464, %v546, 0
    %v565 = vsel %vm464, %v548, 0
    %567 = vmatprep.subr.bf16.mxu0 0
    %568 = vmatpush1.bf16.xpose.msra.mxu0 0
    %569 = vmatprep.subr.bf16.mxu0 0
    %570 = vmatpush1.bf16.xpose.msra.mxu0 0
    %571 = vmatprep.subr.bf16.mxu0 0
    %572 = vmatpush1.bf16.xpose.msra.mxu0 0
    %573 = vmatprep.subr.bf16.mxu0 0
    %574 = vmatpush1.bf16.xpose.msra.mxu0 0
    %575 = vmatprep.subr.bf16.mxu0 0
    %576 = vmatpush1.bf16.xpose.msra.mxu0 0
    %577 = vmatprep.subr.bf16.mxu0 0
    %578 = vmatpush1.bf16.xpose.msra.mxu0 %v565
    %579 = vmatprep.subr.bf16.mxu0 0
    %580 = vmatpush1.bf16.xpose.msra.mxu0 %v562
    %581 = vmatprep.subr.bf16.mxu0 0
    %582 = vmatpush1.bf16.xpose.msra.mxu0 %v559
    %583 = vmatprep.subr.bf16.mxu0 0
    %584 = vmatpush2.bf16.xpose.msra.mxu0 0
    %585 = vmatprep.subr.bf16.mxu0 0
    %586 = vmatpush2.bf16.xpose.msra.mxu0 0
    %587 = vmatprep.subr.bf16.mxu0 0
    %588 = vmatpush2.bf16.xpose.msra.mxu0 0
    %589 = vmatprep.subr.bf16.mxu0 0
    %590 = vmatpush2.bf16.xpose.msra.mxu0 0
    %591 = vmatprep.subr.bf16.mxu0 0
    %592 = vmatpush2.bf16.xpose.msra.mxu0 0
    %593 = vmatprep.subr.bf16.mxu0 0
    %594 = vmatpush2.bf16.xpose.msra.mxu0 0
    %595 = vmatprep.subr.bf16.mxu0 0
    %596 = vmatpush2.bf16.xpose.msra.mxu0 0
    %597 = vmatprep.subr.bf16.mxu0 0
    %598 = vmatpush2.bf16.xpose.msra.mxu0 0
    %599 = vmatprep.mubr.bf16.mxu0 0
    %600 = vmatmul.mubr.bf16.gmra.mxu0 %v550
    %v601 = vpop.f32.mrf.mxu0
    %v602 = vadd.f32 %v179, %v601
    %v603 = vpop.f32.mrf.mxu0
    %v604 = vpop.f32.mrf.mxu0
    %v605 = vadd.f32 %v180, %v604
    %v606 = vpop.f32.mrf.mxu0
    %607 = vmatprep.mubr.bf16.mxu0 0
    %608 = vmatmul.mubr.bf16.gmra.mxu0 %v553
    %v609 = vpop.f32.mrf.mxu0
    %v610 = vadd.f32 %v181, %v609
    %v611 = vpop.f32.mrf.mxu0
    %v612 = vpop.f32.mrf.mxu0
    %v613 = vadd.f32 %v182, %v612
    %v614 = vpop.f32.mrf.mxu0
    %615 = vmatprep.mubr.bf16.mxu0 0
    %616 = vmatmul.mubr.bf16.gmra.mxu0 %v556
    %v617 = vpop.f32.mrf.mxu0
    %v618 = vadd.f32 %v183, %v617
    %v619 = vpop.f32.mrf.mxu0
    %v620 = vpop.f32.mrf.mxu0
    %v621 = vadd.f32 %v184, %v620
    %v622 = vpop.f32.mrf.mxu0
    %623 = vdwg.mxu0
    %627 = vrot.lane.b32.xlu0 %v449, 96
    %v628 = vpop.permute.xlu0 %627
    %629 = vrot.lane.b32.xlu0 %v450, 96
    %v630 = vpop.permute.xlu0 %629
    %631 = vrot.lane.b32.xlu0 %v451, 96
    %v632 = vpop.permute.xlu0 %631
    %v634 = vsel %vm464, %v449, 0
    %v637 = vsel %vm464, %v450, 0
    %v640 = vsel %vm464, %v451, 0
    %v643 = vsel %vm464, %v628, 0
    %v646 = vsel %vm464, %v630, 0
    %v649 = vsel %vm464, %v632, 0
    %651 = vmatprep.subr.bf16.mxu0 0
    %652 = vmatpush1.bf16.xpose.msra.mxu0 0
    %653 = vmatprep.subr.bf16.mxu0 0
    %654 = vmatpush1.bf16.xpose.msra.mxu0 0
    %655 = vmatprep.subr.bf16.mxu0 0
    %656 = vmatpush1.bf16.xpose.msra.mxu0 0
    %657 = vmatprep.subr.bf16.mxu0 0
    %658 = vmatpush1.bf16.xpose.msra.mxu0 0
    %659 = vmatprep.subr.bf16.mxu0 0
    %660 = vmatpush1.bf16.xpose.msra.mxu0 0
    %661 = vmatprep.subr.bf16.mxu0 0
    %662 = vmatpush1.bf16.xpose.msra.mxu0 %v649
    %663 = vmatprep.subr.bf16.mxu0 0
    %664 = vmatpush1.bf16.xpose.msra.mxu0 %v646
    %665 = vmatprep.subr.bf16.mxu0 0
    %666 = vmatpush1.bf16.xpose.msra.mxu0 %v643
    %667 = vmatprep.subr.bf16.mxu0 0
    %668 = vmatpush2.bf16.xpose.msra.mxu0 0
    %669 = vmatprep.subr.bf16.mxu0 0
    %670 = vmatpush2.bf16.xpose.msra.mxu0 0
    %671 = vmatprep.subr.bf16.mxu0 0
    %672 = vmatpush2.bf16.xpose.msra.mxu0 0
    %673 = vmatprep.subr.bf16.mxu0 0
    %674 = vmatpush2.bf16.xpose.msra.mxu0 0
    %675 = vmatprep.subr.bf16.mxu0 0
    %676 = vmatpush2.bf16.xpose.msra.mxu0 0
    %677 = vmatprep.subr.bf16.mxu0 0
    %678 = vmatpush2.bf16.xpose.msra.mxu0 0
    %679 = vmatprep.subr.bf16.mxu0 0
    %680 = vmatpush2.bf16.xpose.msra.mxu0 0
    %681 = vmatprep.subr.bf16.mxu0 0
    %682 = vmatpush2.bf16.xpose.msra.mxu0 0
    %683 = vmatprep.mubr.bf16.mxu0 0
    %684 = vmatmul.mubr.bf16.gmra.mxu0 %v634
    %v685 = vpop.f32.mrf.mxu0
    %v686 = vadd.f32 %v179, %v685
    %v687 = vpop.f32.mrf.mxu0
    %v688 = vpop.f32.mrf.mxu0
    %v689 = vadd.f32 %v180, %v688
    %v690 = vpop.f32.mrf.mxu0
    %691 = vmatprep.mubr.bf16.mxu0 0
    %692 = vmatmul.mubr.bf16.gmra.mxu0 %v637
    %v693 = vpop.f32.mrf.mxu0
    %v694 = vadd.f32 %v181, %v693
    %v695 = vpop.f32.mrf.mxu0
    %v696 = vpop.f32.mrf.mxu0
    %v697 = vadd.f32 %v182, %v696
    %v698 = vpop.f32.mrf.mxu0
    %699 = vmatprep.mubr.bf16.mxu0 0
    %700 = vmatmul.mubr.bf16.gmra.mxu0 %v640
    %v701 = vpop.f32.mrf.mxu0
    %v702 = vadd.f32 %v183, %v701
    %v703 = vpop.f32.mrf.mxu0
    %v704 = vpop.f32.mrf.mxu0
    %v705 = vadd.f32 %v184, %v704
    %v706 = vpop.f32.mrf.mxu0
    %707 = vdwg.mxu0
    %711 = vrot.lane.b32.xlu0 %v452, 96
    %v712 = vpop.permute.xlu0 %711
    %713 = vrot.lane.b32.xlu0 %v453, 96
    %v714 = vpop.permute.xlu0 %713
    %715 = vrot.lane.b32.xlu0 %v454, 96
    %v716 = vpop.permute.xlu0 %715
    %v718 = vsel %vm464, %v452, 0
    %v721 = vsel %vm464, %v453, 0
    %v724 = vsel %vm464, %v454, 0
    %v727 = vsel %vm464, %v712, 0
    %v730 = vsel %vm464, %v714, 0
    %v733 = vsel %vm464, %v716, 0
    %735 = vmatprep.subr.bf16.mxu0 0
    %736 = vmatpush1.bf16.xpose.msra.mxu0 0
    %737 = vmatprep.subr.bf16.mxu0 0
    %738 = vmatpush1.bf16.xpose.msra.mxu0 0
    %739 = vmatprep.subr.bf16.mxu0 0
    %740 = vmatpush1.bf16.xpose.msra.mxu0 0
    %741 = vmatprep.subr.bf16.mxu0 0
    %742 = vmatpush1.bf16.xpose.msra.mxu0 0
    %743 = vmatprep.subr.bf16.mxu0 0
    %744 = vmatpush1.bf16.xpose.msra.mxu0 0
    %745 = vmatprep.subr.bf16.mxu0 0
    %746 = vmatpush1.bf16.xpose.msra.mxu0 %v733
    %747 = vmatprep.subr.bf16.mxu0 0
    %748 = vmatpush1.bf16.xpose.msra.mxu0 %v730
    %749 = vmatprep.subr.bf16.mxu0 0
    %750 = vmatpush1.bf16.xpose.msra.mxu0 %v727
    %751 = vmatprep.subr.bf16.mxu0 0
    %752 = vmatpush2.bf16.xpose.msra.mxu0 0
    %753 = vmatprep.subr.bf16.mxu0 0
    %754 = vmatpush2.bf16.xpose.msra.mxu0 0
    %755 = vmatprep.subr.bf16.mxu0 0
    %756 = vmatpush2.bf16.xpose.msra.mxu0 0
    %757 = vmatprep.subr.bf16.mxu0 0
    %758 = vmatpush2.bf16.xpose.msra.mxu0 0
    %759 = vmatprep.subr.bf16.mxu0 0
    %760 = vmatpush2.bf16.xpose.msra.mxu0 0
    %761 = vmatprep.subr.bf16.mxu0 0
    %762 = vmatpush2.bf16.xpose.msra.mxu0 0
    %763 = vmatprep.subr.bf16.mxu0 0
    %764 = vmatpush2.bf16.xpose.msra.mxu0 0
    %765 = vmatprep.subr.bf16.mxu0 0
    %766 = vmatpush2.bf16.xpose.msra.mxu0 0
    %767 = vmatprep.mubr.bf16.mxu0 0
    %768 = vmatmul.mubr.bf16.gmra.mxu0 %v718
    %v769 = vpop.f32.mrf.mxu0
    %v770 = vadd.f32 %v179, %v769
    %v771 = vpop.f32.mrf.mxu0
    %v772 = vpop.f32.mrf.mxu0
    %v773 = vadd.f32 %v180, %v772
    %v774 = vpop.f32.mrf.mxu0
    %775 = vmatprep.mubr.bf16.mxu0 0
    %776 = vmatmul.mubr.bf16.gmra.mxu0 %v721
    %v777 = vpop.f32.mrf.mxu0
    %v778 = vadd.f32 %v181, %v777
    %v779 = vpop.f32.mrf.mxu0
    %v780 = vpop.f32.mrf.mxu0
    %v781 = vadd.f32 %v182, %v780
    %v782 = vpop.f32.mrf.mxu0
    %783 = vmatprep.mubr.bf16.mxu0 0
    %784 = vmatmul.mubr.bf16.gmra.mxu0 %v724
    %v785 = vpop.f32.mrf.mxu0
    %v786 = vadd.f32 %v183, %v785
    %v787 = vpop.f32.mrf.mxu0
    %v788 = vpop.f32.mrf.mxu0
    %v789 = vadd.f32 %v184, %v788
    %v790 = vpop.f32.mrf.mxu0
    %791 = vdwg.mxu0
    %v792 = vsel %vm112, %v518, -inf
    %793 = vmax.xlane.f32.xlu0 %v792
    %v794 = vpop.xlane.xlu0 %793
    %v795 = vsel %vm112, %v521, -inf
    %796 = vmax.xlane.f32.xlu0 %v795
    %v797 = vpop.xlane.xlu0 %796
    %v798 = vsel %vm112, %v526, -inf
    %799 = vmax.xlane.f32.xlu0 %v798
    %v800 = vpop.xlane.xlu0 %799
    %v801 = vsel %vm112, %v529, -inf
    %802 = vmax.xlane.f32.xlu0 %v801
    %v803 = vpop.xlane.xlu0 %802
    %v804 = vsel %vm112, %v534, -inf
    %805 = vmax.xlane.f32.xlu0 %v804
    %v806 = vpop.xlane.xlu0 %805
    %v807 = vsel %vm112, %v537, -inf
    %808 = vmax.xlane.f32.xlu0 %v807
    %v809 = vpop.xlane.xlu0 %808
    %v810 = vsel %vm112, %v602, -inf
    %811 = vmax.xlane.f32.xlu0 %v810
    %v812 = vpop.xlane.xlu0 %811
    %v813 = vsel %vm112, %v605, -inf
    %814 = vmax.xlane.f32.xlu0 %v813
    %v815 = vpop.xlane.xlu0 %814
    %v816 = vsel %vm112, %v610, -inf
    %817 = vmax.xlane.f32.xlu0 %v816
    %v818 = vpop.xlane.xlu0 %817
    %v819 = vsel %vm112, %v613, -inf
    %820 = vmax.xlane.f32.xlu0 %v819
    %v821 = vpop.xlane.xlu0 %820
    %v822 = vsel %vm112, %v618, -inf
    %823 = vmax.xlane.f32.xlu0 %v822
    %v824 = vpop.xlane.xlu0 %823
    %v825 = vsel %vm112, %v621, -inf
    %826 = vmax.xlane.f32.xlu0 %v825
    %v827 = vpop.xlane.xlu0 %826
    %v828 = vsel %vm112, %v686, -inf
    %829 = vmax.xlane.f32.xlu0 %v828
    %v830 = vpop.xlane.xlu0 %829
    %v831 = vsel %vm112, %v689, -inf
    %832 = vmax.xlane.f32.xlu0 %v831
    %v833 = vpop.xlane.xlu0 %832
    %v834 = vsel %vm112, %v694, -inf
    %835 = vmax.xlane.f32.xlu0 %v834
    %v836 = vpop.xlane.xlu0 %835
    %v837 = vsel %vm112, %v697, -inf
    %838 = vmax.xlane.f32.xlu0 %v837
    %v839 = vpop.xlane.xlu0 %838
    %v840 = vsel %vm112, %v702, -inf
    %841 = vmax.xlane.f32.xlu0 %v840
    %v842 = vpop.xlane.xlu0 %841
    %v843 = vsel %vm112, %v705, -inf
    %844 = vmax.xlane.f32.xlu0 %v843
    %v845 = vpop.xlane.xlu0 %844
    %v846 = vsel %vm112, %v770, -inf
    %847 = vmax.xlane.f32.xlu0 %v846
    %v848 = vpop.xlane.xlu0 %847
    %v849 = vsel %vm112, %v773, -inf
    %850 = vmax.xlane.f32.xlu0 %v849
    %v851 = vpop.xlane.xlu0 %850
    %v852 = vsel %vm112, %v778, -inf
    %853 = vmax.xlane.f32.xlu0 %v852
    %v854 = vpop.xlane.xlu0 %853
    %v855 = vsel %vm112, %v781, -inf
    %856 = vmax.xlane.f32.xlu0 %v855
    %v857 = vpop.xlane.xlu0 %856
    %v858 = vsel %vm112, %v786, -inf
    %859 = vmax.xlane.f32.xlu0 %v858
    %v860 = vpop.xlane.xlu0 %859
    %v861 = vsel %vm112, %v789, -inf
    %862 = vmax.xlane.f32.xlu0 %v861
    %v863 = vpop.xlane.xlu0 %862
    %v864 = vsub.f32 %v518, %v794
    %v865 = vsub.f32 %v521, %v797
    %v866 = vsub.f32 %v526, %v800
    %v867 = vsub.f32 %v529, %v803
    %v868 = vsub.f32 %v534, %v806
    %v869 = vsub.f32 %v537, %v809
    %v870 = vsub.f32 %v602, %v812
    %v871 = vsub.f32 %v605, %v815
    %v872 = vsub.f32 %v610, %v818
    %v873 = vsub.f32 %v613, %v821
    %v874 = vsub.f32 %v618, %v824
    %v875 = vsub.f32 %v621, %v827
    %v876 = vsub.f32 %v686, %v830
    %v877 = vsub.f32 %v689, %v833
    %v878 = vsub.f32 %v694, %v836
    %v879 = vsub.f32 %v697, %v839
    %v880 = vsub.f32 %v702, %v842
    %v881 = vsub.f32 %v705, %v845
    %v882 = vsub.f32 %v770, %v848
    %v883 = vsub.f32 %v773, %v851
    %v884 = vsub.f32 %v778, %v854
    %v885 = vsub.f32 %v781, %v857
    %v886 = vsub.f32 %v786, %v860
    %v887 = vsub.f32 %v789, %v863
    %v888 = vmul.f32 %v864, 1.442695
    %v889 = vpow.pop %v888
    %v890 = vmul.f32 %v865, 1.442695
    %v891 = vpow.pop %v890
    %v892 = vmul.f32 %v866, 1.442695
    %v893 = vpow.pop %v892
    %v894 = vmul.f32 %v867, 1.442695
    %v895 = vpow.pop %v894
    %v896 = vmul.f32 %v868, 1.442695
    %v897 = vpow.pop %v896
    %v898 = vmul.f32 %v869, 1.442695
    %v899 = vpow.pop %v898
    %v900 = vmul.f32 %v870, 1.442695
    %v901 = vpow.pop %v900
    %v902 = vmul.f32 %v871, 1.442695
    %v903 = vpow.pop %v902
    %v904 = vmul.f32 %v872, 1.442695
    %v905 = vpow.pop %v904
    %v906 = vmul.f32 %v873, 1.442695
    %v907 = vpow.pop %v906
    %v908 = vmul.f32 %v874, 1.442695
    %v909 = vpow.pop %v908
    %v910 = vmul.f32 %v875, 1.442695
    %v911 = vpow.pop %v910
    %v912 = vmul.f32 %v876, 1.442695
    %v913 = vpow.pop %v912
    %v914 = vmul.f32 %v877, 1.442695
    %v915 = vpow.pop %v914
    %v916 = vmul.f32 %v878, 1.442695
    %v917 = vpow.pop %v916
    %v918 = vmul.f32 %v879, 1.442695
    %v919 = vpow.pop %v918
    %v920 = vmul.f32 %v880, 1.442695
    %v921 = vpow.pop %v920
    %v922 = vmul.f32 %v881, 1.442695
    %v923 = vpow.pop %v922
    %v924 = vmul.f32 %v882, 1.442695
    %v925 = vpow.pop %v924
    %v926 = vmul.f32 %v883, 1.442695
    %v927 = vpow.pop %v926
    %v928 = vmul.f32 %v884, 1.442695
    %v929 = vpow.pop %v928
    %v930 = vmul.f32 %v885, 1.442695
    %v931 = vpow.pop %v930
    %v932 = vmul.f32 %v886, 1.442695
    %v933 = vpow.pop %v932
    %v934 = vmul.f32 %v887, 1.442695
    %v935 = vpow.pop %v934
    %v936 = vsel %vm112, %v889, 0.0
    %937 = vadd.xlane.f32.xlu0 %v936
    %v938 = vpop.xlane.xlu0 %937
    %v939 = vsel %vm112, %v891, 0.0
    %940 = vadd.xlane.f32.xlu0 %v939
    %v941 = vpop.xlane.xlu0 %940
    %v942 = vsel %vm112, %v893, 0.0
    %943 = vadd.xlane.f32.xlu0 %v942
    %v944 = vpop.xlane.xlu0 %943
    %v945 = vsel %vm112, %v895, 0.0
    %946 = vadd.xlane.f32.xlu0 %v945
    %v947 = vpop.xlane.xlu0 %946
    %v948 = vsel %vm112, %v897, 0.0
    %949 = vadd.xlane.f32.xlu0 %v948
    %v950 = vpop.xlane.xlu0 %949
    %v951 = vsel %vm112, %v899, 0.0
    %952 = vadd.xlane.f32.xlu0 %v951
    %v953 = vpop.xlane.xlu0 %952
    %v954 = vsel %vm112, %v901, 0.0
    %955 = vadd.xlane.f32.xlu0 %v954
    %v956 = vpop.xlane.xlu0 %955
    %v957 = vsel %vm112, %v903, 0.0
    %958 = vadd.xlane.f32.xlu0 %v957
    %v959 = vpop.xlane.xlu0 %958
    %v960 = vsel %vm112, %v905, 0.0
    %961 = vadd.xlane.f32.xlu0 %v960
    %v962 = vpop.xlane.xlu0 %961
    %v963 = vsel %vm112, %v907, 0.0
    %964 = vadd.xlane.f32.xlu0 %v963
    %v965 = vpop.xlane.xlu0 %964
    %v966 = vsel %vm112, %v909, 0.0
    %967 = vadd.xlane.f32.xlu0 %v966
    %v968 = vpop.xlane.xlu0 %967
    %v969 = vsel %vm112, %v911, 0.0
    %970 = vadd.xlane.f32.xlu0 %v969
    %v971 = vpop.xlane.xlu0 %970
    %v972 = vsel %vm112, %v913, 0.0
    %973 = vadd.xlane.f32.xlu0 %v972
    %v974 = vpop.xlane.xlu0 %973
    %v975 = vsel %vm112, %v915, 0.0
    %976 = vadd.xlane.f32.xlu0 %v975
    %v977 = vpop.xlane.xlu0 %976
    %v978 = vsel %vm112, %v917, 0.0
    %979 = vadd.xlane.f32.xlu0 %v978
    %v980 = vpop.xlane.xlu0 %979
    %v981 = vsel %vm112, %v919, 0.0
    %982 = vadd.xlane.f32.xlu0 %v981
    %v983 = vpop.xlane.xlu0 %982
    %v984 = vsel %vm112, %v921, 0.0
    %985 = vadd.xlane.f32.xlu0 %v984
    %v986 = vpop.xlane.xlu0 %985
    %v987 = vsel %vm112, %v923, 0.0
    %988 = vadd.xlane.f32.xlu0 %v987
    %v989 = vpop.xlane.xlu0 %988
    %v990 = vsel %vm112, %v925, 0.0
    %991 = vadd.xlane.f32.xlu0 %v990
    %v992 = vpop.xlane.xlu0 %991
    %v993 = vsel %vm112, %v927, 0.0
    %994 = vadd.xlane.f32.xlu0 %v993
    %v995 = vpop.xlane.xlu0 %994
    %v996 = vsel %vm112, %v929, 0.0
    %997 = vadd.xlane.f32.xlu0 %v996
    %v998 = vpop.xlane.xlu0 %997
    %v999 = vsel %vm112, %v931, 0.0
    %1000 = vadd.xlane.f32.xlu0 %v999
    %v1001 = vpop.xlane.xlu0 %1000
    %v1002 = vsel %vm112, %v933, 0.0
    %1003 = vadd.xlane.f32.xlu0 %v1002
    %v1004 = vpop.xlane.xlu0 %1003
    %v1005 = vsel %vm112, %v935, 0.0
    %1006 = vadd.xlane.f32.xlu0 %v1005
    %v1007 = vpop.xlane.xlu0 %1006
    %v1008 = vrcp.pop %v938
    %v1009 = vrcp.pop %v941
    %v1010 = vrcp.pop %v944
    %v1011 = vrcp.pop %v947
    %v1012 = vrcp.pop %v950
    %v1013 = vrcp.pop %v953
    %v1014 = vrcp.pop %v956
    %v1015 = vrcp.pop %v959
    %v1016 = vrcp.pop %v962
    %v1017 = vrcp.pop %v965
    %v1018 = vrcp.pop %v968
    %v1019 = vrcp.pop %v971
    %v1020 = vrcp.pop %v974
    %v1021 = vrcp.pop %v977
    %v1022 = vrcp.pop %v980
    %v1023 = vrcp.pop %v983
    %v1024 = vrcp.pop %v986
    %v1025 = vrcp.pop %v989
    %v1026 = vrcp.pop %v992
    %v1027 = vrcp.pop %v995
    %v1028 = vrcp.pop %v998
    %v1029 = vrcp.pop %v1001
    %v1030 = vrcp.pop %v1004
    %v1031 = vrcp.pop %v1007
    %v1032 = vmul.f32 %v889, %v1008
    %v1033 = vmul.f32 %v891, %v1009
    %v1034 = vmul.f32 %v893, %v1010
    %v1035 = vmul.f32 %v895, %v1011
    %v1036 = vmul.f32 %v897, %v1012
    %v1037 = vmul.f32 %v899, %v1013
    %v1038 = vmul.f32 %v901, %v1014
    %v1039 = vmul.f32 %v903, %v1015
    %v1040 = vmul.f32 %v905, %v1016
    %v1041 = vmul.f32 %v907, %v1017
    %v1042 = vmul.f32 %v909, %v1018
    %v1043 = vmul.f32 %v911, %v1019
    %v1044 = vmul.f32 %v913, %v1020
    %v1045 = vmul.f32 %v915, %v1021
    %v1046 = vmul.f32 %v917, %v1022
    %v1047 = vmul.f32 %v919, %v1023
    %v1048 = vmul.f32 %v921, %v1024
    %v1049 = vmul.f32 %v923, %v1025
    %v1050 = vmul.f32 %v925, %v1026
    %v1051 = vmul.f32 %v927, %v1027
    %v1052 = vmul.f32 %v929, %v1028
    %v1053 = vmul.f32 %v931, %v1029
    %v1054 = vmul.f32 %v933, %v1030
    %v1055 = vmul.f32 %v935, %v1031
    %v1056 = vpack.c.bf16 %v1033, %v1032
    %v1057 = vpack.c.bf16 %v1035, %v1034
    %v1058 = vpack.c.bf16 %v1037, %v1036
    %v1059 = vpack.c.bf16 %v1039, %v1038
    %v1060 = vpack.c.bf16 %v1041, %v1040
    %v1061 = vpack.c.bf16 %v1043, %v1042
    %v1062 = vpack.c.bf16 %v1045, %v1044
    %v1063 = vpack.c.bf16 %v1047, %v1046
    %v1064 = vpack.c.bf16 %v1049, %v1048
    %v1065 = vpack.c.bf16 %v1051, %v1050
    %v1066 = vpack.c.bf16 %v1053, %v1052
    %v1067 = vpack.c.bf16 %v1055, %v1054
    %1068 = vrot.lane.b32.xlu0 %v443, 64
    %v1069 = vpop.permute.xlu0 %1068
    %1070 = vrot.lane.b32.xlu0 %v444, 64
    %v1071 = vpop.permute.xlu0 %1070
    %1072 = vrot.lane.b32.xlu0 %v445, 64
    %v1073 = vpop.permute.xlu0 %1072
    %v1078 = vsel %vm112, %v1056, 0
    %v1081 = vsel %vm112, %v1057, 0
    %v1084 = vsel %vm112, %v1058, 0
    %1086 = vmatprep.subr.bf16.mxu0 0
    %1087 = vmatpush1.bf16.msra.mxu0 0
    %1088 = vmatprep.subr.bf16.mxu0 0
    %1089 = vmatpush1.bf16.msra.mxu0 0
    %1090 = vmatprep.subr.bf16.mxu0 0
    %1091 = vmatpush1.bf16.msra.mxu0 0
    %1092 = vmatprep.subr.bf16.mxu0 0
    %1093 = vmatpush1.bf16.msra.mxu0 0
    %1094 = vmatprep.subr.bf16.mxu0 0
    %1095 = vmatpush1.bf16.msra.mxu0 0
    %1096 = vmatprep.subr.bf16.mxu0 0
    %1097 = vmatpush1.bf16.msra.mxu0 %v1073
    %1098 = vmatprep.subr.bf16.mxu0 0
    %1099 = vmatpush1.bf16.msra.mxu0 %v1071
    %1100 = vmatprep.subr.bf16.mxu0 0
    %1101 = vmatpush1.bf16.msra.mxu0 %v1069
    %1102 = vmatprep.subr.bf16.mxu0 0
    %1103 = vmatpush2.bf16.msra.mxu0 0
    %1104 = vmatprep.subr.bf16.mxu0 0
    %1105 = vmatpush2.bf16.msra.mxu0 0
    %1106 = vmatprep.subr.bf16.mxu0 0
    %1107 = vmatpush2.bf16.msra.mxu0 0
    %1108 = vmatprep.subr.bf16.mxu0 0
    %1109 = vmatpush2.bf16.msra.mxu0 0
    %1110 = vmatprep.subr.bf16.mxu0 0
    %1111 = vmatpush2.bf16.msra.mxu0 0
    %1112 = vmatprep.subr.bf16.mxu0 0
    %1113 = vmatpush2.bf16.msra.mxu0 0
    %1114 = vmatprep.subr.bf16.mxu0 0
    %1115 = vmatpush2.bf16.msra.mxu0 0
    %1116 = vmatprep.subr.bf16.mxu0 0
    %1117 = vmatpush2.bf16.msra.mxu0 0
    %1118 = vmatprep.mubr.bf16.mxu0 0
    %1119 = vmatmul.mubr.bf16.gmra.mxu0 %v1078
    %v1120 = vpop.f32.mrf.mxu0
    %v1121 = vadd.f32 0.0, %v1120
    %v1122 = vpop.f32.mrf.mxu0
    %v1123 = vpop.f32.mrf.mxu0
    %v1124 = vadd.f32 0.0, %v1123
    %v1125 = vpop.f32.mrf.mxu0
    %1126 = vmatprep.mubr.bf16.mxu0 0
    %1127 = vmatmul.mubr.bf16.gmra.mxu0 %v1081
    %v1128 = vpop.f32.mrf.mxu0
    %v1129 = vadd.f32 0.0, %v1128
    %v1130 = vpop.f32.mrf.mxu0
    %v1131 = vpop.f32.mrf.mxu0
    %v1132 = vadd.f32 0.0, %v1131
    %v1133 = vpop.f32.mrf.mxu0
    %1134 = vmatprep.mubr.bf16.mxu0 0
    %1135 = vmatmul.mubr.bf16.gmra.mxu0 %v1084
    %v1136 = vpop.f32.mrf.mxu0
    %v1137 = vadd.f32 0.0, %v1136
    %v1138 = vpop.f32.mrf.mxu0
    %v1139 = vpop.f32.mrf.mxu0
    %v1140 = vadd.f32 0.0, %v1139
    %v1141 = vpop.f32.mrf.mxu0
    %1142 = vdwg.mxu0
    %1143 = vrot.lane.b32.xlu0 %v446, 64
    %v1144 = vpop.permute.xlu0 %1143
    %1145 = vrot.lane.b32.xlu0 %v447, 64
    %v1146 = vpop.permute.xlu0 %1145
    %1147 = vrot.lane.b32.xlu0 %v448, 64
    %v1148 = vpop.permute.xlu0 %1147
    %v1153 = vsel %vm112, %v1059, 0
    %v1156 = vsel %vm112, %v1060, 0
    %v1159 = vsel %vm112, %v1061, 0
    %1161 = vmatprep.subr.bf16.mxu0 0
    %1162 = vmatpush1.bf16.msra.mxu0 0
    %1163 = vmatprep.subr.bf16.mxu0 0
    %1164 = vmatpush1.bf16.msra.mxu0 0
    %1165 = vmatprep.subr.bf16.mxu0 0
    %1166 = vmatpush1.bf16.msra.mxu0 0
    %1167 = vmatprep.subr.bf16.mxu0 0
    %1168 = vmatpush1.bf16.msra.mxu0 0
    %1169 = vmatprep.subr.bf16.mxu0 0
    %1170 = vmatpush1.bf16.msra.mxu0 0
    %1171 = vmatprep.subr.bf16.mxu0 0
    %1172 = vmatpush1.bf16.msra.mxu0 %v1148
    %1173 = vmatprep.subr.bf16.mxu0 0
    %1174 = vmatpush1.bf16.msra.mxu0 %v1146
    %1175 = vmatprep.subr.bf16.mxu0 0
    %1176 = vmatpush1.bf16.msra.mxu0 %v1144
    %1177 = vmatprep.subr.bf16.mxu0 0
    %1178 = vmatpush2.bf16.msra.mxu0 0
    %1179 = vmatprep.subr.bf16.mxu0 0
    %1180 = vmatpush2.bf16.msra.mxu0 0
    %1181 = vmatprep.subr.bf16.mxu0 0
    %1182 = vmatpush2.bf16.msra.mxu0 0
    %1183 = vmatprep.subr.bf16.mxu0 0
    %1184 = vmatpush2.bf16.msra.mxu0 0
    %1185 = vmatprep.subr.bf16.mxu0 0
    %1186 = vmatpush2.bf16.msra.mxu0 0
    %1187 = vmatprep.subr.bf16.mxu0 0
    %1188 = vmatpush2.bf16.msra.mxu0 0
    %1189 = vmatprep.subr.bf16.mxu0 0
    %1190 = vmatpush2.bf16.msra.mxu0 0
    %1191 = vmatprep.subr.bf16.mxu0 0
    %1192 = vmatpush2.bf16.msra.mxu0 0
    %1193 = vmatprep.mubr.bf16.mxu0 0
    %1194 = vmatmul.mubr.bf16.gmra.mxu0 %v1153
    %v1195 = vpop.f32.mrf.mxu0
    %v1196 = vadd.f32 0.0, %v1195
    %v1197 = vpop.f32.mrf.mxu0
    %v1198 = vpop.f32.mrf.mxu0
    %v1199 = vadd.f32 0.0, %v1198
    %v1200 = vpop.f32.mrf.mxu0
    %1201 = vmatprep.mubr.bf16.mxu0 0
    %1202 = vmatmul.mubr.bf16.gmra.mxu0 %v1156
    %v1203 = vpop.f32.mrf.mxu0
    %v1204 = vadd.f32 0.0, %v1203
    %v1205 = vpop.f32.mrf.mxu0
    %v1206 = vpop.f32.mrf.mxu0
    %v1207 = vadd.f32 0.0, %v1206
    %v1208 = vpop.f32.mrf.mxu0
    %1209 = vmatprep.mubr.bf16.mxu0 0
    %1210 = vmatmul.mubr.bf16.gmra.mxu0 %v1159
    %v1211 = vpop.f32.mrf.mxu0
    %v1212 = vadd.f32 0.0, %v1211
    %v1213 = vpop.f32.mrf.mxu0
    %v1214 = vpop.f32.mrf.mxu0
    %v1215 = vadd.f32 0.0, %v1214
    %v1216 = vpop.f32.mrf.mxu0
    %1217 = vdwg.mxu0
    %1218 = vrot.lane.b32.xlu0 %v449, 64
    %v1219 = vpop.permute.xlu0 %1218
    %1220 = vrot.lane.b32.xlu0 %v450, 64
    %v1221 = vpop.permute.xlu0 %1220
    %1222 = vrot.lane.b32.xlu0 %v451, 64
    %v1223 = vpop.permute.xlu0 %1222
    %v1228 = vsel %vm112, %v1062, 0
    %v1231 = vsel %vm112, %v1063, 0
    %v1234 = vsel %vm112, %v1064, 0
    %1236 = vmatprep.subr.bf16.mxu0 0
    %1237 = vmatpush1.bf16.msra.mxu0 0
    %1238 = vmatprep.subr.bf16.mxu0 0
    %1239 = vmatpush1.bf16.msra.mxu0 0
    %1240 = vmatprep.subr.bf16.mxu0 0
    %1241 = vmatpush1.bf16.msra.mxu0 0
    %1242 = vmatprep.subr.bf16.mxu0 0
    %1243 = vmatpush1.bf16.msra.mxu0 0
    %1244 = vmatprep.subr.bf16.mxu0 0
    %1245 = vmatpush1.bf16.msra.mxu0 0
    %1246 = vmatprep.subr.bf16.mxu0 0
    %1247 = vmatpush1.bf16.msra.mxu0 %v1223
    %1248 = vmatprep.subr.bf16.mxu0 0
    %1249 = vmatpush1.bf16.msra.mxu0 %v1221
    %1250 = vmatprep.subr.bf16.mxu0 0
    %1251 = vmatpush1.bf16.msra.mxu0 %v1219
    %1252 = vmatprep.subr.bf16.mxu0 0
    %1253 = vmatpush2.bf16.msra.mxu0 0
    %1254 = vmatprep.subr.bf16.mxu0 0
    %1255 = vmatpush2.bf16.msra.mxu0 0
    %1256 = vmatprep.subr.bf16.mxu0 0
    %1257 = vmatpush2.bf16.msra.mxu0 0
    %1258 = vmatprep.subr.bf16.mxu0 0
    %1259 = vmatpush2.bf16.msra.mxu0 0
    %1260 = vmatprep.subr.bf16.mxu0 0
    %1261 = vmatpush2.bf16.msra.mxu0 0
    %1262 = vmatprep.subr.bf16.mxu0 0
    %1263 = vmatpush2.bf16.msra.mxu0 0
    %1264 = vmatprep.subr.bf16.mxu0 0
    %1265 = vmatpush2.bf16.msra.mxu0 0
    %1266 = vmatprep.subr.bf16.mxu0 0
    %1267 = vmatpush2.bf16.msra.mxu0 0
    %1268 = vmatprep.mubr.bf16.mxu0 0
    %1269 = vmatmul.mubr.bf16.gmra.mxu0 %v1228
    %v1270 = vpop.f32.mrf.mxu0
    %v1271 = vadd.f32 0.0, %v1270
    %v1272 = vpop.f32.mrf.mxu0
    %v1273 = vpop.f32.mrf.mxu0
    %v1274 = vadd.f32 0.0, %v1273
    %v1275 = vpop.f32.mrf.mxu0
    %1276 = vmatprep.mubr.bf16.mxu0 0
    %1277 = vmatmul.mubr.bf16.gmra.mxu0 %v1231
    %v1278 = vpop.f32.mrf.mxu0
    %v1279 = vadd.f32 0.0, %v1278
    %v1280 = vpop.f32.mrf.mxu0
    %v1281 = vpop.f32.mrf.mxu0
    %v1282 = vadd.f32 0.0, %v1281
    %v1283 = vpop.f32.mrf.mxu0
    %1284 = vmatprep.mubr.bf16.mxu0 0
    %1285 = vmatmul.mubr.bf16.gmra.mxu0 %v1234
    %v1286 = vpop.f32.mrf.mxu0
    %v1287 = vadd.f32 0.0, %v1286
    %v1288 = vpop.f32.mrf.mxu0
    %v1289 = vpop.f32.mrf.mxu0
    %v1290 = vadd.f32 0.0, %v1289
    %v1291 = vpop.f32.mrf.mxu0
    %1292 = vdwg.mxu0
    %1293 = vrot.lane.b32.xlu0 %v452, 64
    %v1294 = vpop.permute.xlu0 %1293
    %1295 = vrot.lane.b32.xlu0 %v453, 64
    %v1296 = vpop.permute.xlu0 %1295
    %1297 = vrot.lane.b32.xlu0 %v454, 64
    %v1298 = vpop.permute.xlu0 %1297
    %v1303 = vsel %vm112, %v1065, 0
    %v1306 = vsel %vm112, %v1066, 0
    %v1309 = vsel %vm112, %v1067, 0
    %1311 = vmatprep.subr.bf16.mxu0 0
    %1312 = vmatpush1.bf16.msra.mxu0 0
    %1313 = vmatprep.subr.bf16.mxu0 0
    %1314 = vmatpush1.bf16.msra.mxu0 0
    %1315 = vmatprep.subr.bf16.mxu0 0
    %1316 = vmatpush1.bf16.msra.mxu0 0
    %1317 = vmatprep.subr.bf16.mxu0 0
    %1318 = vmatpush1.bf16.msra.mxu0 0
    %1319 = vmatprep.subr.bf16.mxu0 0
    %1320 = vmatpush1.bf16.msra.mxu0 0
    %1321 = vmatprep.subr.bf16.mxu0 0
    %1322 = vmatpush1.bf16.msra.mxu0 %v1298
    %1323 = vmatprep.subr.bf16.mxu0 0
    %1324 = vmatpush1.bf16.msra.mxu0 %v1296
    %1325 = vmatprep.subr.bf16.mxu0 0
    %1326 = vmatpush1.bf16.msra.mxu0 %v1294
    %1327 = vmatprep.subr.bf16.mxu0 0
    %1328 = vmatpush2.bf16.msra.mxu0 0
    %1329 = vmatprep.subr.bf16.mxu0 0
    %1330 = vmatpush2.bf16.msra.mxu0 0
    %1331 = vmatprep.subr.bf16.mxu0 0
    %1332 = vmatpush2.bf16.msra.mxu0 0
    %1333 = vmatprep.subr.bf16.mxu0 0
    %1334 = vmatpush2.bf16.msra.mxu0 0
    %1335 = vmatprep.subr.bf16.mxu0 0
    %1336 = vmatpush2.bf16.msra.mxu0 0
    %1337 = vmatprep.subr.bf16.mxu0 0
    %1338 = vmatpush2.bf16.msra.mxu0 0
    %1339 = vmatprep.subr.bf16.mxu0 0
    %1340 = vmatpush2.bf16.msra.mxu0 0
    %1341 = vmatprep.subr.bf16.mxu0 0
    %1342 = vmatpush2.bf16.msra.mxu0 0
    %1343 = vmatprep.mubr.bf16.mxu0 0
    %1344 = vmatmul.mubr.bf16.gmra.mxu0 %v1303
    %v1345 = vpop.f32.mrf.mxu0
    %v1346 = vadd.f32 0.0, %v1345
    %v1347 = vpop.f32.mrf.mxu0
    %v1348 = vpop.f32.mrf.mxu0
    %v1349 = vadd.f32 0.0, %v1348
    %v1350 = vpop.f32.mrf.mxu0
    %1351 = vmatprep.mubr.bf16.mxu0 0
    %1352 = vmatmul.mubr.bf16.gmra.mxu0 %v1306
    %v1353 = vpop.f32.mrf.mxu0
    %v1354 = vadd.f32 0.0, %v1353
    %v1355 = vpop.f32.mrf.mxu0
    %v1356 = vpop.f32.mrf.mxu0
    %v1357 = vadd.f32 0.0, %v1356
    %v1358 = vpop.f32.mrf.mxu0
    %1359 = vmatprep.mubr.bf16.mxu0 0
    %1360 = vmatmul.mubr.bf16.gmra.mxu0 %v1309
    %v1361 = vpop.f32.mrf.mxu0
    %v1362 = vadd.f32 0.0, %v1361
    %v1363 = vpop.f32.mrf.mxu0
    %v1364 = vpop.f32.mrf.mxu0
    %v1365 = vadd.f32 0.0, %v1364
    %v1366 = vpop.f32.mrf.mxu0
    %1367 = vdwg.mxu0
    %1374 = vrot.lane.b32.xlu0 %v1196, 8
    %v1375 = vpop.permute.xlu0 %1374
    %1376 = vrot.lane.b32.xlu0 %v1199, 8
    %v1377 = vpop.permute.xlu0 %1376
    %1378 = vrot.lane.b32.xlu0 %v1204, 8
    %v1379 = vpop.permute.xlu0 %1378
    %1380 = vrot.lane.b32.xlu0 %v1207, 8
    %v1381 = vpop.permute.xlu0 %1380
    %1382 = vrot.lane.b32.xlu0 %v1212, 8
    %v1383 = vpop.permute.xlu0 %1382
    %1384 = vrot.lane.b32.xlu0 %v1215, 8
    %v1385 = vpop.permute.xlu0 %1384
    %1398 = vrot.lane.b32.xlu0 %v1271, 16
    %v1399 = vpop.permute.xlu0 %1398
    %1400 = vrot.lane.b32.xlu0 %v1274, 16
    %v1401 = vpop.permute.xlu0 %1400
    %1402 = vrot.lane.b32.xlu0 %v1279, 16
    %v1403 = vpop.permute.xlu0 %1402
    %1404 = vrot.lane.b32.xlu0 %v1282, 16
    %v1405 = vpop.permute.xlu0 %1404
    %1406 = vrot.lane.b32.xlu0 %v1287, 16
    %v1407 = vpop.permute.xlu0 %1406
    %1408 = vrot.lane.b32.xlu0 %v1290, 16
    %v1409 = vpop.permute.xlu0 %1408
    %1422 = vrot.lane.b32.xlu0 %v1346, 24
    %v1423 = vpop.permute.xlu0 %1422
    %1424 = vrot.lane.b32.xlu0 %v1349, 24
    %v1425 = vpop.permute.xlu0 %1424
    %1426 = vrot.lane.b32.xlu0 %v1354, 24
    %v1427 = vpop.permute.xlu0 %1426
    %1428 = vrot.lane.b32.xlu0 %v1357, 24
    %v1429 = vpop.permute.xlu0 %1428
    %1430 = vrot.lane.b32.xlu0 %v1362, 24
    %v1431 = vpop.permute.xlu0 %1430
    %1432 = vrot.lane.b32.xlu0 %v1365, 24
    %v1433 = vpop.permute.xlu0 %1432
    %v1440 = vsel %vm464, %v1121, %v1375
    %v1441 = vsel %vm464, %v1124, %v1377
    %v1442 = vsel %vm464, %v1129, %v1379
    %v1443 = vsel %vm464, %v1132, %v1381
    %v1444 = vsel %vm464, %v1137, %v1383
    %v1445 = vsel %vm464, %v1140, %v1385
    %vm1446 = vcmask 130048
    %v1447 = vsel %vm1446, %v1440, %v1399
    %v1448 = vsel %vm1446, %v1441, %v1401
    %v1449 = vsel %vm1446, %v1442, %v1403
    %v1450 = vsel %vm1446, %v1443, %v1405
    %v1451 = vsel %vm1446, %v1444, %v1407
    %v1452 = vsel %vm1446, %v1445, %v1409
    %vm1453 = vcmask 195584
    %v1454 = vsel %vm1453, %v1447, %v1423
    %v1455 = vsel %vm1453, %v1448, %v1425
    %v1456 = vsel %vm1453, %v1449, %v1427
    %v1457 = vsel %vm1453, %v1450, %v1429
    %v1458 = vsel %vm1453, %v1451, %v1431
    %v1459 = vsel %vm1453, %v1452, %v1433
    %v1460 = vpack.c.bf16 %v1455, %v1454
    %v1461 = vpack.c.bf16 %v1457, %v1456
    %v1462 = vpack.c.bf16 %v1459, %v1458
    %v1463 = vld [vmem:[%s8] sm:$0xf]
    %v1464 = vld [vmem:[%s8 + $0x4] sm:$0xf]
    %v1465 = vld [vmem:[%s8 + $0x8] sm:$0xf]
    %v1466 = vld [vmem:[%s8 + $0xc] sm:$0xf]
    %v1471 = vunpack.c.l.b16 %v1463
    %v1472 = vunpack.c.l.b16 %v1464
    %v1473 = vunpack.c.l.b16 %v1465
    %v1474 = vunpack.c.l.b16 %v1466
    %v1475 = vpack.c.b16 %v1472, %v1471
    %v1476 = vpack.c.b16 %v1474, %v1473
    %v1480 = vsel %vm187, %v1460, 0
    %v1483 = vsel %vm187, %v1461, 0
    %v1486 = vsel %vm187, %v1462, 0
    %1488 = vmatprep.subr.bf16.mxu0 0
    %1489 = vmatpush1.bf16.msra.mxu0 0
    %1490 = vmatprep.subr.bf16.mxu0 0
    %1491 = vmatpush1.bf16.msra.mxu0 0
    %1492 = vmatprep.subr.bf16.mxu0 0
    %1493 = vmatpush1.bf16.msra.mxu0 0
    %1494 = vmatprep.subr.bf16.mxu0 0
    %1495 = vmatpush1.bf16.msra.mxu0 0
    %1496 = vmatprep.subr.bf16.mxu0 0
    %1497 = vmatpush1.bf16.msra.mxu0 0
    %1498 = vmatprep.subr.bf16.mxu0 0
    %1499 = vmatpush1.bf16.msra.mxu0 0
    %1500 = vmatprep.subr.bf16.mxu0 0
    %1501 = vmatpush1.bf16.msra.mxu0 %v1476
    %1502 = vmatprep.subr.bf16.mxu0 0
    %1503 = vmatpush1.bf16.msra.mxu0 %v1475
    %1504 = vmatprep.subr.bf16.mxu0 0
    %1505 = vmatpush2.bf16.msra.mxu0 0
    %1506 = vmatprep.subr.bf16.mxu0 0
    %1507 = vmatpush2.bf16.msra.mxu0 0
    %1508 = vmatprep.subr.bf16.mxu0 0
    %1509 = vmatpush2.bf16.msra.mxu0 0
    %1510 = vmatprep.subr.bf16.mxu0 0
    %1511 = vmatpush2.bf16.msra.mxu0 0
    %1512 = vmatprep.subr.bf16.mxu0 0
    %1513 = vmatpush2.bf16.msra.mxu0 0
    %1514 = vmatprep.subr.bf16.mxu0 0
    %1515 = vmatpush2.bf16.msra.mxu0 0
    %1516 = vmatprep.subr.bf16.mxu0 0
    %1517 = vmatpush2.bf16.msra.mxu0 0
    %1518 = vmatprep.subr.bf16.mxu0 0
    %1519 = vmatpush2.bf16.msra.mxu0 0
    %1520 = vmatprep.mubr.bf16.mxu0 0
    %1521 = vmatmul.mubr.bf16.gmra.mxu0 %v1480
    %v1522 = vpop.f32.mrf.mxu0
    %v1523 = vadd.f32 0.0, %v1522
    %v1524 = vpop.f32.mrf.mxu0
    %v1525 = vpop.f32.mrf.mxu0
    %v1526 = vadd.f32 0.0, %v1525
    %v1527 = vpop.f32.mrf.mxu0
    %1528 = vmatprep.mubr.bf16.mxu0 0
    %1529 = vmatmul.mubr.bf16.gmra.mxu0 %v1483
    %v1530 = vpop.f32.mrf.mxu0
    %v1531 = vadd.f32 0.0, %v1530
    %v1532 = vpop.f32.mrf.mxu0
    %v1533 = vpop.f32.mrf.mxu0
    %v1534 = vadd.f32 0.0, %v1533
    %v1535 = vpop.f32.mrf.mxu0
    %1536 = vmatprep.mubr.bf16.mxu0 0
    %1537 = vmatmul.mubr.bf16.gmra.mxu0 %v1486
    %v1538 = vpop.f32.mrf.mxu0
    %v1539 = vadd.f32 0.0, %v1538
    %v1540 = vpop.f32.mrf.mxu0
    %v1541 = vpop.f32.mrf.mxu0
    %v1542 = vadd.f32 0.0, %v1541
    %v1543 = vpop.f32.mrf.mxu0
    %1544 = vdwg.mxu0
    %v1545 = vadd.f32 %v157, %v1523
    %v1546 = vadd.f32 %v160, %v1526
    %v1547 = vadd.f32 %v165, %v1531
    %v1548 = vadd.f32 %v168, %v1534
    %v1549 = vadd.f32 %v173, %v1539
    %v1550 = vadd.f32 %v176, %v1542
    %v1551 = vld [vmem:[%s9] sm:$0x1]
    %v1553 = vlaneseq
    %v1554 = vshrl.u32 %v1553, 7
    %v1555 = vsub.s32 0, %v1554
    %v1556 = vrot.slane %v1551, %v1555
    %v1558 = vadd.f32 %v1545, %v1556
    %v1559 = vadd.f32 %v1546, %v1556
    %v1560 = vadd.f32 %v1547, %v1556
    %v1561 = vadd.f32 %v1548, %v1556
    %v1562 = vadd.f32 %v1549, %v1556
    %v1563 = vadd.f32 %v1550, %v1556
    %v1564 = vld [vmem:[%s10] sm:$0x1]
    %v1565 = vld [vmem:[%s11] sm:$0x1]
    %v1566 = vsel %vm187, %v1558, 0.0
    %1567 = vadd.xlane.f32.xlu0 %v1566
    %v1568 = vpop.xlane.xlu0 %1567
    %v1569 = vsel %vm187, %v1559, 0.0
    %1570 = vadd.xlane.f32.xlu0 %v1569
    %v1571 = vpop.xlane.xlu0 %1570
    %v1572 = vsel %vm187, %v1560, 0.0
    %1573 = vadd.xlane.f32.xlu0 %v1572
    %v1574 = vpop.xlane.xlu0 %1573
    %v1575 = vsel %vm187, %v1561, 0.0
    %1576 = vadd.xlane.f32.xlu0 %v1575
    %v1577 = vpop.xlane.xlu0 %1576
    %v1578 = vsel %vm187, %v1562, 0.0
    %1579 = vadd.xlane.f32.xlu0 %v1578
    %v1580 = vpop.xlane.xlu0 %1579
    %v1581 = vsel %vm187, %v1563, 0.0
    %1582 = vadd.xlane.f32.xlu0 %v1581
    %v1583 = vpop.xlane.xlu0 %1582
    %v1584 = vmul.f32 %v1568, %v206
    %v1585 = vmul.f32 %v1571, %v206
    %v1586 = vmul.f32 %v1574, %v206
    %v1587 = vmul.f32 %v1577, %v206
    %v1588 = vmul.f32 %v1580, %v206
    %v1589 = vmul.f32 %v1583, %v206
    %v1590 = vsub.f32 %v1558, %v1584
    %v1591 = vsub.f32 %v1559, %v1585
    %v1592 = vsub.f32 %v1560, %v1586
    %v1593 = vsub.f32 %v1561, %v1587
    %v1594 = vsub.f32 %v1562, %v1588
    %v1595 = vsub.f32 %v1563, %v1589
    %v1596 = vmul.f32 %v1590, %v1590
    %v1597 = vmul.f32 %v1591, %v1591
    %v1598 = vmul.f32 %v1592, %v1592
    %v1599 = vmul.f32 %v1593, %v1593
    %v1600 = vmul.f32 %v1594, %v1594
    %v1601 = vmul.f32 %v1595, %v1595
    %v1602 = vsel %vm187, %v1596, 0.0
    %1603 = vadd.xlane.f32.xlu0 %v1602
    %v1604 = vpop.xlane.xlu0 %1603
    %v1605 = vsel %vm187, %v1597, 0.0
    %1606 = vadd.xlane.f32.xlu0 %v1605
    %v1607 = vpop.xlane.xlu0 %1606
    %v1608 = vsel %vm187, %v1598, 0.0
    %1609 = vadd.xlane.f32.xlu0 %v1608
    %v1610 = vpop.xlane.xlu0 %1609
    %v1611 = vsel %vm187, %v1599, 0.0
    %1612 = vadd.xlane.f32.xlu0 %v1611
    %v1613 = vpop.xlane.xlu0 %1612
    %v1614 = vsel %vm187, %v1600, 0.0
    %1615 = vadd.xlane.f32.xlu0 %v1614
    %v1616 = vpop.xlane.xlu0 %1615
    %v1617 = vsel %vm187, %v1601, 0.0
    %1618 = vadd.xlane.f32.xlu0 %v1617
    %v1619 = vpop.xlane.xlu0 %1618
    %v1620 = vmul.f32 %v1604, %v206
    %v1621 = vmul.f32 %v1607, %v206
    %v1622 = vmul.f32 %v1610, %v206
    %v1623 = vmul.f32 %v1613, %v206
    %v1624 = vmul.f32 %v1616, %v206
    %v1625 = vmul.f32 %v1619, %v206
    %v1626 = vadd.f32 %v1620, 1e-06
    %v1627 = vadd.f32 %v1621, 1e-06
    %v1628 = vadd.f32 %v1622, 1e-06
    %v1629 = vadd.f32 %v1623, 1e-06
    %v1630 = vadd.f32 %v1624, 1e-06
    %v1631 = vadd.f32 %v1625, 1e-06
    %v1632 = vrsqrt.pop %v1626
    %v1633 = vrsqrt.pop %v1627
    %v1634 = vrsqrt.pop %v1628
    %v1635 = vrsqrt.pop %v1629
    %v1636 = vrsqrt.pop %v1630
    %v1637 = vrsqrt.pop %v1631
    %v1638 = vmul.f32 %v1590, %v1632
    %v1639 = vmul.f32 %v1591, %v1633
    %v1640 = vmul.f32 %v1592, %v1634
    %v1641 = vmul.f32 %v1593, %v1635
    %v1642 = vmul.f32 %v1594, %v1636
    %v1643 = vmul.f32 %v1595, %v1637
    %v1645 = vlaneseq
    %v1646 = vshrl.u32 %v1645, 7
    %v1647 = vsub.s32 0, %v1646
    %v1648 = vrot.slane %v1564, %v1647
    %v1650 = vmul.f32 %v1638, %v1648
    %v1651 = vmul.f32 %v1639, %v1648
    %v1652 = vmul.f32 %v1640, %v1648
    %v1653 = vmul.f32 %v1641, %v1648
    %v1654 = vmul.f32 %v1642, %v1648
    %v1655 = vmul.f32 %v1643, %v1648
    %v1657 = vlaneseq
    %v1658 = vshrl.u32 %v1657, 7
    %v1659 = vsub.s32 0, %v1658
    %v1660 = vrot.slane %v1565, %v1659
    %v1662 = vadd.f32 %v1650, %v1660
    %v1663 = vadd.f32 %v1651, %v1660
    %v1664 = vadd.f32 %v1652, %v1660
    %v1665 = vadd.f32 %v1653, %v1660
    %v1666 = vadd.f32 %v1654, %v1660
    %v1667 = vadd.f32 %v1655, %v1660
    %v1668 = vpack.c.bf16 %v1663, %v1662
    %v1669 = vpack.c.bf16 %v1665, %v1664
    %v1670 = vpack.c.bf16 %v1667, %v1666
    %v1671 = vld [vmem:[%s12] sm:$0xf]
    %v1672 = vld [vmem:[%s12 + $0x4] sm:$0xf]
    %v1673 = vld [vmem:[%s12 + $0x8] sm:$0xf]
    %v1674 = vld [vmem:[%s12 + $0xc] sm:$0xf]
    %v1675 = vld [vmem:[%s13] sm:$0x1]
    %v1677 = vlaneseq
    %v1678 = vshrl.u32 %v1677, 7
    %v1679 = vsub.s32 0, %v1678
    %v1680 = vrot.slane %v1675, %v1679
    %v1686 = vunpack.c.l.b16 %v1671
    %v1687 = vunpack.c.l.b16 %v1672
    %v1688 = vunpack.c.l.b16 %v1673
    %v1689 = vunpack.c.l.b16 %v1674
    %v1690 = vpack.c.b16 %v1687, %v1686
    %v1691 = vpack.c.b16 %v1689, %v1688
    %v1695 = vsel %vm187, %v1668, 0
    %v1698 = vsel %vm187, %v1669, 0
    %v1701 = vsel %vm187, %v1670, 0
    %1703 = vmatprep.subr.bf16.mxu0 0
    %1704 = vmatpush1.bf16.msra.mxu0 0
    %1705 = vmatprep.subr.bf16.mxu0 0
    %1706 = vmatpush1.bf16.msra.mxu0 0
    %1707 = vmatprep.subr.bf16.mxu0 0
    %1708 = vmatpush1.bf16.msra.mxu0 0
    %1709 = vmatprep.subr.bf16.mxu0 0
    %1710 = vmatpush1.bf16.msra.mxu0 0
    %1711 = vmatprep.subr.bf16.mxu0 0
    %1712 = vmatpush1.bf16.msra.mxu0 0
    %1713 = vmatprep.subr.bf16.mxu0 0
    %1714 = vmatpush1.bf16.msra.mxu0 0
    %1715 = vmatprep.subr.bf16.mxu0 0
    %1716 = vmatpush1.bf16.msra.mxu0 %v1691
    %1717 = vmatprep.subr.bf16.mxu0 0
    %1718 = vmatpush1.bf16.msra.mxu0 %v1690
    %1719 = vmatprep.subr.bf16.mxu0 0
    %1720 = vmatpush2.bf16.msra.mxu0 0
    %1721 = vmatprep.subr.bf16.mxu0 0
    %1722 = vmatpush2.bf16.msra.mxu0 0
    %1723 = vmatprep.subr.bf16.mxu0 0
    %1724 = vmatpush2.bf16.msra.mxu0 0
    %1725 = vmatprep.subr.bf16.mxu0 0
    %1726 = vmatpush2.bf16.msra.mxu0 0
    %1727 = vmatprep.subr.bf16.mxu0 0
    %1728 = vmatpush2.bf16.msra.mxu0 0
    %1729 = vmatprep.subr.bf16.mxu0 0
    %1730 = vmatpush2.bf16.msra.mxu0 0
    %1731 = vmatprep.subr.bf16.mxu0 0
    %1732 = vmatpush2.bf16.msra.mxu0 0
    %1733 = vmatprep.subr.bf16.mxu0 0
    %1734 = vmatpush2.bf16.msra.mxu0 0
    %1735 = vmatprep.mubr.bf16.mxu0 0
    %1736 = vmatmul.mubr.bf16.gmra.mxu0 %v1695
    %v1737 = vpop.f32.mrf.mxu0
    %v1738 = vadd.f32 %v1680, %v1737
    %v1739 = vpop.f32.mrf.mxu0
    %v1740 = vpop.f32.mrf.mxu0
    %v1741 = vadd.f32 %v1680, %v1740
    %v1742 = vpop.f32.mrf.mxu0
    %1743 = vmatprep.mubr.bf16.mxu0 0
    %1744 = vmatmul.mubr.bf16.gmra.mxu0 %v1698
    %v1745 = vpop.f32.mrf.mxu0
    %v1746 = vadd.f32 %v1680, %v1745
    %v1747 = vpop.f32.mrf.mxu0
    %v1748 = vpop.f32.mrf.mxu0
    %v1749 = vadd.f32 %v1680, %v1748
    %v1750 = vpop.f32.mrf.mxu0
    %1751 = vmatprep.mubr.bf16.mxu0 0
    %1752 = vmatmul.mubr.bf16.gmra.mxu0 %v1701
    %v1753 = vpop.f32.mrf.mxu0
    %v1754 = vadd.f32 %v1680, %v1753
    %v1755 = vpop.f32.mrf.mxu0
    %v1756 = vpop.f32.mrf.mxu0
    %v1757 = vadd.f32 %v1680, %v1756
    %v1758 = vpop.f32.mrf.mxu0
    %1759 = vdwg.mxu0
    %v1760 = vmul.f32 %v1738, 0.5
    %v1761 = vmul.f32 %v1741, 0.5
    %v1762 = vmul.f32 %v1746, 0.5
    %v1763 = vmul.f32 %v1749, 0.5
    %v1764 = vmul.f32 %v1754, 0.5
    %v1765 = vmul.f32 %v1757, 0.5
    %v1766 = vmul.f32 %v1738, 0.70710677
    %v1767 = vmul.f32 %v1741, 0.70710677
    %v1768 = vmul.f32 %v1746, 0.70710677
    %v1769 = vmul.f32 %v1749, 0.70710677
    %v1770 = vmul.f32 %v1754, 0.70710677
    %v1771 = vmul.f32 %v1757, 0.70710677
    %v1772 = verf.f32.pop %v1766
    %v1773 = verf.f32.pop %v1767
    %v1774 = verf.f32.pop %v1768
    %v1775 = verf.f32.pop %v1769
    %v1776 = verf.f32.pop %v1770
    %v1777 = verf.f32.pop %v1771
    %v1778 = vadd.f32 %v1772, 1.0
    %v1779 = vadd.f32 %v1773, 1.0
    %v1780 = vadd.f32 %v1774, 1.0
    %v1781 = vadd.f32 %v1775, 1.0
    %v1782 = vadd.f32 %v1776, 1.0
    %v1783 = vadd.f32 %v1777, 1.0
    %v1784 = vmul.f32 %v1760, %v1778
    %v1785 = vmul.f32 %v1761, %v1779
    %v1786 = vmul.f32 %v1762, %v1780
    %v1787 = vmul.f32 %v1763, %v1781
    %v1788 = vmul.f32 %v1764, %v1782
    %v1789 = vmul.f32 %v1765, %v1783
    %v1790 = vpack.c.bf16 %v1785, %v1784
    %v1791 = vpack.c.bf16 %v1787, %v1786
    %v1792 = vpack.c.bf16 %v1789, %v1788
    %v1793 = vld [vmem:[%s14] sm:$0xf]
    %v1794 = vld [vmem:[%s14 + $0x4] sm:$0xf]
    %v1795 = vld [vmem:[%s14 + $0x8] sm:$0xf]
    %v1796 = vld [vmem:[%s14 + $0xc] sm:$0xf]
    %v1797 = vld [vmem:[%s14 + $0x10] sm:$0xf]
    %v1798 = vld [vmem:[%s14 + $0x14] sm:$0xf]
    %v1799 = vld [vmem:[%s14 + $0x18] sm:$0xf]
    %v1800 = vld [vmem:[%s14 + $0x1c] sm:$0xf]
    %v1801 = vld [vmem:[%s15] sm:$0x1]
    %v1803 = vlaneseq
    %v1804 = vshrl.u32 %v1803, 7
    %v1805 = vsub.s32 0, %v1804
    %v1806 = vrot.slane %v1801, %v1805
    %v1816 = vunpack.c.l.b16 %v1793
    %v1817 = vunpack.c.l.b16 %v1794
    %v1818 = vunpack.c.l.b16 %v1795
    %v1819 = vunpack.c.l.b16 %v1796
    %v1820 = vunpack.c.l.b16 %v1797
    %v1821 = vunpack.c.l.b16 %v1798
    %v1822 = vunpack.c.l.b16 %v1799
    %v1823 = vunpack.c.l.b16 %v1800
    %v1824 = vpack.c.b16 %v1817, %v1816
    %v1825 = vpack.c.b16 %v1819, %v1818
    %v1826 = vpack.c.b16 %v1821, %v1820
    %v1827 = vpack.c.b16 %v1823, %v1822
    %vm1832 = vcmask 523264
    %v1834 = vsel %vm1832, %v1790, 0
    %v1837 = vsel %vm1832, %v1791, 0
    %v1840 = vsel %vm1832, %v1792, 0
    %1842 = vmatprep.subr.bf16.mxu0 0
    %1843 = vmatpush1.bf16.msra.mxu0 0
    %1844 = vmatprep.subr.bf16.mxu0 0
    %1845 = vmatpush1.bf16.msra.mxu0 0
    %1846 = vmatprep.subr.bf16.mxu0 0
    %1847 = vmatpush1.bf16.msra.mxu0 0
    %1848 = vmatprep.subr.bf16.mxu0 0
    %1849 = vmatpush1.bf16.msra.mxu0 0
    %1850 = vmatprep.subr.bf16.mxu0 0
    %1851 = vmatpush1.bf16.msra.mxu0 %v1827
    %1852 = vmatprep.subr.bf16.mxu0 0
    %1853 = vmatpush1.bf16.msra.mxu0 %v1826
    %1854 = vmatprep.subr.bf16.mxu0 0
    %1855 = vmatpush1.bf16.msra.mxu0 %v1825
    %1856 = vmatprep.subr.bf16.mxu0 0
    %1857 = vmatpush1.bf16.msra.mxu0 %v1824
    %1858 = vmatprep.subr.bf16.mxu0 0
    %1859 = vmatpush2.bf16.msra.mxu0 0
    %1860 = vmatprep.subr.bf16.mxu0 0
    %1861 = vmatpush2.bf16.msra.mxu0 0
    %1862 = vmatprep.subr.bf16.mxu0 0
    %1863 = vmatpush2.bf16.msra.mxu0 0
    %1864 = vmatprep.subr.bf16.mxu0 0
    %1865 = vmatpush2.bf16.msra.mxu0 0
    %1866 = vmatprep.subr.bf16.mxu0 0
    %1867 = vmatpush2.bf16.msra.mxu0 0
    %1868 = vmatprep.subr.bf16.mxu0 0
    %1869 = vmatpush2.bf16.msra.mxu0 0
    %1870 = vmatprep.subr.bf16.mxu0 0
    %1871 = vmatpush2.bf16.msra.mxu0 0
    %1872 = vmatprep.subr.bf16.mxu0 0
    %1873 = vmatpush2.bf16.msra.mxu0 0
    %1874 = vmatprep.mubr.bf16.mxu0 0
    %1875 = vmatmul.mubr.bf16.gmra.mxu0 %v1834
    %v1876 = vpop.f32.mrf.mxu0
    %v1877 = vadd.f32 %v1806, %v1876
    %v1878 = vpop.f32.mrf.mxu0
    %v1879 = vpop.f32.mrf.mxu0
    %v1880 = vadd.f32 %v1806, %v1879
    %v1881 = vpop.f32.mrf.mxu0
    %1882 = vmatprep.mubr.bf16.mxu0 0
    %1883 = vmatmul.mubr.bf16.gmra.mxu0 %v1837
    %v1884 = vpop.f32.mrf.mxu0
    %v1885 = vadd.f32 %v1806, %v1884
    %v1886 = vpop.f32.mrf.mxu0
    %v1887 = vpop.f32.mrf.mxu0
    %v1888 = vadd.f32 %v1806, %v1887
    %v1889 = vpop.f32.mrf.mxu0
    %1890 = vmatprep.mubr.bf16.mxu0 0
    %1891 = vmatmul.mubr.bf16.gmra.mxu0 %v1840
    %v1892 = vpop.f32.mrf.mxu0
    %v1893 = vadd.f32 %v1806, %v1892
    %v1894 = vpop.f32.mrf.mxu0
    %v1895 = vpop.f32.mrf.mxu0
    %v1896 = vadd.f32 %v1806, %v1895
    %v1897 = vpop.f32.mrf.mxu0
    %1898 = vdwg.mxu0
    %v1899 = vadd.f32 %v1558, %v1877
    %v1900 = vadd.f32 %v1559, %v1880
    %v1901 = vadd.f32 %v1560, %v1885
    %v1902 = vadd.f32 %v1561, %v1888
    %v1903 = vadd.f32 %v1562, %v1893
    %v1904 = vadd.f32 %v1563, %v1896
    %s1905 = scalar_lea.vmem %s4, 1
    %v1906 = vld [vmem:[%s1905] sm:$0x1]
    %s1907 = scalar_lea.vmem %s5, 1
    %v1908 = vld [vmem:[%s1907] sm:$0x1]
    %v1909 = vsel %vm187, %v1899, 0.0
    %1910 = vadd.xlane.f32.xlu0 %v1909
    %v1911 = vpop.xlane.xlu0 %1910
    %v1912 = vsel %vm187, %v1900, 0.0
    %1913 = vadd.xlane.f32.xlu0 %v1912
    %v1914 = vpop.xlane.xlu0 %1913
    %v1915 = vsel %vm187, %v1901, 0.0
    %1916 = vadd.xlane.f32.xlu0 %v1915
    %v1917 = vpop.xlane.xlu0 %1916
    %v1918 = vsel %vm187, %v1902, 0.0
    %1919 = vadd.xlane.f32.xlu0 %v1918
    %v1920 = vpop.xlane.xlu0 %1919
    %v1921 = vsel %vm187, %v1903, 0.0
    %1922 = vadd.xlane.f32.xlu0 %v1921
    %v1923 = vpop.xlane.xlu0 %1922
    %v1924 = vsel %vm187, %v1904, 0.0
    %1925 = vadd.xlane.f32.xlu0 %v1924
    %v1926 = vpop.xlane.xlu0 %1925
    %v1927 = vmul.f32 %v1911, %v206
    %v1928 = vmul.f32 %v1914, %v206
    %v1929 = vmul.f32 %v1917, %v206
    %v1930 = vmul.f32 %v1920, %v206
    %v1931 = vmul.f32 %v1923, %v206
    %v1932 = vmul.f32 %v1926, %v206
    %v1933 = vsub.f32 %v1899, %v1927
    %v1934 = vsub.f32 %v1900, %v1928
    %v1935 = vsub.f32 %v1901, %v1929
    %v1936 = vsub.f32 %v1902, %v1930
    %v1937 = vsub.f32 %v1903, %v1931
    %v1938 = vsub.f32 %v1904, %v1932
    %v1939 = vmul.f32 %v1933, %v1933
    %v1940 = vmul.f32 %v1934, %v1934
    %v1941 = vmul.f32 %v1935, %v1935
    %v1942 = vmul.f32 %v1936, %v1936
    %v1943 = vmul.f32 %v1937, %v1937
    %v1944 = vmul.f32 %v1938, %v1938
    %v1945 = vsel %vm187, %v1939, 0.0
    %1946 = vadd.xlane.f32.xlu0 %v1945
    %v1947 = vpop.xlane.xlu0 %1946
    %v1948 = vsel %vm187, %v1940, 0.0
    %1949 = vadd.xlane.f32.xlu0 %v1948
    %v1950 = vpop.xlane.xlu0 %1949
    %v1951 = vsel %vm187, %v1941, 0.0
    %1952 = vadd.xlane.f32.xlu0 %v1951
    %v1953 = vpop.xlane.xlu0 %1952
    %v1954 = vsel %vm187, %v1942, 0.0
    %1955 = vadd.xlane.f32.xlu0 %v1954
    %v1956 = vpop.xlane.xlu0 %1955
    %v1957 = vsel %vm187, %v1943, 0.0
    %1958 = vadd.xlane.f32.xlu0 %v1957
    %v1959 = vpop.xlane.xlu0 %1958
    %v1960 = vsel %vm187, %v1944, 0.0
    %1961 = vadd.xlane.f32.xlu0 %v1960
    %v1962 = vpop.xlane.xlu0 %1961
    %v1963 = vmul.f32 %v1947, %v206
    %v1964 = vmul.f32 %v1950, %v206
    %v1965 = vmul.f32 %v1953, %v206
    %v1966 = vmul.f32 %v1956, %v206
    %v1967 = vmul.f32 %v1959, %v206
    %v1968 = vmul.f32 %v1962, %v206
    %v1969 = vadd.f32 %v1963, 1e-06
    %v1970 = vadd.f32 %v1964, 1e-06
    %v1971 = vadd.f32 %v1965, 1e-06
    %v1972 = vadd.f32 %v1966, 1e-06
    %v1973 = vadd.f32 %v1967, 1e-06
    %v1974 = vadd.f32 %v1968, 1e-06
    %v1975 = vrsqrt.pop %v1969
    %v1976 = vrsqrt.pop %v1970
    %v1977 = vrsqrt.pop %v1971
    %v1978 = vrsqrt.pop %v1972
    %v1979 = vrsqrt.pop %v1973
    %v1980 = vrsqrt.pop %v1974
    %v1981 = vmul.f32 %v1933, %v1975
    %v1982 = vmul.f32 %v1934, %v1976
    %v1983 = vmul.f32 %v1935, %v1977
    %v1984 = vmul.f32 %v1936, %v1978
    %v1985 = vmul.f32 %v1937, %v1979
    %v1986 = vmul.f32 %v1938, %v1980
    %v1988 = vlaneseq
    %v1989 = vshrl.u32 %v1988, 7
    %v1990 = vsub.s32 0, %v1989
    %v1991 = vrot.slane %v1906, %v1990
    %v1993 = vmul.f32 %v1981, %v1991
    %v1994 = vmul.f32 %v1982, %v1991
    %v1995 = vmul.f32 %v1983, %v1991
    %v1996 = vmul.f32 %v1984, %v1991
    %v1997 = vmul.f32 %v1985, %v1991
    %v1998 = vmul.f32 %v1986, %v1991
    %v2000 = vlaneseq
    %v2001 = vshrl.u32 %v2000, 7
    %v2002 = vsub.s32 0, %v2001
    %v2003 = vrot.slane %v1908, %v2002
    %v2005 = vadd.f32 %v1993, %v2003
    %v2006 = vadd.f32 %v1994, %v2003
    %v2007 = vadd.f32 %v1995, %v2003
    %v2008 = vadd.f32 %v1996, %v2003
    %v2009 = vadd.f32 %v1997, %v2003
    %v2010 = vadd.f32 %v1998, %v2003
    %v2011 = vpack.c.bf16 %v2006, %v2005
    %v2012 = vpack.c.bf16 %v2008, %v2007
    %v2013 = vpack.c.bf16 %v2010, %v2009
    %s2014 = scalar_lea.vmem %s6, 16
    %v2015 = vld [vmem:[%s2014] sm:$0xf]
    %v2016 = vld [vmem:[%s2014 + $0x4] sm:$0xf]
    %v2017 = vld [vmem:[%s2014 + $0x8] sm:$0xf]
    %v2018 = vld [vmem:[%s2014 + $0xc] sm:$0xf]
    %s2019 = scalar_lea.vmem %s7, 1
    %v2020 = vld [vmem:[%s2019] sm:$0x1]
    %v2022 = vlaneseq
    %v2023 = vshrl.u32 %v2022, 7
    %v2024 = vsub.s32 0, %v2023
    %v2025 = vrot.slane %v2020, %v2024
    %v2031 = vunpack.c.l.b16 %v2015
    %v2032 = vunpack.c.l.b16 %v2016
    %v2033 = vunpack.c.l.b16 %v2017
    %v2034 = vunpack.c.l.b16 %v2018
    %v2035 = vpack.c.b16 %v2032, %v2031
    %v2036 = vpack.c.b16 %v2034, %v2033
    %v2040 = vsel %vm187, %v2011, 0
    %v2043 = vsel %vm187, %v2012, 0
    %v2046 = vsel %vm187, %v2013, 0
    %2048 = vmatprep.subr.bf16.mxu0 0
    %2049 = vmatpush1.bf16.msra.mxu0 0
    %2050 = vmatprep.subr.bf16.mxu0 0
    %2051 = vmatpush1.bf16.msra.mxu0 0
    %2052 = vmatprep.subr.bf16.mxu0 0
    %2053 = vmatpush1.bf16.msra.mxu0 0
    %2054 = vmatprep.subr.bf16.mxu0 0
    %2055 = vmatpush1.bf16.msra.mxu0 0
    %2056 = vmatprep.subr.bf16.mxu0 0
    %2057 = vmatpush1.bf16.msra.mxu0 0
    %2058 = vmatprep.subr.bf16.mxu0 0
    %2059 = vmatpush1.bf16.msra.mxu0 0
    %2060 = vmatprep.subr.bf16.mxu0 0
    %2061 = vmatpush1.bf16.msra.mxu0 %v2036
    %2062 = vmatprep.subr.bf16.mxu0 0
    %2063 = vmatpush1.bf16.msra.mxu0 %v2035
    %2064 = vmatprep.subr.bf16.mxu0 0
    %2065 = vmatpush2.bf16.msra.mxu0 0
    %2066 = vmatprep.subr.bf16.mxu0 0
    %2067 = vmatpush2.bf16.msra.mxu0 0
    %2068 = vmatprep.subr.bf16.mxu0 0
    %2069 = vmatpush2.bf16.msra.mxu0 0
    %2070 = vmatprep.subr.bf16.mxu0 0
    %2071 = vmatpush2.bf16.msra.mxu0 0
    %2072 = vmatprep.subr.bf16.mxu0 0
    %2073 = vmatpush2.bf16.msra.mxu0 0
    %2074 = vmatprep.subr.bf16.mxu0 0
    %2075 = vmatpush2.bf16.msra.mxu0 0
    %2076 = vmatprep.subr.bf16.mxu0 0
    %2077 = vmatpush2.bf16.msra.mxu0 0
    %2078 = vmatprep.subr.bf16.mxu0 0
    %2079 = vmatpush2.bf16.msra.mxu0 0
    %2080 = vmatprep.mubr.bf16.mxu0 0
    %2081 = vmatmul.mubr.bf16.gmra.mxu0 %v2040
    %v2082 = vpop.f32.mrf.mxu0
    %v2083 = vadd.f32 %v2025, %v2082
    %v2084 = vpop.f32.mrf.mxu0
    %v2085 = vpop.f32.mrf.mxu0
    %v2086 = vadd.f32 %v2025, %v2085
    %v2087 = vpop.f32.mrf.mxu0
    %2088 = vmatprep.mubr.bf16.mxu0 0
    %2089 = vmatmul.mubr.bf16.gmra.mxu0 %v2043
    %v2090 = vpop.f32.mrf.mxu0
    %v2091 = vadd.f32 %v2025, %v2090
    %v2092 = vpop.f32.mrf.mxu0
    %v2093 = vpop.f32.mrf.mxu0
    %v2094 = vadd.f32 %v2025, %v2093
    %v2095 = vpop.f32.mrf.mxu0
    %2096 = vmatprep.mubr.bf16.mxu0 0
    %2097 = vmatmul.mubr.bf16.gmra.mxu0 %v2046
    %v2098 = vpop.f32.mrf.mxu0
    %v2099 = vadd.f32 %v2025, %v2098
    %v2100 = vpop.f32.mrf.mxu0
    %v2101 = vpop.f32.mrf.mxu0
    %v2102 = vadd.f32 %v2025, %v2101
    %v2103 = vpop.f32.mrf.mxu0
    %2104 = vdwg.mxu0
    %2111 = vrot.lane.b32.xlu0 %v2083, 120
    %v2112 = vpop.permute.xlu0 %2111
    %2113 = vrot.lane.b32.xlu0 %v2086, 120
    %v2114 = vpop.permute.xlu0 %2113
    %2115 = vrot.lane.b32.xlu0 %v2091, 120
    %v2116 = vpop.permute.xlu0 %2115
    %2117 = vrot.lane.b32.xlu0 %v2094, 120
    %v2118 = vpop.permute.xlu0 %2117
    %2119 = vrot.lane.b32.xlu0 %v2099, 120
    %v2120 = vpop.permute.xlu0 %2119
    %2121 = vrot.lane.b32.xlu0 %v2102, 120
    %v2122 = vpop.permute.xlu0 %2121
    %2129 = vrot.lane.b32.xlu0 %v2083, 112
    %v2130 = vpop.permute.xlu0 %2129
    %2131 = vrot.lane.b32.xlu0 %v2086, 112
    %v2132 = vpop.permute.xlu0 %2131
    %2133 = vrot.lane.b32.xlu0 %v2091, 112
    %v2134 = vpop.permute.xlu0 %2133
    %2135 = vrot.lane.b32.xlu0 %v2094, 112
    %v2136 = vpop.permute.xlu0 %2135
    %2137 = vrot.lane.b32.xlu0 %v2099, 112
    %v2138 = vpop.permute.xlu0 %2137
    %2139 = vrot.lane.b32.xlu0 %v2102, 112
    %v2140 = vpop.permute.xlu0 %2139
    %2147 = vrot.lane.b32.xlu0 %v2083, 104
    %v2148 = vpop.permute.xlu0 %2147
    %2149 = vrot.lane.b32.xlu0 %v2086, 104
    %v2150 = vpop.permute.xlu0 %2149
    %2151 = vrot.lane.b32.xlu0 %v2091, 104
    %v2152 = vpop.permute.xlu0 %2151
    %2153 = vrot.lane.b32.xlu0 %v2094, 104
    %v2154 = vpop.permute.xlu0 %2153
    %2155 = vrot.lane.b32.xlu0 %v2099, 104
    %v2156 = vpop.permute.xlu0 %2155
    %2157 = vrot.lane.b32.xlu0 %v2102, 104
    %v2158 = vpop.permute.xlu0 %2157
    %v2165 = vpack.c.bf16 %v2086, %v2083
    %v2166 = vpack.c.bf16 %v2094, %v2091
    %v2167 = vpack.c.bf16 %v2102, %v2099
    %v2168 = vpack.c.bf16 %v2114, %v2112
    %v2169 = vpack.c.bf16 %v2118, %v2116
    %v2170 = vpack.c.bf16 %v2122, %v2120
    %v2171 = vpack.c.bf16 %v2132, %v2130
    %v2172 = vpack.c.bf16 %v2136, %v2134
    %v2173 = vpack.c.bf16 %v2140, %v2138
    %v2174 = vpack.c.bf16 %v2150, %v2148
    %v2175 = vpack.c.bf16 %v2154, %v2152
    %v2176 = vpack.c.bf16 %v2158, %v2156
    %2180 = vrot.lane.b32.xlu0 %v2165, 96
    %v2181 = vpop.permute.xlu0 %2180
    %2182 = vrot.lane.b32.xlu0 %v2166, 96
    %v2183 = vpop.permute.xlu0 %2182
    %2184 = vrot.lane.b32.xlu0 %v2167, 96
    %v2185 = vpop.permute.xlu0 %2184
    %v2187 = vsel %vm464, %v2165, 0
    %v2190 = vsel %vm464, %v2166, 0
    %v2193 = vsel %vm464, %v2167, 0
    %v2196 = vsel %vm464, %v2181, 0
    %v2199 = vsel %vm464, %v2183, 0
    %v2202 = vsel %vm464, %v2185, 0
    %2204 = vmatprep.subr.bf16.mxu0 0
    %2205 = vmatpush1.bf16.xpose.msra.mxu0 0
    %2206 = vmatprep.subr.bf16.mxu0 0
    %2207 = vmatpush1.bf16.xpose.msra.mxu0 0
    %2208 = vmatprep.subr.bf16.mxu0 0
    %2209 = vmatpush1.bf16.xpose.msra.mxu0 0
    %2210 = vmatprep.subr.bf16.mxu0 0
    %2211 = vmatpush1.bf16.xpose.msra.mxu0 0
    %2212 = vmatprep.subr.bf16.mxu0 0
    %2213 = vmatpush1.bf16.xpose.msra.mxu0 0
    %2214 = vmatprep.subr.bf16.mxu0 0
    %2215 = vmatpush1.bf16.xpose.msra.mxu0 %v2202
    %2216 = vmatprep.subr.bf16.mxu0 0
    %2217 = vmatpush1.bf16.xpose.msra.mxu0 %v2199
    %2218 = vmatprep.subr.bf16.mxu0 0
    %2219 = vmatpush1.bf16.xpose.msra.mxu0 %v2196
    %2220 = vmatprep.subr.bf16.mxu0 0
    %2221 = vmatpush2.bf16.xpose.msra.mxu0 0
    %2222 = vmatprep.subr.bf16.mxu0 0
    %2223 = vmatpush2.bf16.xpose.msra.mxu0 0
    %2224 = vmatprep.subr.bf16.mxu0 0
    %2225 = vmatpush2.bf16.xpose.msra.mxu0 0
    %2226 = vmatprep.subr.bf16.mxu0 0
    %2227 = vmatpush2.bf16.xpose.msra.mxu0 0
    %2228 = vmatprep.subr.bf16.mxu0 0
    %2229 = vmatpush2.bf16.xpose.msra.mxu0 0
    %2230 = vmatprep.subr.bf16.mxu0 0
    %2231 = vmatpush2.bf16.xpose.msra.mxu0 0
    %2232 = vmatprep.subr.bf16.mxu0 0
    %2233 = vmatpush2.bf16.xpose.msra.mxu0 0
    %2234 = vmatprep.subr.bf16.mxu0 0
    %2235 = vmatpush2.bf16.xpose.msra.mxu0 0
    %2236 = vmatprep.mubr.bf16.mxu0 0
    %2237 = vmatmul.mubr.bf16.gmra.mxu0 %v2187
    %v2238 = vpop.f32.mrf.mxu0
    %v2239 = vadd.f32 %v179, %v2238
    %v2240 = vpop.f32.mrf.mxu0
    %v2241 = vpop.f32.mrf.mxu0
    %v2242 = vadd.f32 %v180, %v2241
    %v2243 = vpop.f32.mrf.mxu0
    %2244 = vmatprep.mubr.bf16.mxu0 0
    %2245 = vmatmul.mubr.bf16.gmra.mxu0 %v2190
    %v2246 = vpop.f32.mrf.mxu0
    %v2247 = vadd.f32 %v181, %v2246
    %v2248 = vpop.f32.mrf.mxu0
    %v2249 = vpop.f32.mrf.mxu0
    %v2250 = vadd.f32 %v182, %v2249
    %v2251 = vpop.f32.mrf.mxu0
    %2252 = vmatprep.mubr.bf16.mxu0 0
    %2253 = vmatmul.mubr.bf16.gmra.mxu0 %v2193
    %v2254 = vpop.f32.mrf.mxu0
    %v2255 = vadd.f32 %v183, %v2254
    %v2256 = vpop.f32.mrf.mxu0
    %v2257 = vpop.f32.mrf.mxu0
    %v2258 = vadd.f32 %v184, %v2257
    %v2259 = vpop.f32.mrf.mxu0
    %2260 = vdwg.mxu0
    %2264 = vrot.lane.b32.xlu0 %v2168, 96
    %v2265 = vpop.permute.xlu0 %2264
    %2266 = vrot.lane.b32.xlu0 %v2169, 96
    %v2267 = vpop.permute.xlu0 %2266
    %2268 = vrot.lane.b32.xlu0 %v2170, 96
    %v2269 = vpop.permute.xlu0 %2268
    %v2271 = vsel %vm464, %v2168, 0
    %v2274 = vsel %vm464, %v2169, 0
    %v2277 = vsel %vm464, %v2170, 0
    %v2280 = vsel %vm464, %v2265, 0
    %v2283 = vsel %vm464, %v2267, 0
    %v2286 = vsel %vm464, %v2269, 0
    %2288 = vmatprep.subr.bf16.mxu0 0
    %2289 = vmatpush1.bf16.xpose.msra.mxu0 0
    %2290 = vmatprep.subr.bf16.mxu0 0
    %2291 = vmatpush1.bf16.xpose.msra.mxu0 0
    %2292 = vmatprep.subr.bf16.mxu0 0
    %2293 = vmatpush1.bf16.xpose.msra.mxu0 0
    %2294 = vmatprep.subr.bf16.mxu0 0
    %2295 = vmatpush1.bf16.xpose.msra.mxu0 0
    %2296 = vmatprep.subr.bf16.mxu0 0
    %2297 = vmatpush1.bf16.xpose.msra.mxu0 0
    %2298 = vmatprep.subr.bf16.mxu0 0
    %2299 = vmatpush1.bf16.xpose.msra.mxu0 %v2286
    %2300 = vmatprep.subr.bf16.mxu0 0
    %2301 = vmatpush1.bf16.xpose.msra.mxu0 %v2283
    %2302 = vmatprep.subr.bf16.mxu0 0
    %2303 = vmatpush1.bf16.xpose.msra.mxu0 %v2280
    %2304 = vmatprep.subr.bf16.mxu0 0
    %2305 = vmatpush2.bf16.xpose.msra.mxu0 0
    %2306 = vmatprep.subr.bf16.mxu0 0
    %2307 = vmatpush2.bf16.xpose.msra.mxu0 0
    %2308 = vmatprep.subr.bf16.mxu0 0
    %2309 = vmatpush2.bf16.xpose.msra.mxu0 0
    %2310 = vmatprep.subr.bf16.mxu0 0
    %2311 = vmatpush2.bf16.xpose.msra.mxu0 0
    %2312 = vmatprep.subr.bf16.mxu0 0
    %2313 = vmatpush2.bf16.xpose.msra.mxu0 0
    %2314 = vmatprep.subr.bf16.mxu0 0
    %2315 = vmatpush2.bf16.xpose.msra.mxu0 0
    %2316 = vmatprep.subr.bf16.mxu0 0
    %2317 = vmatpush2.bf16.xpose.msra.mxu0 0
    %2318 = vmatprep.subr.bf16.mxu0 0
    %2319 = vmatpush2.bf16.xpose.msra.mxu0 0
    %2320 = vmatprep.mubr.bf16.mxu0 0
    %2321 = vmatmul.mubr.bf16.gmra.mxu0 %v2271
    %v2322 = vpop.f32.mrf.mxu0
    %v2323 = vadd.f32 %v179, %v2322
    %v2324 = vpop.f32.mrf.mxu0
    %v2325 = vpop.f32.mrf.mxu0
    %v2326 = vadd.f32 %v180, %v2325
    %v2327 = vpop.f32.mrf.mxu0
    %2328 = vmatprep.mubr.bf16.mxu0 0
    %2329 = vmatmul.mubr.bf16.gmra.mxu0 %v2274
    %v2330 = vpop.f32.mrf.mxu0
    %v2331 = vadd.f32 %v181, %v2330
    %v2332 = vpop.f32.mrf.mxu0
    %v2333 = vpop.f32.mrf.mxu0
    %v2334 = vadd.f32 %v182, %v2333
    %v2335 = vpop.f32.mrf.mxu0
    %2336 = vmatprep.mubr.bf16.mxu0 0
    %2337 = vmatmul.mubr.bf16.gmra.mxu0 %v2277
    %v2338 = vpop.f32.mrf.mxu0
    %v2339 = vadd.f32 %v183, %v2338
    %v2340 = vpop.f32.mrf.mxu0
    %v2341 = vpop.f32.mrf.mxu0
    %v2342 = vadd.f32 %v184, %v2341
    %v2343 = vpop.f32.mrf.mxu0
    %2344 = vdwg.mxu0
    %2348 = vrot.lane.b32.xlu0 %v2171, 96
    %v2349 = vpop.permute.xlu0 %2348
    %2350 = vrot.lane.b32.xlu0 %v2172, 96
    %v2351 = vpop.permute.xlu0 %2350
    %2352 = vrot.lane.b32.xlu0 %v2173, 96
    %v2353 = vpop.permute.xlu0 %2352
    %v2355 = vsel %vm464, %v2171, 0
    %v2358 = vsel %vm464, %v2172, 0
    %v2361 = vsel %vm464, %v2173, 0
    %v2364 = vsel %vm464, %v2349, 0
    %v2367 = vsel %vm464, %v2351, 0
    %v2370 = vsel %vm464, %v2353, 0
    %2372 = vmatprep.subr.bf16.mxu0 0
    %2373 = vmatpush1.bf16.xpose.msra.mxu0 0
    %2374 = vmatprep.subr.bf16.mxu0 0
    %2375 = vmatpush1.bf16.xpose.msra.mxu0 0
    %2376 = vmatprep.subr.bf16.mxu0 0
    %2377 = vmatpush1.bf16.xpose.msra.mxu0 0
    %2378 = vmatprep.subr.bf16.mxu0 0
    %2379 = vmatpush1.bf16.xpose.msra.mxu0 0
    %2380 = vmatprep.subr.bf16.mxu0 0
    %2381 = vmatpush1.bf16.xpose.msra.mxu0 0
    %2382 = vmatprep.subr.bf16.mxu0 0
    %2383 = vmatpush1.bf16.xpose.msra.mxu0 %v2370
    %2384 = vmatprep.subr.bf16.mxu0 0
    %2385 = vmatpush1.bf16.xpose.msra.mxu0 %v2367
    %2386 = vmatprep.subr.bf16.mxu0 0
    %2387 = vmatpush1.bf16.xpose.msra.mxu0 %v2364
    %2388 = vmatprep.subr.bf16.mxu0 0
    %2389 = vmatpush2.bf16.xpose.msra.mxu0 0
    %2390 = vmatprep.subr.bf16.mxu0 0
    %2391 = vmatpush2.bf16.xpose.msra.mxu0 0
    %2392 = vmatprep.subr.bf16.mxu0 0
    %2393 = vmatpush2.bf16.xpose.msra.mxu0 0
    %2394 = vmatprep.subr.bf16.mxu0 0
    %2395 = vmatpush2.bf16.xpose.msra.mxu0 0
    %2396 = vmatprep.subr.bf16.mxu0 0
    %2397 = vmatpush2.bf16.xpose.msra.mxu0 0
    %2398 = vmatprep.subr.bf16.mxu0 0
    %2399 = vmatpush2.bf16.xpose.msra.mxu0 0
    %2400 = vmatprep.subr.bf16.mxu0 0
    %2401 = vmatpush2.bf16.xpose.msra.mxu0 0
    %2402 = vmatprep.subr.bf16.mxu0 0
    %2403 = vmatpush2.bf16.xpose.msra.mxu0 0
    %2404 = vmatprep.mubr.bf16.mxu0 0
    %2405 = vmatmul.mubr.bf16.gmra.mxu0 %v2355
    %v2406 = vpop.f32.mrf.mxu0
    %v2407 = vadd.f32 %v179, %v2406
    %v2408 = vpop.f32.mrf.mxu0
    %v2409 = vpop.f32.mrf.mxu0
    %v2410 = vadd.f32 %v180, %v2409
    %v2411 = vpop.f32.mrf.mxu0
    %2412 = vmatprep.mubr.bf16.mxu0 0
    %2413 = vmatmul.mubr.bf16.gmra.mxu0 %v2358
    %v2414 = vpop.f32.mrf.mxu0
    %v2415 = vadd.f32 %v181, %v2414
    %v2416 = vpop.f32.mrf.mxu0
    %v2417 = vpop.f32.mrf.mxu0
    %v2418 = vadd.f32 %v182, %v2417
    %v2419 = vpop.f32.mrf.mxu0
    %2420 = vmatprep.mubr.bf16.mxu0 0
    %2421 = vmatmul.mubr.bf16.gmra.mxu0 %v2361
    %v2422 = vpop.f32.mrf.mxu0
    %v2423 = vadd.f32 %v183, %v2422
    %v2424 = vpop.f32.mrf.mxu0
    %v2425 = vpop.f32.mrf.mxu0
    %v2426 = vadd.f32 %v184, %v2425
    %v2427 = vpop.f32.mrf.mxu0
    %2428 = vdwg.mxu0
    %2432 = vrot.lane.b32.xlu0 %v2174, 96
    %v2433 = vpop.permute.xlu0 %2432
    %2434 = vrot.lane.b32.xlu0 %v2175, 96
    %v2435 = vpop.permute.xlu0 %2434
    %2436 = vrot.lane.b32.xlu0 %v2176, 96
    %v2437 = vpop.permute.xlu0 %2436
    %v2439 = vsel %vm464, %v2174, 0
    %v2442 = vsel %vm464, %v2175, 0
    %v2445 = vsel %vm464, %v2176, 0
    %v2448 = vsel %vm464, %v2433, 0
    %v2451 = vsel %vm464, %v2435, 0
    %v2454 = vsel %vm464, %v2437, 0
    %2456 = vmatprep.subr.bf16.mxu0 0
    %2457 = vmatpush1.bf16.xpose.msra.mxu0 0
    %2458 = vmatprep.subr.bf16.mxu0 0
    %2459 = vmatpush1.bf16.xpose.msra.mxu0 0
    %2460 = vmatprep.subr.bf16.mxu0 0
    %2461 = vmatpush1.bf16.xpose.msra.mxu0 0
    %2462 = vmatprep.subr.bf16.mxu0 0
    %2463 = vmatpush1.bf16.xpose.msra.mxu0 0
    %2464 = vmatprep.subr.bf16.mxu0 0
    %2465 = vmatpush1.bf16.xpose.msra.mxu0 0
    %2466 = vmatprep.subr.bf16.mxu0 0
    %2467 = vmatpush1.bf16.xpose.msra.mxu0 %v2454
    %2468 = vmatprep.subr.bf16.mxu0 0
    %2469 = vmatpush1.bf16.xpose.msra.mxu0 %v2451
    %2470 = vmatprep.subr.bf16.mxu0 0
    %2471 = vmatpush1.bf16.xpose.msra.mxu0 %v2448
    %2472 = vmatprep.subr.bf16.mxu0 0
    %2473 = vmatpush2.bf16.xpose.msra.mxu0 0
    %2474 = vmatprep.subr.bf16.mxu0 0
    %2475 = vmatpush2.bf16.xpose.msra.mxu0 0
    %2476 = vmatprep.subr.bf16.mxu0 0
    %2477 = vmatpush2.bf16.xpose.msra.mxu0 0
    %2478 = vmatprep.subr.bf16.mxu0 0
    %2479 = vmatpush2.bf16.xpose.msra.mxu0 0
    %2480 = vmatprep.subr.bf16.mxu0 0
    %2481 = vmatpush2.bf16.xpose.msra.mxu0 0
    %2482 = vmatprep.subr.bf16.mxu0 0
    %2483 = vmatpush2.bf16.xpose.msra.mxu0 0
    %2484 = vmatprep.subr.bf16.mxu0 0
    %2485 = vmatpush2.bf16.xpose.msra.mxu0 0
    %2486 = vmatprep.subr.bf16.mxu0 0
    %2487 = vmatpush2.bf16.xpose.msra.mxu0 0
    %2488 = vmatprep.mubr.bf16.mxu0 0
    %2489 = vmatmul.mubr.bf16.gmra.mxu0 %v2439
    %v2490 = vpop.f32.mrf.mxu0
    %v2491 = vadd.f32 %v179, %v2490
    %v2492 = vpop.f32.mrf.mxu0
    %v2493 = vpop.f32.mrf.mxu0
    %v2494 = vadd.f32 %v180, %v2493
    %v2495 = vpop.f32.mrf.mxu0
    %2496 = vmatprep.mubr.bf16.mxu0 0
    %2497 = vmatmul.mubr.bf16.gmra.mxu0 %v2442
    %v2498 = vpop.f32.mrf.mxu0
    %v2499 = vadd.f32 %v181, %v2498
    %v2500 = vpop.f32.mrf.mxu0
    %v2501 = vpop.f32.mrf.mxu0
    %v2502 = vadd.f32 %v182, %v2501
    %v2503 = vpop.f32.mrf.mxu0
    %2504 = vmatprep.mubr.bf16.mxu0 0
    %2505 = vmatmul.mubr.bf16.gmra.mxu0 %v2445
    %v2506 = vpop.f32.mrf.mxu0
    %v2507 = vadd.f32 %v183, %v2506
    %v2508 = vpop.f32.mrf.mxu0
    %v2509 = vpop.f32.mrf.mxu0
    %v2510 = vadd.f32 %v184, %v2509
    %v2511 = vpop.f32.mrf.mxu0
    %2512 = vdwg.mxu0
    %v2513 = vsel %vm112, %v2239, -inf
    %2514 = vmax.xlane.f32.xlu0 %v2513
    %v2515 = vpop.xlane.xlu0 %2514
    %v2516 = vsel %vm112, %v2242, -inf
    %2517 = vmax.xlane.f32.xlu0 %v2516
    %v2518 = vpop.xlane.xlu0 %2517
    %v2519 = vsel %vm112, %v2247, -inf
    %2520 = vmax.xlane.f32.xlu0 %v2519
    %v2521 = vpop.xlane.xlu0 %2520
    %v2522 = vsel %vm112, %v2250, -inf
    %2523 = vmax.xlane.f32.xlu0 %v2522
    %v2524 = vpop.xlane.xlu0 %2523
    %v2525 = vsel %vm112, %v2255, -inf
    %2526 = vmax.xlane.f32.xlu0 %v2525
    %v2527 = vpop.xlane.xlu0 %2526
    %v2528 = vsel %vm112, %v2258, -inf
    %2529 = vmax.xlane.f32.xlu0 %v2528
    %v2530 = vpop.xlane.xlu0 %2529
    %v2531 = vsel %vm112, %v2323, -inf
    %2532 = vmax.xlane.f32.xlu0 %v2531
    %v2533 = vpop.xlane.xlu0 %2532
    %v2534 = vsel %vm112, %v2326, -inf
    %2535 = vmax.xlane.f32.xlu0 %v2534
    %v2536 = vpop.xlane.xlu0 %2535
    %v2537 = vsel %vm112, %v2331, -inf
    %2538 = vmax.xlane.f32.xlu0 %v2537
    %v2539 = vpop.xlane.xlu0 %2538
    %v2540 = vsel %vm112, %v2334, -inf
    %2541 = vmax.xlane.f32.xlu0 %v2540
    %v2542 = vpop.xlane.xlu0 %2541
    %v2543 = vsel %vm112, %v2339, -inf
    %2544 = vmax.xlane.f32.xlu0 %v2543
    %v2545 = vpop.xlane.xlu0 %2544
    %v2546 = vsel %vm112, %v2342, -inf
    %2547 = vmax.xlane.f32.xlu0 %v2546
    %v2548 = vpop.xlane.xlu0 %2547
    %v2549 = vsel %vm112, %v2407, -inf
    %2550 = vmax.xlane.f32.xlu0 %v2549
    %v2551 = vpop.xlane.xlu0 %2550
    %v2552 = vsel %vm112, %v2410, -inf
    %2553 = vmax.xlane.f32.xlu0 %v2552
    %v2554 = vpop.xlane.xlu0 %2553
    %v2555 = vsel %vm112, %v2415, -inf
    %2556 = vmax.xlane.f32.xlu0 %v2555
    %v2557 = vpop.xlane.xlu0 %2556
    %v2558 = vsel %vm112, %v2418, -inf
    %2559 = vmax.xlane.f32.xlu0 %v2558
    %v2560 = vpop.xlane.xlu0 %2559
    %v2561 = vsel %vm112, %v2423, -inf
    %2562 = vmax.xlane.f32.xlu0 %v2561
    %v2563 = vpop.xlane.xlu0 %2562
    %v2564 = vsel %vm112, %v2426, -inf
    %2565 = vmax.xlane.f32.xlu0 %v2564
    %v2566 = vpop.xlane.xlu0 %2565
    %v2567 = vsel %vm112, %v2491, -inf
    %2568 = vmax.xlane.f32.xlu0 %v2567
    %v2569 = vpop.xlane.xlu0 %2568
    %v2570 = vsel %vm112, %v2494, -inf
    %2571 = vmax.xlane.f32.xlu0 %v2570
    %v2572 = vpop.xlane.xlu0 %2571
    %v2573 = vsel %vm112, %v2499, -inf
    %2574 = vmax.xlane.f32.xlu0 %v2573
    %v2575 = vpop.xlane.xlu0 %2574
    %v2576 = vsel %vm112, %v2502, -inf
    %2577 = vmax.xlane.f32.xlu0 %v2576
    %v2578 = vpop.xlane.xlu0 %2577
    %v2579 = vsel %vm112, %v2507, -inf
    %2580 = vmax.xlane.f32.xlu0 %v2579
    %v2581 = vpop.xlane.xlu0 %2580
    %v2582 = vsel %vm112, %v2510, -inf
    %2583 = vmax.xlane.f32.xlu0 %v2582
    %v2584 = vpop.xlane.xlu0 %2583
    %v2585 = vsub.f32 %v2239, %v2515
    %v2586 = vsub.f32 %v2242, %v2518
    %v2587 = vsub.f32 %v2247, %v2521
    %v2588 = vsub.f32 %v2250, %v2524
    %v2589 = vsub.f32 %v2255, %v2527
    %v2590 = vsub.f32 %v2258, %v2530
    %v2591 = vsub.f32 %v2323, %v2533
    %v2592 = vsub.f32 %v2326, %v2536
    %v2593 = vsub.f32 %v2331, %v2539
    %v2594 = vsub.f32 %v2334, %v2542
    %v2595 = vsub.f32 %v2339, %v2545
    %v2596 = vsub.f32 %v2342, %v2548
    %v2597 = vsub.f32 %v2407, %v2551
    %v2598 = vsub.f32 %v2410, %v2554
    %v2599 = vsub.f32 %v2415, %v2557
    %v2600 = vsub.f32 %v2418, %v2560
    %v2601 = vsub.f32 %v2423, %v2563
    %v2602 = vsub.f32 %v2426, %v2566
    %v2603 = vsub.f32 %v2491, %v2569
    %v2604 = vsub.f32 %v2494, %v2572
    %v2605 = vsub.f32 %v2499, %v2575
    %v2606 = vsub.f32 %v2502, %v2578
    %v2607 = vsub.f32 %v2507, %v2581
    %v2608 = vsub.f32 %v2510, %v2584
    %v2609 = vmul.f32 %v2585, 1.442695
    %v2610 = vpow.pop %v2609
    %v2611 = vmul.f32 %v2586, 1.442695
    %v2612 = vpow.pop %v2611
    %v2613 = vmul.f32 %v2587, 1.442695
    %v2614 = vpow.pop %v2613
    %v2615 = vmul.f32 %v2588, 1.442695
    %v2616 = vpow.pop %v2615
    %v2617 = vmul.f32 %v2589, 1.442695
    %v2618 = vpow.pop %v2617
    %v2619 = vmul.f32 %v2590, 1.442695
    %v2620 = vpow.pop %v2619
    %v2621 = vmul.f32 %v2591, 1.442695
    %v2622 = vpow.pop %v2621
    %v2623 = vmul.f32 %v2592, 1.442695
    %v2624 = vpow.pop %v2623
    %v2625 = vmul.f32 %v2593, 1.442695
    %v2626 = vpow.pop %v2625
    %v2627 = vmul.f32 %v2594, 1.442695
    %v2628 = vpow.pop %v2627
    %v2629 = vmul.f32 %v2595, 1.442695
    %v2630 = vpow.pop %v2629
    %v2631 = vmul.f32 %v2596, 1.442695
    %v2632 = vpow.pop %v2631
    %v2633 = vmul.f32 %v2597, 1.442695
    %v2634 = vpow.pop %v2633
    %v2635 = vmul.f32 %v2598, 1.442695
    %v2636 = vpow.pop %v2635
    %v2637 = vmul.f32 %v2599, 1.442695
    %v2638 = vpow.pop %v2637
    %v2639 = vmul.f32 %v2600, 1.442695
    %v2640 = vpow.pop %v2639
    %v2641 = vmul.f32 %v2601, 1.442695
    %v2642 = vpow.pop %v2641
    %v2643 = vmul.f32 %v2602, 1.442695
    %v2644 = vpow.pop %v2643
    %v2645 = vmul.f32 %v2603, 1.442695
    %v2646 = vpow.pop %v2645
    %v2647 = vmul.f32 %v2604, 1.442695
    %v2648 = vpow.pop %v2647
    %v2649 = vmul.f32 %v2605, 1.442695
    %v2650 = vpow.pop %v2649
    %v2651 = vmul.f32 %v2606, 1.442695
    %v2652 = vpow.pop %v2651
    %v2653 = vmul.f32 %v2607, 1.442695
    %v2654 = vpow.pop %v2653
    %v2655 = vmul.f32 %v2608, 1.442695
    %v2656 = vpow.pop %v2655
    %v2657 = vsel %vm112, %v2610, 0.0
    %2658 = vadd.xlane.f32.xlu0 %v2657
    %v2659 = vpop.xlane.xlu0 %2658
    %v2660 = vsel %vm112, %v2612, 0.0
    %2661 = vadd.xlane.f32.xlu0 %v2660
    %v2662 = vpop.xlane.xlu0 %2661
    %v2663 = vsel %vm112, %v2614, 0.0
    %2664 = vadd.xlane.f32.xlu0 %v2663
    %v2665 = vpop.xlane.xlu0 %2664
    %v2666 = vsel %vm112, %v2616, 0.0
    %2667 = vadd.xlane.f32.xlu0 %v2666
    %v2668 = vpop.xlane.xlu0 %2667
    %v2669 = vsel %vm112, %v2618, 0.0
    %2670 = vadd.xlane.f32.xlu0 %v2669
    %v2671 = vpop.xlane.xlu0 %2670
    %v2672 = vsel %vm112, %v2620, 0.0
    %2673 = vadd.xlane.f32.xlu0 %v2672
    %v2674 = vpop.xlane.xlu0 %2673
    %v2675 = vsel %vm112, %v2622, 0.0
    %2676 = vadd.xlane.f32.xlu0 %v2675
    %v2677 = vpop.xlane.xlu0 %2676
    %v2678 = vsel %vm112, %v2624, 0.0
    %2679 = vadd.xlane.f32.xlu0 %v2678
    %v2680 = vpop.xlane.xlu0 %2679
    %v2681 = vsel %vm112, %v2626, 0.0
    %2682 = vadd.xlane.f32.xlu0 %v2681
    %v2683 = vpop.xlane.xlu0 %2682
    %v2684 = vsel %vm112, %v2628, 0.0
    %2685 = vadd.xlane.f32.xlu0 %v2684
    %v2686 = vpop.xlane.xlu0 %2685
    %v2687 = vsel %vm112, %v2630, 0.0
    %2688 = vadd.xlane.f32.xlu0 %v2687
    %v2689 = vpop.xlane.xlu0 %2688
    %v2690 = vsel %vm112, %v2632, 0.0
    %2691 = vadd.xlane.f32.xlu0 %v2690
    %v2692 = vpop.xlane.xlu0 %2691
    %v2693 = vsel %vm112, %v2634, 0.0
    %2694 = vadd.xlane.f32.xlu0 %v2693
    %v2695 = vpop.xlane.xlu0 %2694
    %v2696 = vsel %vm112, %v2636, 0.0
    %2697 = vadd.xlane.f32.xlu0 %v2696
    %v2698 = vpop.xlane.xlu0 %2697
    %v2699 = vsel %vm112, %v2638, 0.0
    %2700 = vadd.xlane.f32.xlu0 %v2699
    %v2701 = vpop.xlane.xlu0 %2700
    %v2702 = vsel %vm112, %v2640, 0.0
    %2703 = vadd.xlane.f32.xlu0 %v2702
    %v2704 = vpop.xlane.xlu0 %2703
    %v2705 = vsel %vm112, %v2642, 0.0
    %2706 = vadd.xlane.f32.xlu0 %v2705
    %v2707 = vpop.xlane.xlu0 %2706
    %v2708 = vsel %vm112, %v2644, 0.0
    %2709 = vadd.xlane.f32.xlu0 %v2708
    %v2710 = vpop.xlane.xlu0 %2709
    %v2711 = vsel %vm112, %v2646, 0.0
    %2712 = vadd.xlane.f32.xlu0 %v2711
    %v2713 = vpop.xlane.xlu0 %2712
    %v2714 = vsel %vm112, %v2648, 0.0
    %2715 = vadd.xlane.f32.xlu0 %v2714
    %v2716 = vpop.xlane.xlu0 %2715
    %v2717 = vsel %vm112, %v2650, 0.0
    %2718 = vadd.xlane.f32.xlu0 %v2717
    %v2719 = vpop.xlane.xlu0 %2718
    %v2720 = vsel %vm112, %v2652, 0.0
    %2721 = vadd.xlane.f32.xlu0 %v2720
    %v2722 = vpop.xlane.xlu0 %2721
    %v2723 = vsel %vm112, %v2654, 0.0
    %2724 = vadd.xlane.f32.xlu0 %v2723
    %v2725 = vpop.xlane.xlu0 %2724
    %v2726 = vsel %vm112, %v2656, 0.0
    %2727 = vadd.xlane.f32.xlu0 %v2726
    %v2728 = vpop.xlane.xlu0 %2727
    %v2729 = vrcp.pop %v2659
    %v2730 = vrcp.pop %v2662
    %v2731 = vrcp.pop %v2665
    %v2732 = vrcp.pop %v2668
    %v2733 = vrcp.pop %v2671
    %v2734 = vrcp.pop %v2674
    %v2735 = vrcp.pop %v2677
    %v2736 = vrcp.pop %v2680
    %v2737 = vrcp.pop %v2683
    %v2738 = vrcp.pop %v2686
    %v2739 = vrcp.pop %v2689
    %v2740 = vrcp.pop %v2692
    %v2741 = vrcp.pop %v2695
    %v2742 = vrcp.pop %v2698
    %v2743 = vrcp.pop %v2701
    %v2744 = vrcp.pop %v2704
    %v2745 = vrcp.pop %v2707
    %v2746 = vrcp.pop %v2710
    %v2747 = vrcp.pop %v2713
    %v2748 = vrcp.pop %v2716
    %v2749 = vrcp.pop %v2719
    %v2750 = vrcp.pop %v2722
    %v2751 = vrcp.pop %v2725
    %v2752 = vrcp.pop %v2728
    %v2753 = vmul.f32 %v2610, %v2729
    %v2754 = vmul.f32 %v2612, %v2730
    %v2755 = vmul.f32 %v2614, %v2731
    %v2756 = vmul.f32 %v2616, %v2732
    %v2757 = vmul.f32 %v2618, %v2733
    %v2758 = vmul.f32 %v2620, %v2734
    %v2759 = vmul.f32 %v2622, %v2735
    %v2760 = vmul.f32 %v2624, %v2736
    %v2761 = vmul.f32 %v2626, %v2737
    %v2762 = vmul.f32 %v2628, %v2738
    %v2763 = vmul.f32 %v2630, %v2739
    %v2764 = vmul.f32 %v2632, %v2740
    %v2765 = vmul.f32 %v2634, %v2741
    %v2766 = vmul.f32 %v2636, %v2742
    %v2767 = vmul.f32 %v2638, %v2743
    %v2768 = vmul.f32 %v2640, %v2744
    %v2769 = vmul.f32 %v2642, %v2745
    %v2770 = vmul.f32 %v2644, %v2746
    %v2771 = vmul.f32 %v2646, %v2747
    %v2772 = vmul.f32 %v2648, %v2748
    %v2773 = vmul.f32 %v2650, %v2749
    %v2774 = vmul.f32 %v2652, %v2750
    %v2775 = vmul.f32 %v2654, %v2751
    %v2776 = vmul.f32 %v2656, %v2752
    %v2777 = vpack.c.bf16 %v2754, %v2753
    %v2778 = vpack.c.bf16 %v2756, %v2755
    %v2779 = vpack.c.bf16 %v2758, %v2757
    %v2780 = vpack.c.bf16 %v2760, %v2759
    %v2781 = vpack.c.bf16 %v2762, %v2761
    %v2782 = vpack.c.bf16 %v2764, %v2763
    %v2783 = vpack.c.bf16 %v2766, %v2765
    %v2784 = vpack.c.bf16 %v2768, %v2767
    %v2785 = vpack.c.bf16 %v2770, %v2769
    %v2786 = vpack.c.bf16 %v2772, %v2771
    %v2787 = vpack.c.bf16 %v2774, %v2773
    %v2788 = vpack.c.bf16 %v2776, %v2775
    %2789 = vrot.lane.b32.xlu0 %v2165, 64
    %v2790 = vpop.permute.xlu0 %2789
    %2791 = vrot.lane.b32.xlu0 %v2166, 64
    %v2792 = vpop.permute.xlu0 %2791
    %2793 = vrot.lane.b32.xlu0 %v2167, 64
    %v2794 = vpop.permute.xlu0 %2793
    %v2799 = vsel %vm112, %v2777, 0
    %v2802 = vsel %vm112, %v2778, 0
    %v2805 = vsel %vm112, %v2779, 0
    %2807 = vmatprep.subr.bf16.mxu0 0
    %2808 = vmatpush1.bf16.msra.mxu0 0
    %2809 = vmatprep.subr.bf16.mxu0 0
    %2810 = vmatpush1.bf16.msra.mxu0 0
    %2811 = vmatprep.subr.bf16.mxu0 0
    %2812 = vmatpush1.bf16.msra.mxu0 0
    %2813 = vmatprep.subr.bf16.mxu0 0
    %2814 = vmatpush1.bf16.msra.mxu0 0
    %2815 = vmatprep.subr.bf16.mxu0 0
    %2816 = vmatpush1.bf16.msra.mxu0 0
    %2817 = vmatprep.subr.bf16.mxu0 0
    %2818 = vmatpush1.bf16.msra.mxu0 %v2794
    %2819 = vmatprep.subr.bf16.mxu0 0
    %2820 = vmatpush1.bf16.msra.mxu0 %v2792
    %2821 = vmatprep.subr.bf16.mxu0 0
    %2822 = vmatpush1.bf16.msra.mxu0 %v2790
    %2823 = vmatprep.subr.bf16.mxu0 0
    %2824 = vmatpush2.bf16.msra.mxu0 0
    %2825 = vmatprep.subr.bf16.mxu0 0
    %2826 = vmatpush2.bf16.msra.mxu0 0
    %2827 = vmatprep.subr.bf16.mxu0 0
    %2828 = vmatpush2.bf16.msra.mxu0 0
    %2829 = vmatprep.subr.bf16.mxu0 0
    %2830 = vmatpush2.bf16.msra.mxu0 0
    %2831 = vmatprep.subr.bf16.mxu0 0
    %2832 = vmatpush2.bf16.msra.mxu0 0
    %2833 = vmatprep.subr.bf16.mxu0 0
    %2834 = vmatpush2.bf16.msra.mxu0 0
    %2835 = vmatprep.subr.bf16.mxu0 0
    %2836 = vmatpush2.bf16.msra.mxu0 0
    %2837 = vmatprep.subr.bf16.mxu0 0
    %2838 = vmatpush2.bf16.msra.mxu0 0
    %2839 = vmatprep.mubr.bf16.mxu0 0
    %2840 = vmatmul.mubr.bf16.gmra.mxu0 %v2799
    %v2841 = vpop.f32.mrf.mxu0
    %v2842 = vadd.f32 0.0, %v2841
    %v2843 = vpop.f32.mrf.mxu0
    %v2844 = vpop.f32.mrf.mxu0
    %v2845 = vadd.f32 0.0, %v2844
    %v2846 = vpop.f32.mrf.mxu0
    %2847 = vmatprep.mubr.bf16.mxu0 0
    %2848 = vmatmul.mubr.bf16.gmra.mxu0 %v2802
    %v2849 = vpop.f32.mrf.mxu0
    %v2850 = vadd.f32 0.0, %v2849
    %v2851 = vpop.f32.mrf.mxu0
    %v2852 = vpop.f32.mrf.mxu0
    %v2853 = vadd.f32 0.0, %v2852
    %v2854 = vpop.f32.mrf.mxu0
    %2855 = vmatprep.mubr.bf16.mxu0 0
    %2856 = vmatmul.mubr.bf16.gmra.mxu0 %v2805
    %v2857 = vpop.f32.mrf.mxu0
    %v2858 = vadd.f32 0.0, %v2857
    %v2859 = vpop.f32.mrf.mxu0
    %v2860 = vpop.f32.mrf.mxu0
    %v2861 = vadd.f32 0.0, %v2860
    %v2862 = vpop.f32.mrf.mxu0
    %2863 = vdwg.mxu0
    %2864 = vrot.lane.b32.xlu0 %v2168, 64
    %v2865 = vpop.permute.xlu0 %2864
    %2866 = vrot.lane.b32.xlu0 %v2169, 64
    %v2867 = vpop.permute.xlu0 %2866
    %2868 = vrot.lane.b32.xlu0 %v2170, 64
    %v2869 = vpop.permute.xlu0 %2868
    %v2874 = vsel %vm112, %v2780, 0
    %v2877 = vsel %vm112, %v2781, 0
    %v2880 = vsel %vm112, %v2782, 0
    %2882 = vmatprep.subr.bf16.mxu0 0
    %2883 = vmatpush1.bf16.msra.mxu0 0
    %2884 = vmatprep.subr.bf16.mxu0 0
    %2885 = vmatpush1.bf16.msra.mxu0 0
    %2886 = vmatprep.subr.bf16.mxu0 0
    %2887 = vmatpush1.bf16.msra.mxu0 0
    %2888 = vmatprep.subr.bf16.mxu0 0
    %2889 = vmatpush1.bf16.msra.mxu0 0
    %2890 = vmatprep.subr.bf16.mxu0 0
    %2891 = vmatpush1.bf16.msra.mxu0 0
    %2892 = vmatprep.subr.bf16.mxu0 0
    %2893 = vmatpush1.bf16.msra.mxu0 %v2869
    %2894 = vmatprep.subr.bf16.mxu0 0
    %2895 = vmatpush1.bf16.msra.mxu0 %v2867
    %2896 = vmatprep.subr.bf16.mxu0 0
    %2897 = vmatpush1.bf16.msra.mxu0 %v2865
    %2898 = vmatprep.subr.bf16.mxu0 0
    %2899 = vmatpush2.bf16.msra.mxu0 0
    %2900 = vmatprep.subr.bf16.mxu0 0
    %2901 = vmatpush2.bf16.msra.mxu0 0
    %2902 = vmatprep.subr.bf16.mxu0 0
    %2903 = vmatpush2.bf16.msra.mxu0 0
    %2904 = vmatprep.subr.bf16.mxu0 0
    %2905 = vmatpush2.bf16.msra.mxu0 0
    %2906 = vmatprep.subr.bf16.mxu0 0
    %2907 = vmatpush2.bf16.msra.mxu0 0
    %2908 = vmatprep.subr.bf16.mxu0 0
    %2909 = vmatpush2.bf16.msra.mxu0 0
    %2910 = vmatprep.subr.bf16.mxu0 0
    %2911 = vmatpush2.bf16.msra.mxu0 0
    %2912 = vmatprep.subr.bf16.mxu0 0
    %2913 = vmatpush2.bf16.msra.mxu0 0
    %2914 = vmatprep.mubr.bf16.mxu0 0
    %2915 = vmatmul.mubr.bf16.gmra.mxu0 %v2874
    %v2916 = vpop.f32.mrf.mxu0
    %v2917 = vadd.f32 0.0, %v2916
    %v2918 = vpop.f32.mrf.mxu0
    %v2919 = vpop.f32.mrf.mxu0
    %v2920 = vadd.f32 0.0, %v2919
    %v2921 = vpop.f32.mrf.mxu0
    %2922 = vmatprep.mubr.bf16.mxu0 0
    %2923 = vmatmul.mubr.bf16.gmra.mxu0 %v2877
    %v2924 = vpop.f32.mrf.mxu0
    %v2925 = vadd.f32 0.0, %v2924
    %v2926 = vpop.f32.mrf.mxu0
    %v2927 = vpop.f32.mrf.mxu0
    %v2928 = vadd.f32 0.0, %v2927
    %v2929 = vpop.f32.mrf.mxu0
    %2930 = vmatprep.mubr.bf16.mxu0 0
    %2931 = vmatmul.mubr.bf16.gmra.mxu0 %v2880
    %v2932 = vpop.f32.mrf.mxu0
    %v2933 = vadd.f32 0.0, %v2932
    %v2934 = vpop.f32.mrf.mxu0
    %v2935 = vpop.f32.mrf.mxu0
    %v2936 = vadd.f32 0.0, %v2935
    %v2937 = vpop.f32.mrf.mxu0
    %2938 = vdwg.mxu0
    %2939 = vrot.lane.b32.xlu0 %v2171, 64
    %v2940 = vpop.permute.xlu0 %2939
    %2941 = vrot.lane.b32.xlu0 %v2172, 64
    %v2942 = vpop.permute.xlu0 %2941
    %2943 = vrot.lane.b32.xlu0 %v2173, 64
    %v2944 = vpop.permute.xlu0 %2943
    %v2949 = vsel %vm112, %v2783, 0
    %v2952 = vsel %vm112, %v2784, 0
    %v2955 = vsel %vm112, %v2785, 0
    %2957 = vmatprep.subr.bf16.mxu0 0
    %2958 = vmatpush1.bf16.msra.mxu0 0
    %2959 = vmatprep.subr.bf16.mxu0 0
    %2960 = vmatpush1.bf16.msra.mxu0 0
    %2961 = vmatprep.subr.bf16.mxu0 0
    %2962 = vmatpush1.bf16.msra.mxu0 0
    %2963 = vmatprep.subr.bf16.mxu0 0
    %2964 = vmatpush1.bf16.msra.mxu0 0
    %2965 = vmatprep.subr.bf16.mxu0 0
    %2966 = vmatpush1.bf16.msra.mxu0 0
    %2967 = vmatprep.subr.bf16.mxu0 0
    %2968 = vmatpush1.bf16.msra.mxu0 %v2944
    %2969 = vmatprep.subr.bf16.mxu0 0
    %2970 = vmatpush1.bf16.msra.mxu0 %v2942
    %2971 = vmatprep.subr.bf16.mxu0 0
    %2972 = vmatpush1.bf16.msra.mxu0 %v2940
    %2973 = vmatprep.subr.bf16.mxu0 0
    %2974 = vmatpush2.bf16.msra.mxu0 0
    %2975 = vmatprep.subr.bf16.mxu0 0
    %2976 = vmatpush2.bf16.msra.mxu0 0
    %2977 = vmatprep.subr.bf16.mxu0 0
    %2978 = vmatpush2.bf16.msra.mxu0 0
    %2979 = vmatprep.subr.bf16.mxu0 0
    %2980 = vmatpush2.bf16.msra.mxu0 0
    %2981 = vmatprep.subr.bf16.mxu0 0
    %2982 = vmatpush2.bf16.msra.mxu0 0
    %2983 = vmatprep.subr.bf16.mxu0 0
    %2984 = vmatpush2.bf16.msra.mxu0 0
    %2985 = vmatprep.subr.bf16.mxu0 0
    %2986 = vmatpush2.bf16.msra.mxu0 0
    %2987 = vmatprep.subr.bf16.mxu0 0
    %2988 = vmatpush2.bf16.msra.mxu0 0
    %2989 = vmatprep.mubr.bf16.mxu0 0
    %2990 = vmatmul.mubr.bf16.gmra.mxu0 %v2949
    %v2991 = vpop.f32.mrf.mxu0
    %v2992 = vadd.f32 0.0, %v2991
    %v2993 = vpop.f32.mrf.mxu0
    %v2994 = vpop.f32.mrf.mxu0
    %v2995 = vadd.f32 0.0, %v2994
    %v2996 = vpop.f32.mrf.mxu0
    %2997 = vmatprep.mubr.bf16.mxu0 0
    %2998 = vmatmul.mubr.bf16.gmra.mxu0 %v2952
    %v2999 = vpop.f32.mrf.mxu0
    %v3000 = vadd.f32 0.0, %v2999
    %v3001 = vpop.f32.mrf.mxu0
    %v3002 = vpop.f32.mrf.mxu0
    %v3003 = vadd.f32 0.0, %v3002
    %v3004 = vpop.f32.mrf.mxu0
    %3005 = vmatprep.mubr.bf16.mxu0 0
    %3006 = vmatmul.mubr.bf16.gmra.mxu0 %v2955
    %v3007 = vpop.f32.mrf.mxu0
    %v3008 = vadd.f32 0.0, %v3007
    %v3009 = vpop.f32.mrf.mxu0
    %v3010 = vpop.f32.mrf.mxu0
    %v3011 = vadd.f32 0.0, %v3010
    %v3012 = vpop.f32.mrf.mxu0
    %3013 = vdwg.mxu0
    %3014 = vrot.lane.b32.xlu0 %v2174, 64
    %v3015 = vpop.permute.xlu0 %3014
    %3016 = vrot.lane.b32.xlu0 %v2175, 64
    %v3017 = vpop.permute.xlu0 %3016
    %3018 = vrot.lane.b32.xlu0 %v2176, 64
    %v3019 = vpop.permute.xlu0 %3018
    %v3024 = vsel %vm112, %v2786, 0
    %v3027 = vsel %vm112, %v2787, 0
    %v3030 = vsel %vm112, %v2788, 0
    %3032 = vmatprep.subr.bf16.mxu0 0
    %3033 = vmatpush1.bf16.msra.mxu0 0
    %3034 = vmatprep.subr.bf16.mxu0 0
    %3035 = vmatpush1.bf16.msra.mxu0 0
    %3036 = vmatprep.subr.bf16.mxu0 0
    %3037 = vmatpush1.bf16.msra.mxu0 0
    %3038 = vmatprep.subr.bf16.mxu0 0
    %3039 = vmatpush1.bf16.msra.mxu0 0
    %3040 = vmatprep.subr.bf16.mxu0 0
    %3041 = vmatpush1.bf16.msra.mxu0 0
    %3042 = vmatprep.subr.bf16.mxu0 0
    %3043 = vmatpush1.bf16.msra.mxu0 %v3019
    %3044 = vmatprep.subr.bf16.mxu0 0
    %3045 = vmatpush1.bf16.msra.mxu0 %v3017
    %3046 = vmatprep.subr.bf16.mxu0 0
    %3047 = vmatpush1.bf16.msra.mxu0 %v3015
    %3048 = vmatprep.subr.bf16.mxu0 0
    %3049 = vmatpush2.bf16.msra.mxu0 0
    %3050 = vmatprep.subr.bf16.mxu0 0
    %3051 = vmatpush2.bf16.msra.mxu0 0
    %3052 = vmatprep.subr.bf16.mxu0 0
    %3053 = vmatpush2.bf16.msra.mxu0 0
    %3054 = vmatprep.subr.bf16.mxu0 0
    %3055 = vmatpush2.bf16.msra.mxu0 0
    %3056 = vmatprep.subr.bf16.mxu0 0
    %3057 = vmatpush2.bf16.msra.mxu0 0
    %3058 = vmatprep.subr.bf16.mxu0 0
    %3059 = vmatpush2.bf16.msra.mxu0 0
    %3060 = vmatprep.subr.bf16.mxu0 0
    %3061 = vmatpush2.bf16.msra.mxu0 0
    %3062 = vmatprep.subr.bf16.mxu0 0
    %3063 = vmatpush2.bf16.msra.mxu0 0
    %3064 = vmatprep.mubr.bf16.mxu0 0
    %3065 = vmatmul.mubr.bf16.gmra.mxu0 %v3024
    %v3066 = vpop.f32.mrf.mxu0
    %v3067 = vadd.f32 0.0, %v3066
    %v3068 = vpop.f32.mrf.mxu0
    %v3069 = vpop.f32.mrf.mxu0
    %v3070 = vadd.f32 0.0, %v3069
    %v3071 = vpop.f32.mrf.mxu0
    %3072 = vmatprep.mubr.bf16.mxu0 0
    %3073 = vmatmul.mubr.bf16.gmra.mxu0 %v3027
    %v3074 = vpop.f32.mrf.mxu0
    %v3075 = vadd.f32 0.0, %v3074
    %v3076 = vpop.f32.mrf.mxu0
    %v3077 = vpop.f32.mrf.mxu0
    %v3078 = vadd.f32 0.0, %v3077
    %v3079 = vpop.f32.mrf.mxu0
    %3080 = vmatprep.mubr.bf16.mxu0 0
    %3081 = vmatmul.mubr.bf16.gmra.mxu0 %v3030
    %v3082 = vpop.f32.mrf.mxu0
    %v3083 = vadd.f32 0.0, %v3082
    %v3084 = vpop.f32.mrf.mxu0
    %v3085 = vpop.f32.mrf.mxu0
    %v3086 = vadd.f32 0.0, %v3085
    %v3087 = vpop.f32.mrf.mxu0
    %3088 = vdwg.mxu0
    %3095 = vrot.lane.b32.xlu0 %v2917, 8
    %v3096 = vpop.permute.xlu0 %3095
    %3097 = vrot.lane.b32.xlu0 %v2920, 8
    %v3098 = vpop.permute.xlu0 %3097
    %3099 = vrot.lane.b32.xlu0 %v2925, 8
    %v3100 = vpop.permute.xlu0 %3099
    %3101 = vrot.lane.b32.xlu0 %v2928, 8
    %v3102 = vpop.permute.xlu0 %3101
    %3103 = vrot.lane.b32.xlu0 %v2933, 8
    %v3104 = vpop.permute.xlu0 %3103
    %3105 = vrot.lane.b32.xlu0 %v2936, 8
    %v3106 = vpop.permute.xlu0 %3105
    %3119 = vrot.lane.b32.xlu0 %v2992, 16
    %v3120 = vpop.permute.xlu0 %3119
    %3121 = vrot.lane.b32.xlu0 %v2995, 16
    %v3122 = vpop.permute.xlu0 %3121
    %3123 = vrot.lane.b32.xlu0 %v3000, 16
    %v3124 = vpop.permute.xlu0 %3123
    %3125 = vrot.lane.b32.xlu0 %v3003, 16
    %v3126 = vpop.permute.xlu0 %3125
    %3127 = vrot.lane.b32.xlu0 %v3008, 16
    %v3128 = vpop.permute.xlu0 %3127
    %3129 = vrot.lane.b32.xlu0 %v3011, 16
    %v3130 = vpop.permute.xlu0 %3129
    %3143 = vrot.lane.b32.xlu0 %v3067, 24
    %v3144 = vpop.permute.xlu0 %3143
    %3145 = vrot.lane.b32.xlu0 %v3070, 24
    %v3146 = vpop.permute.xlu0 %3145
    %3147 = vrot.lane.b32.xlu0 %v3075, 24
    %v3148 = vpop.permute.xlu0 %3147
    %3149 = vrot.lane.b32.xlu0 %v3078, 24
    %v3150 = vpop.permute.xlu0 %3149
    %3151 = vrot.lane.b32.xlu0 %v3083, 24
    %v3152 = vpop.permute.xlu0 %3151
    %3153 = vrot.lane.b32.xlu0 %v3086, 24
    %v3154 = vpop.permute.xlu0 %3153
    %v3161 = vsel %vm464, %v2842, %v3096
    %v3162 = vsel %vm464, %v2845, %v3098
    %v3163 = vsel %vm464, %v2850, %v3100
    %v3164 = vsel %vm464, %v2853, %v3102
    %v3165 = vsel %vm464, %v2858, %v3104
    %v3166 = vsel %vm464, %v2861, %v3106
    %v3167 = vsel %vm1446, %v3161, %v3120
    %v3168 = vsel %vm1446, %v3162, %v3122
    %v3169 = vsel %vm1446, %v3163, %v3124
    %v3170 = vsel %vm1446, %v3164, %v3126
    %v3171 = vsel %vm1446, %v3165, %v3128
    %v3172 = vsel %vm1446, %v3166, %v3130
    %v3173 = vsel %vm1453, %v3167, %v3144
    %v3174 = vsel %vm1453, %v3168, %v3146
    %v3175 = vsel %vm1453, %v3169, %v3148
    %v3176 = vsel %vm1453, %v3170, %v3150
    %v3177 = vsel %vm1453, %v3171, %v3152
    %v3178 = vsel %vm1453, %v3172, %v3154
    %v3179 = vpack.c.bf16 %v3174, %v3173
    %v3180 = vpack.c.bf16 %v3176, %v3175
    %v3181 = vpack.c.bf16 %v3178, %v3177
    %s3182 = scalar_lea.vmem %s8, 16
    %v3183 = vld [vmem:[%s3182] sm:$0xf]
    %v3184 = vld [vmem:[%s3182 + $0x4] sm:$0xf]
    %v3185 = vld [vmem:[%s3182 + $0x8] sm:$0xf]
    %v3186 = vld [vmem:[%s3182 + $0xc] sm:$0xf]
    %v3191 = vunpack.c.l.b16 %v3183
    %v3192 = vunpack.c.l.b16 %v3184
    %v3193 = vunpack.c.l.b16 %v3185
    %v3194 = vunpack.c.l.b16 %v3186
    %v3195 = vpack.c.b16 %v3192, %v3191
    %v3196 = vpack.c.b16 %v3194, %v3193
    %v3200 = vsel %vm187, %v3179, 0
    %v3203 = vsel %vm187, %v3180, 0
    %v3206 = vsel %vm187, %v3181, 0
    %3208 = vmatprep.subr.bf16.mxu0 0
    %3209 = vmatpush1.bf16.msra.mxu0 0
    %3210 = vmatprep.subr.bf16.mxu0 0
    %3211 = vmatpush1.bf16.msra.mxu0 0
    %3212 = vmatprep.subr.bf16.mxu0 0
    %3213 = vmatpush1.bf16.msra.mxu0 0
    %3214 = vmatprep.subr.bf16.mxu0 0
    %3215 = vmatpush1.bf16.msra.mxu0 0
    %3216 = vmatprep.subr.bf16.mxu0 0
    %3217 = vmatpush1.bf16.msra.mxu0 0
    %3218 = vmatprep.subr.bf16.mxu0 0
    %3219 = vmatpush1.bf16.msra.mxu0 0
    %3220 = vmatprep.subr.bf16.mxu0 0
    %3221 = vmatpush1.bf16.msra.mxu0 %v3196
    %3222 = vmatprep.subr.bf16.mxu0 0
    %3223 = vmatpush1.bf16.msra.mxu0 %v3195
    %3224 = vmatprep.subr.bf16.mxu0 0
    %3225 = vmatpush2.bf16.msra.mxu0 0
    %3226 = vmatprep.subr.bf16.mxu0 0
    %3227 = vmatpush2.bf16.msra.mxu0 0
    %3228 = vmatprep.subr.bf16.mxu0 0
    %3229 = vmatpush2.bf16.msra.mxu0 0
    %3230 = vmatprep.subr.bf16.mxu0 0
    %3231 = vmatpush2.bf16.msra.mxu0 0
    %3232 = vmatprep.subr.bf16.mxu0 0
    %3233 = vmatpush2.bf16.msra.mxu0 0
    %3234 = vmatprep.subr.bf16.mxu0 0
    %3235 = vmatpush2.bf16.msra.mxu0 0
    %3236 = vmatprep.subr.bf16.mxu0 0
    %3237 = vmatpush2.bf16.msra.mxu0 0
    %3238 = vmatprep.subr.bf16.mxu0 0
    %3239 = vmatpush2.bf16.msra.mxu0 0
    %3240 = vmatprep.mubr.bf16.mxu0 0
    %3241 = vmatmul.mubr.bf16.gmra.mxu0 %v3200
    %v3242 = vpop.f32.mrf.mxu0
    %v3243 = vadd.f32 0.0, %v3242
    %v3244 = vpop.f32.mrf.mxu0
    %v3245 = vpop.f32.mrf.mxu0
    %v3246 = vadd.f32 0.0, %v3245
    %v3247 = vpop.f32.mrf.mxu0
    %3248 = vmatprep.mubr.bf16.mxu0 0
    %3249 = vmatmul.mubr.bf16.gmra.mxu0 %v3203
    %v3250 = vpop.f32.mrf.mxu0
    %v3251 = vadd.f32 0.0, %v3250
    %v3252 = vpop.f32.mrf.mxu0
    %v3253 = vpop.f32.mrf.mxu0
    %v3254 = vadd.f32 0.0, %v3253
    %v3255 = vpop.f32.mrf.mxu0
    %3256 = vmatprep.mubr.bf16.mxu0 0
    %3257 = vmatmul.mubr.bf16.gmra.mxu0 %v3206
    %v3258 = vpop.f32.mrf.mxu0
    %v3259 = vadd.f32 0.0, %v3258
    %v3260 = vpop.f32.mrf.mxu0
    %v3261 = vpop.f32.mrf.mxu0
    %v3262 = vadd.f32 0.0, %v3261
    %v3263 = vpop.f32.mrf.mxu0
    %3264 = vdwg.mxu0
    %v3265 = vadd.f32 %v1899, %v3243
    %v3266 = vadd.f32 %v1900, %v3246
    %v3267 = vadd.f32 %v1901, %v3251
    %v3268 = vadd.f32 %v1902, %v3254
    %v3269 = vadd.f32 %v1903, %v3259
    %v3270 = vadd.f32 %v1904, %v3262
    %s3271 = scalar_lea.vmem %s9, 1
    %v3272 = vld [vmem:[%s3271] sm:$0x1]
    %v3274 = vlaneseq
    %v3275 = vshrl.u32 %v3274, 7
    %v3276 = vsub.s32 0, %v3275
    %v3277 = vrot.slane %v3272, %v3276
    %v3279 = vadd.f32 %v3265, %v3277
    %v3280 = vadd.f32 %v3266, %v3277
    %v3281 = vadd.f32 %v3267, %v3277
    %v3282 = vadd.f32 %v3268, %v3277
    %v3283 = vadd.f32 %v3269, %v3277
    %v3284 = vadd.f32 %v3270, %v3277
    %s3285 = scalar_lea.vmem %s10, 1
    %v3286 = vld [vmem:[%s3285] sm:$0x1]
    %s3287 = scalar_lea.vmem %s11, 1
    %v3288 = vld [vmem:[%s3287] sm:$0x1]
    %v3289 = vsel %vm187, %v3279, 0.0
    %3290 = vadd.xlane.f32.xlu0 %v3289
    %v3291 = vpop.xlane.xlu0 %3290
    %v3292 = vsel %vm187, %v3280, 0.0
    %3293 = vadd.xlane.f32.xlu0 %v3292
    %v3294 = vpop.xlane.xlu0 %3293
    %v3295 = vsel %vm187, %v3281, 0.0
    %3296 = vadd.xlane.f32.xlu0 %v3295
    %v3297 = vpop.xlane.xlu0 %3296
    %v3298 = vsel %vm187, %v3282, 0.0
    %3299 = vadd.xlane.f32.xlu0 %v3298
    %v3300 = vpop.xlane.xlu0 %3299
    %v3301 = vsel %vm187, %v3283, 0.0
    %3302 = vadd.xlane.f32.xlu0 %v3301
    %v3303 = vpop.xlane.xlu0 %3302
    %v3304 = vsel %vm187, %v3284, 0.0
    %3305 = vadd.xlane.f32.xlu0 %v3304
    %v3306 = vpop.xlane.xlu0 %3305
    %v3307 = vmul.f32 %v3291, %v206
    %v3308 = vmul.f32 %v3294, %v206
    %v3309 = vmul.f32 %v3297, %v206
    %v3310 = vmul.f32 %v3300, %v206
    %v3311 = vmul.f32 %v3303, %v206
    %v3312 = vmul.f32 %v3306, %v206
    %v3313 = vsub.f32 %v3279, %v3307
    %v3314 = vsub.f32 %v3280, %v3308
    %v3315 = vsub.f32 %v3281, %v3309
    %v3316 = vsub.f32 %v3282, %v3310
    %v3317 = vsub.f32 %v3283, %v3311
    %v3318 = vsub.f32 %v3284, %v3312
    %v3319 = vmul.f32 %v3313, %v3313
    %v3320 = vmul.f32 %v3314, %v3314
    %v3321 = vmul.f32 %v3315, %v3315
    %v3322 = vmul.f32 %v3316, %v3316
    %v3323 = vmul.f32 %v3317, %v3317
    %v3324 = vmul.f32 %v3318, %v3318
    %v3325 = vsel %vm187, %v3319, 0.0
    %3326 = vadd.xlane.f32.xlu0 %v3325
    %v3327 = vpop.xlane.xlu0 %3326
    %v3328 = vsel %vm187, %v3320, 0.0
    %3329 = vadd.xlane.f32.xlu0 %v3328
    %v3330 = vpop.xlane.xlu0 %3329
    %v3331 = vsel %vm187, %v3321, 0.0
    %3332 = vadd.xlane.f32.xlu0 %v3331
    %v3333 = vpop.xlane.xlu0 %3332
    %v3334 = vsel %vm187, %v3322, 0.0
    %3335 = vadd.xlane.f32.xlu0 %v3334
    %v3336 = vpop.xlane.xlu0 %3335
    %v3337 = vsel %vm187, %v3323, 0.0
    %3338 = vadd.xlane.f32.xlu0 %v3337
    %v3339 = vpop.xlane.xlu0 %3338
    %v3340 = vsel %vm187, %v3324, 0.0
    %3341 = vadd.xlane.f32.xlu0 %v3340
    %v3342 = vpop.xlane.xlu0 %3341
    %v3343 = vmul.f32 %v3327, %v206
    %v3344 = vmul.f32 %v3330, %v206
    %v3345 = vmul.f32 %v3333, %v206
    %v3346 = vmul.f32 %v3336, %v206
    %v3347 = vmul.f32 %v3339, %v206
    %v3348 = vmul.f32 %v3342, %v206
    %v3349 = vadd.f32 %v3343, 1e-06
    %v3350 = vadd.f32 %v3344, 1e-06
    %v3351 = vadd.f32 %v3345, 1e-06
    %v3352 = vadd.f32 %v3346, 1e-06
    %v3353 = vadd.f32 %v3347, 1e-06
    %v3354 = vadd.f32 %v3348, 1e-06
    %v3355 = vrsqrt.pop %v3349
    %v3356 = vrsqrt.pop %v3350
    %v3357 = vrsqrt.pop %v3351
    %v3358 = vrsqrt.pop %v3352
    %v3359 = vrsqrt.pop %v3353
    %v3360 = vrsqrt.pop %v3354
    %v3361 = vmul.f32 %v3313, %v3355
    %v3362 = vmul.f32 %v3314, %v3356
    %v3363 = vmul.f32 %v3315, %v3357
    %v3364 = vmul.f32 %v3316, %v3358
    %v3365 = vmul.f32 %v3317, %v3359
    %v3366 = vmul.f32 %v3318, %v3360
    %v3368 = vlaneseq
    %v3369 = vshrl.u32 %v3368, 7
    %v3370 = vsub.s32 0, %v3369
    %v3371 = vrot.slane %v3286, %v3370
    %v3373 = vmul.f32 %v3361, %v3371
    %v3374 = vmul.f32 %v3362, %v3371
    %v3375 = vmul.f32 %v3363, %v3371
    %v3376 = vmul.f32 %v3364, %v3371
    %v3377 = vmul.f32 %v3365, %v3371
    %v3378 = vmul.f32 %v3366, %v3371
    %v3380 = vlaneseq
    %v3381 = vshrl.u32 %v3380, 7
    %v3382 = vsub.s32 0, %v3381
    %v3383 = vrot.slane %v3288, %v3382
    %v3385 = vadd.f32 %v3373, %v3383
    %v3386 = vadd.f32 %v3374, %v3383
    %v3387 = vadd.f32 %v3375, %v3383
    %v3388 = vadd.f32 %v3376, %v3383
    %v3389 = vadd.f32 %v3377, %v3383
    %v3390 = vadd.f32 %v3378, %v3383
    %v3391 = vpack.c.bf16 %v3386, %v3385
    %v3392 = vpack.c.bf16 %v3388, %v3387
    %v3393 = vpack.c.bf16 %v3390, %v3389
    %s3394 = scalar_lea.vmem %s12, 16
    %v3395 = vld [vmem:[%s3394] sm:$0xf]
    %v3396 = vld [vmem:[%s3394 + $0x4] sm:$0xf]
    %v3397 = vld [vmem:[%s3394 + $0x8] sm:$0xf]
    %v3398 = vld [vmem:[%s3394 + $0xc] sm:$0xf]
    %s3399 = scalar_lea.vmem %s13, 1
    %v3400 = vld [vmem:[%s3399] sm:$0x1]
    %v3402 = vlaneseq
    %v3403 = vshrl.u32 %v3402, 7
    %v3404 = vsub.s32 0, %v3403
    %v3405 = vrot.slane %v3400, %v3404
    %v3411 = vunpack.c.l.b16 %v3395
    %v3412 = vunpack.c.l.b16 %v3396
    %v3413 = vunpack.c.l.b16 %v3397
    %v3414 = vunpack.c.l.b16 %v3398
    %v3415 = vpack.c.b16 %v3412, %v3411
    %v3416 = vpack.c.b16 %v3414, %v3413
    %v3420 = vsel %vm187, %v3391, 0
    %v3423 = vsel %vm187, %v3392, 0
    %v3426 = vsel %vm187, %v3393, 0
    %3428 = vmatprep.subr.bf16.mxu0 0
    %3429 = vmatpush1.bf16.msra.mxu0 0
    %3430 = vmatprep.subr.bf16.mxu0 0
    %3431 = vmatpush1.bf16.msra.mxu0 0
    %3432 = vmatprep.subr.bf16.mxu0 0
    %3433 = vmatpush1.bf16.msra.mxu0 0
    %3434 = vmatprep.subr.bf16.mxu0 0
    %3435 = vmatpush1.bf16.msra.mxu0 0
    %3436 = vmatprep.subr.bf16.mxu0 0
    %3437 = vmatpush1.bf16.msra.mxu0 0
    %3438 = vmatprep.subr.bf16.mxu0 0
    %3439 = vmatpush1.bf16.msra.mxu0 0
    %3440 = vmatprep.subr.bf16.mxu0 0
    %3441 = vmatpush1.bf16.msra.mxu0 %v3416
    %3442 = vmatprep.subr.bf16.mxu0 0
    %3443 = vmatpush1.bf16.msra.mxu0 %v3415
    %3444 = vmatprep.subr.bf16.mxu0 0
    %3445 = vmatpush2.bf16.msra.mxu0 0
    %3446 = vmatprep.subr.bf16.mxu0 0
    %3447 = vmatpush2.bf16.msra.mxu0 0
    %3448 = vmatprep.subr.bf16.mxu0 0
    %3449 = vmatpush2.bf16.msra.mxu0 0
    %3450 = vmatprep.subr.bf16.mxu0 0
    %3451 = vmatpush2.bf16.msra.mxu0 0
    %3452 = vmatprep.subr.bf16.mxu0 0
    %3453 = vmatpush2.bf16.msra.mxu0 0
    %3454 = vmatprep.subr.bf16.mxu0 0
    %3455 = vmatpush2.bf16.msra.mxu0 0
    %3456 = vmatprep.subr.bf16.mxu0 0
    %3457 = vmatpush2.bf16.msra.mxu0 0
    %3458 = vmatprep.subr.bf16.mxu0 0
    %3459 = vmatpush2.bf16.msra.mxu0 0
    %3460 = vmatprep.mubr.bf16.mxu0 0
    %3461 = vmatmul.mubr.bf16.gmra.mxu0 %v3420
    %v3462 = vpop.f32.mrf.mxu0
    %v3463 = vadd.f32 %v3405, %v3462
    %v3464 = vpop.f32.mrf.mxu0
    %v3465 = vpop.f32.mrf.mxu0
    %v3466 = vadd.f32 %v3405, %v3465
    %v3467 = vpop.f32.mrf.mxu0
    %3468 = vmatprep.mubr.bf16.mxu0 0
    %3469 = vmatmul.mubr.bf16.gmra.mxu0 %v3423
    %v3470 = vpop.f32.mrf.mxu0
    %v3471 = vadd.f32 %v3405, %v3470
    %v3472 = vpop.f32.mrf.mxu0
    %v3473 = vpop.f32.mrf.mxu0
    %v3474 = vadd.f32 %v3405, %v3473
    %v3475 = vpop.f32.mrf.mxu0
    %3476 = vmatprep.mubr.bf16.mxu0 0
    %3477 = vmatmul.mubr.bf16.gmra.mxu0 %v3426
    %v3478 = vpop.f32.mrf.mxu0
    %v3479 = vadd.f32 %v3405, %v3478
    %v3480 = vpop.f32.mrf.mxu0
    %v3481 = vpop.f32.mrf.mxu0
    %v3482 = vadd.f32 %v3405, %v3481
    %v3483 = vpop.f32.mrf.mxu0
    %3484 = vdwg.mxu0
    %v3485 = vmul.f32 %v3463, 0.5
    %v3486 = vmul.f32 %v3466, 0.5
    %v3487 = vmul.f32 %v3471, 0.5
    %v3488 = vmul.f32 %v3474, 0.5
    %v3489 = vmul.f32 %v3479, 0.5
    %v3490 = vmul.f32 %v3482, 0.5
    %v3491 = vmul.f32 %v3463, 0.70710677
    %v3492 = vmul.f32 %v3466, 0.70710677
    %v3493 = vmul.f32 %v3471, 0.70710677
    %v3494 = vmul.f32 %v3474, 0.70710677
    %v3495 = vmul.f32 %v3479, 0.70710677
    %v3496 = vmul.f32 %v3482, 0.70710677
    %v3497 = verf.f32.pop %v3491
    %v3498 = verf.f32.pop %v3492
    %v3499 = verf.f32.pop %v3493
    %v3500 = verf.f32.pop %v3494
    %v3501 = verf.f32.pop %v3495
    %v3502 = verf.f32.pop %v3496
    %v3503 = vadd.f32 %v3497, 1.0
    %v3504 = vadd.f32 %v3498, 1.0
    %v3505 = vadd.f32 %v3499, 1.0
    %v3506 = vadd.f32 %v3500, 1.0
    %v3507 = vadd.f32 %v3501, 1.0
    %v3508 = vadd.f32 %v3502, 1.0
    %v3509 = vmul.f32 %v3485, %v3503
    %v3510 = vmul.f32 %v3486, %v3504
    %v3511 = vmul.f32 %v3487, %v3505
    %v3512 = vmul.f32 %v3488, %v3506
    %v3513 = vmul.f32 %v3489, %v3507
    %v3514 = vmul.f32 %v3490, %v3508
    %v3515 = vpack.c.bf16 %v3510, %v3509
    %v3516 = vpack.c.bf16 %v3512, %v3511
    %v3517 = vpack.c.bf16 %v3514, %v3513
    %s3518 = scalar_lea.vmem %s14, 32
    %v3519 = vld [vmem:[%s3518] sm:$0xf]
    %v3520 = vld [vmem:[%s3518 + $0x4] sm:$0xf]
    %v3521 = vld [vmem:[%s3518 + $0x8] sm:$0xf]
    %v3522 = vld [vmem:[%s3518 + $0xc] sm:$0xf]
    %v3523 = vld [vmem:[%s3518 + $0x10] sm:$0xf]
    %v3524 = vld [vmem:[%s3518 + $0x14] sm:$0xf]
    %v3525 = vld [vmem:[%s3518 + $0x18] sm:$0xf]
    %v3526 = vld [vmem:[%s3518 + $0x1c] sm:$0xf]
    %s3527 = scalar_lea.vmem %s15, 1
    %v3528 = vld [vmem:[%s3527] sm:$0x1]
    %v3530 = vlaneseq
    %v3531 = vshrl.u32 %v3530, 7
    %v3532 = vsub.s32 0, %v3531
    %v3533 = vrot.slane %v3528, %v3532
    %v3543 = vunpack.c.l.b16 %v3519
    %v3544 = vunpack.c.l.b16 %v3520
    %v3545 = vunpack.c.l.b16 %v3521
    %v3546 = vunpack.c.l.b16 %v3522
    %v3547 = vunpack.c.l.b16 %v3523
    %v3548 = vunpack.c.l.b16 %v3524
    %v3549 = vunpack.c.l.b16 %v3525
    %v3550 = vunpack.c.l.b16 %v3526
    %v3551 = vpack.c.b16 %v3544, %v3543
    %v3552 = vpack.c.b16 %v3546, %v3545
    %v3553 = vpack.c.b16 %v3548, %v3547
    %v3554 = vpack.c.b16 %v3550, %v3549
    %v3560 = vsel %vm1832, %v3515, 0
    %v3563 = vsel %vm1832, %v3516, 0
    %v3566 = vsel %vm1832, %v3517, 0
    %3568 = vmatprep.subr.bf16.mxu0 0
    %3569 = vmatpush1.bf16.msra.mxu0 0
    %3570 = vmatprep.subr.bf16.mxu0 0
    %3571 = vmatpush1.bf16.msra.mxu0 0
    %3572 = vmatprep.subr.bf16.mxu0 0
    %3573 = vmatpush1.bf16.msra.mxu0 0
    %3574 = vmatprep.subr.bf16.mxu0 0
    %3575 = vmatpush1.bf16.msra.mxu0 0
    %3576 = vmatprep.subr.bf16.mxu0 0
    %3577 = vmatpush1.bf16.msra.mxu0 %v3554
    %3578 = vmatprep.subr.bf16.mxu0 0
    %3579 = vmatpush1.bf16.msra.mxu0 %v3553
    %3580 = vmatprep.subr.bf16.mxu0 0
    %3581 = vmatpush1.bf16.msra.mxu0 %v3552
    %3582 = vmatprep.subr.bf16.mxu0 0
    %3583 = vmatpush1.bf16.msra.mxu0 %v3551
    %3584 = vmatprep.subr.bf16.mxu0 0
    %3585 = vmatpush2.bf16.msra.mxu0 0
    %3586 = vmatprep.subr.bf16.mxu0 0
    %3587 = vmatpush2.bf16.msra.mxu0 0
    %3588 = vmatprep.subr.bf16.mxu0 0
    %3589 = vmatpush2.bf16.msra.mxu0 0
    %3590 = vmatprep.subr.bf16.mxu0 0
    %3591 = vmatpush2.bf16.msra.mxu0 0
    %3592 = vmatprep.subr.bf16.mxu0 0
    %3593 = vmatpush2.bf16.msra.mxu0 0
    %3594 = vmatprep.subr.bf16.mxu0 0
    %3595 = vmatpush2.bf16.msra.mxu0 0
    %3596 = vmatprep.subr.bf16.mxu0 0
    %3597 = vmatpush2.bf16.msra.mxu0 0
    %3598 = vmatprep.subr.bf16.mxu0 0
    %3599 = vmatpush2.bf16.msra.mxu0 0
    %3600 = vmatprep.mubr.bf16.mxu0 0
    %3601 = vmatmul.mubr.bf16.gmra.mxu0 %v3560
    %v3602 = vpop.f32.mrf.mxu0
    %v3603 = vadd.f32 %v3533, %v3602
    %v3604 = vpop.f32.mrf.mxu0
    %v3605 = vpop.f32.mrf.mxu0
    %v3606 = vpop.f32.mrf.mxu0
    %3607 = vmatprep.mubr.bf16.mxu0 0
    %3608 = vmatmul.mubr.bf16.gmra.mxu0 %v3563
    %v3609 = vpop.f32.mrf.mxu0
    %v3610 = vpop.f32.mrf.mxu0
    %v3611 = vpop.f32.mrf.mxu0
    %v3612 = vadd.f32 %v3533, %v3611
    %v3613 = vpop.f32.mrf.mxu0
    %3614 = vmatprep.mubr.bf16.mxu0 0
    %3615 = vmatmul.mubr.bf16.gmra.mxu0 %v3566
    %v3616 = vpop.f32.mrf.mxu0
    %v3617 = vpop.f32.mrf.mxu0
    %v3618 = vpop.f32.mrf.mxu0
    %v3619 = vpop.f32.mrf.mxu0
    %3620 = vdwg.mxu0
    %v3621 = vadd.f32 %v3279, %v3603
    %v3622 = vadd.f32 %v3282, %v3612
    %v3624 = vrot.slane %v3622, 7
    %vm3626 = vcmask 1040384
    %v3627 = vsel %vm3626, %v3621, %v3624
    %v3628 = vld [vmem:[%s16] sm:$0x1]
    %v3629 = vld [vmem:[%s17] sm:$0x1]
    %vm3630 = vcmask 254976
    %v3631 = vsel %vm3630, %v3627, 0.0
    %3632 = vadd.xlane.f32.xlu0 %v3631
    %v3633 = vpop.xlane.xlu0 %3632
    %v3634 = vmul.f32 %v3633, %v206
    %v3635 = vsub.f32 %v3627, %v3634
    %v3636 = vmul.f32 %v3635, %v3635
    %v3637 = vsel %vm3630, %v3636, 0.0
    %3638 = vadd.xlane.f32.xlu0 %v3637
    %v3639 = vpop.xlane.xlu0 %3638
    %v3640 = vmul.f32 %v3639, %v206
    %v3641 = vadd.f32 %v3640, 1e-06
    %v3642 = vrsqrt.pop %v3641
    %v3643 = vmul.f32 %v3635, %v3642
    %v3645 = vlaneseq
    %v3646 = vshrl.u32 %v3645, 7
    %v3647 = vsub.s32 0, %v3646
    %v3648 = vrot.slane %v3628, %v3647
    %v3650 = vmul.f32 %v3643, %v3648
    %v3652 = vlaneseq
    %v3653 = vshrl.u32 %v3652, 7
    %v3654 = vsub.s32 0, %v3653
    %v3655 = vrot.slane %v3629, %v3654
    %v3657 = vadd.f32 %v3650, %v3655
    %3658 = vst.msk [vmem:[#allocation2] sm:$0x3] %vm3630, %v3657
    // Predicated region
    $region74: #{feature_extractor.1} parent=1 // pred_check
      _
    $region75: #{feature_extractor.1} parent=1 // pred_check_branch
      %3660 = sbr.rel (0) target = $region77
    $region76: #{feature_extractor.1} parent=1 // pred_region
      %s3662 = ssub.s32 32, 32
      %3663 = vsyncadd [#allocation3], %s3662
      %s3665 = sshll.u32 [#allocation2], 4
      %s3666 = int_to_ptr.vmem [resolvable:$true] %s3665
      %3668 = dma.vmem_to_hbm [thread:$0]  %s3666, 32, %s18, [#allocation3]
    $region77: #{feature_extractor.1} parent=1 // pred_fallthru
      _
    // Predicated region
    $region78: #{feature_extractor.1} parent=1 // pred_check
      _
    $region79: #{feature_extractor.1} parent=1 // pred_check_branch
      %3670 = sbr.rel (0) target = $region81
    $region80: #{feature_extractor.1} parent=1 // pred_region
      %3671 = dma.done [#allocation3], 32
    $region81: #{feature_extractor.1} parent=1 // pred_fallthru
      _
    %3672 = vsyncpa [#allocation3], 1

</llo_original>
